<compile_context>
chip_gen: v7x
topology: tpu7x:2x2x1
jax: 0.10.0
libtpu: 0.0.40
codegen_flags: <defaults>
</compile_context>

<pallas_src>
import functools

import jax
import jax.numpy as jnp
from jax import lax
from jax.experimental import pallas as pl
from jax.experimental.pallas import tpu as pltpu

_EPS = 1e-5  # nn.InstanceNorm2d default eps


def _round_up(x, m):
    return ((x + m - 1) // m) * m


# ---------------------------------------------------------------------------
# In-kernel helpers.
# ---------------------------------------------------------------------------
def _conv3x3_padded(xp_ref, w_ref, *, H, Wpad):
    """3x3 VALID conv over a width-padded, flattened sample.

    xp_ref: (1, (H+2)*Wpad, Cin) ref, native dtype (already spatially padded;
            columns [W+2, Wpad) of every row-block are zero).
    w_ref:  (3, 3, Cin, TC) ref, native dtype.
    Returns f32 (H*Wpad, TC); rows whose column index (r % Wpad) >= W are
    garbage and must be dropped by the caller.
    """
    HWp = H * Wpad
    acc = None
    for dw in range(3):
        part = None
        for dh in range(3):
            # Sublane-ALIGNED row-block view (dh*Wpad is a multiple of 8).
            rows = xp_ref[0, pl.ds(dh * Wpad, HWp), :]          # (HWp, Cin)
            d = jnp.dot(rows, w_ref[dh, dw],
                        preferred_element_type=jnp.float32)      # MXU, f32 acc
            part = d if part is None else part + d
        if dw:
            # shifted[r] = part[r + dw]  (wraparound only hits dropped columns)
            part = pltpu.roll(part, HWp - dw, 0)                 # XLU sublane roll
        acc = part if acc is None else acc + part
    return acc


def _norm_scale_shift(y3):
    """One-pass InstanceNorm2d(affine=False) stats over a (H, W, TC) f32 tile."""
    n = y3.shape[0] * y3.shape[1]
    s1 = jnp.sum(y3, axis=(0, 1), keepdims=True)                 # (1,1,TC)
    s2 = jnp.sum(y3 * y3, axis=(0, 1), keepdims=True)
    mean = s1 * (1.0 / n)
    var = s2 * (1.0 / n) - mean * mean
    inv = lax.rsqrt(var + _EPS)                                  # EUP
    return inv, mean * inv                                       # y*inv - shift


# ---------------------------------------------------------------------------
# Kernels (one (sample, Cout-tile) per grid step).
# ---------------------------------------------------------------------------
def _conv_in_relu_kernel(xp_ref, w_ref, o_ref, *, H, W, Wpad):
    """conv3x3 -> InstanceNorm -> ReLU."""
    tc = o_ref.shape[-1]
    acc = _conv3x3_padded(xp_ref, w_ref, H=H, Wpad=Wpad)          # (H*Wpad, TC)
    y3 = acc.reshape(H, Wpad, tc)[:, :W, :]                       # drop pad cols
    inv, shift = _norm_scale_shift(y3)
    y = jnp.maximum(y3 * inv - shift, 0.0)                        # ReLU
    o_ref[0] = y.astype(o_ref.dtype)


def _conv_in_res_kernel(hp_ref, x_ref, w_ref, o_ref, *, H, W, Wpad):
    """conv3x3 -> InstanceNorm -> residual add (out = x + block(x))."""
    tc = o_ref.shape[-1]
    acc = _conv3x3_padded(hp_ref, w_ref, H=H, Wpad=Wpad)
    y3 = acc.reshape(H, Wpad, tc)[:, :W, :]
    inv, shift = _norm_scale_shift(y3)
    res = x_ref[0].astype(jnp.float32)
    o_ref[0] = (res + y3 * inv - shift).astype(o_ref.dtype)


# ---------------------------------------------------------------------------
# Wrapper.
# ---------------------------------------------------------------------------
def _pad_flatten(x, padding_type):
    """NHWC -> spatially padded, width-padded-to-%8, flattened (B, Hp*Wpad, C)."""
    modes = {'reflect': 'reflect', 'replicate': 'edge', 'zero': 'constant'}
    if padding_type not in modes:
        raise NotImplementedError('padding [%s] is not implemented' % padding_type)
    B, H, W, C = x.shape
    xp = jnp.pad(x, ((0, 0), (1, 1), (1, 1), (0, 0)), mode=modes[padding_type])
    Wpad = _round_up(W + 2, 8)
    if Wpad > W + 2:
        xp = jnp.pad(xp, ((0, 0), (0, 0), (0, Wpad - (W + 2)), (0, 0)))
    return xp.reshape(B, (H + 2) * Wpad, C), Wpad


def resnet_block_nhwc(x, params, *, padding_type='reflect',
                      use_dropout=False, training=False, dropout_key=None):
    """ResnetBlock forward in NHWC (keep chains of blocks in NHWC end-to-end)."""
    # Conv bias is mathematically cancelled by InstanceNorm(affine=False),
    # so b1/b2 (if present in params) are intentionally ignored.
    w1, w2 = params['w1'], params['w2']
    B, H, W, C = x.shape
    dt = x.dtype

    tc = 128 if (C >= 128 and C % 128 == 0) else C                # Cout tile
    grid = (B, C // tc)
    xp, Wpad = _pad_flatten(x, padding_type)
    hwp_tot = (H + 2) * Wpad

    xp_spec = pl.BlockSpec((1, hwp_tot, C), lambda b, c: (b, 0, 0))   # full Cin, resident in c
    w_spec = pl.BlockSpec((3, 3, C, tc), lambda b, c: (0, 0, 0, c))
    o_spec = pl.BlockSpec((1, H, W, tc), lambda b, c: (b, 0, 0, c))
    cparams = pltpu.CompilerParams(
        dimension_semantics=("parallel", "parallel"),
        vmem_limit_bytes=64 * 1024 * 1024)

    # ---- conv1 + InstanceNorm + ReLU (fused) ------------------------------
    h = pl.pallas_call(
        functools.partial(_conv_in_relu_kernel, H=H, W=W, Wpad=Wpad),
        out_shape=jax.ShapeDtypeStruct((B, H, W, C), dt),
        grid=grid,
        in_specs=[xp_spec, w_spec],
        out_specs=o_spec,
        compiler_params=cparams,
    )(xp, w1)

    # ---- optional Dropout(0.5) between the two conv blocks ----------------
    if use_dropout and training:
        if dropout_key is None:
            raise ValueError("dropout_key required when use_dropout and training")
        keep = 0.5
        mask = jax.random.bernoulli(dropout_key, keep, h.shape)
        h = jnp.where(mask, h * (1.0 / keep), 0.0).astype(dt)

    # ---- conv2 + InstanceNorm + residual add (fused) ----------------------
    hp, _ = _pad_flatten(h, padding_type)
    out = pl.pallas_call(
        functools.partial(_conv_in_res_kernel, H=H, W=W, Wpad=Wpad),
        out_shape=jax.ShapeDtypeStruct((B, H, W, C), dt),
        grid=grid,
        in_specs=[xp_spec, o_spec, w_spec],
        out_specs=o_spec,
        input_output_aliases={1: 0},            # output reuses the residual buffer
        compiler_params=cparams,
    )(hp, x, w2)
    return out


def resnet_block(x_nchw, params, *, padding_type='reflect',
                 use_dropout=False, training=False, dropout_key=None):
    """NCHW interface matching the PyTorch module: out = x + conv_block(x)."""
    x = jnp.transpose(x_nchw, (0, 2, 3, 1))     # NHWC: channels on the lane axis
    out = resnet_block_nhwc(x, params, padding_type=padding_type,
                            use_dropout=use_dropout, training=training,
                            dropout_key=dropout_key)
    return jnp.transpose(out, (0, 3, 1, 2))


# ---------------------------------------------------------------------------
# Self-test.
# ---------------------------------------------------------------------------
if __name__ == "__main__":
    key = jax.random.PRNGKey(0)
    kx, kw1, kw2 = jax.random.split(key, 3)

    B, C, H, W = 2, 4, 16, 16
    x = jax.random.normal(kx, (B, C, H, W), dtype=jnp.float32)
    params = {
        'w1': jax.random.normal(kw1, (3, 3, C, C), jnp.float32) * 0.1,
        'w2': jax.random.normal(kw2, (3, 3, C, C), jnp.float32) * 0.1,
    }

    out = resnet_block(x, params, padding_type='reflect',
                       use_dropout=False, training=False)
    out = jax.block_until_ready(out)

    # Pure-JAX reference with identical semantics.
    def ref_block(x_nchw):
        xh = jnp.transpose(x_nchw, (0, 2, 3, 1))

        def pad(y):
            return jnp.pad(y, ((0, 0), (1, 1), (1, 1), (0, 0)), mode='reflect')

        def conv(y, w):
            return lax.conv_general_dilated(
                y, w, (1, 1), 'VALID',
                dimension_numbers=('NHWC', 'HWIO', 'NHWC'))

        def inorm(y):
            m = y.mean(axis=(1, 2), keepdims=True)
            v = ((y - m) ** 2).mean(axis=(1, 2), keepdims=True)
            return (y - m) * lax.rsqrt(v + _EPS)

        h = jnp.maximum(inorm(conv(pad(xh), params['w1'])), 0.0)
        h = inorm(conv(pad(h), params['w2']))
        return jnp.transpose(xh + h, (0, 3, 1, 2))

    ref = jax.block_until_ready(ref_block(x))

    assert out.shape == x.shape and out.dtype == x.dtype
    err = float(jnp.max(jnp.abs(out - ref)))
    assert jnp.allclose(out, ref, atol=1e-4, rtol=1e-4), f"max abs err = {err}"

    print("KERNEL_OK")
</pallas_src>

<mosaic_0001>
module attributes {stable_mosaic.version = 11 : i64} {
  func.func @_conv_in_relu_kernel(%arg0: i32, %arg1: i32, %arg2: memref<1x432x4xf32, #tpu.memory_space<vmem>>, %arg3: memref<3x3x4x4xf32, #tpu.memory_space<vmem>>, %arg4: memref<1x16x16x4xf32, #tpu.memory_space<vmem>>) attributes {dimension_semantics = [#tpu.dimension_semantics<parallel>, #tpu.dimension_semantics<parallel>], iteration_bounds = array<i64: 2, 1>, scalar_prefetch = 0 : i64, scratch_operands = 0 : i64, tpu.core_type = #tpu.core_type<tc>, window_params = [{transform_indices = @transform_0, window_bounds = array<i64: 1, 432, 4>}, {transform_indices = @transform_1, window_bounds = array<i64: 3, 3, 4, 4>}, {transform_indices = @transform_2, window_bounds = array<i64: 1, 16, 16, 4>}]} {
    %c0 = arith.constant 0 : index
    %c0_0 = arith.constant 0 : index
    %c0_1 = arith.constant 0 : index
    %0 = vector.load %arg2[%c0, %c0_0, %c0_1] : memref<1x432x4xf32, #tpu.memory_space<vmem>>, vector<1x384x4xf32>
    %1 = vector.shape_cast %0 : vector<1x384x4xf32> to vector<384x4xf32>
    %c0_2 = arith.constant 0 : index
    %c0_3 = arith.constant 0 : index
    %c0_4 = arith.constant 0 : index
    %c0_5 = arith.constant 0 : index
    %2 = vector.load %arg3[%c0_2, %c0_3, %c0_4, %c0_5] : memref<3x3x4x4xf32, #tpu.memory_space<vmem>>, vector<1x1x4x4xf32>
    %3 = vector.shape_cast %2 : vector<1x1x4x4xf32> to vector<4x4xf32>
    %cst = arith.constant dense<0.000000e+00> : vector<384x4xf32>
    %4 = tpu.matmul %1, %3, %cst {dimension_numbers = #tpu.dot_dimension_numbers<[1], [0], [0], [1], [0, 0, 1, 1], [], []>} : vector<384x4xf32>, vector<4x4xf32>, vector<384x4xf32> -> vector<384x4xf32>
    %c0_6 = arith.constant 0 : index
    %c24 = arith.constant 24 : index
    %c0_7 = arith.constant 0 : index
    %5 = vector.load %arg2[%c0_6, %c24, %c0_7] : memref<1x432x4xf32, #tpu.memory_space<vmem>>, vector<1x384x4xf32>
    %6 = vector.shape_cast %5 : vector<1x384x4xf32> to vector<384x4xf32>
    %c1 = arith.constant 1 : index
    %c0_8 = arith.constant 0 : index
    %c0_9 = arith.constant 0 : index
    %c0_10 = arith.constant 0 : index
    %7 = vector.load %arg3[%c1, %c0_8, %c0_9, %c0_10] : memref<3x3x4x4xf32, #tpu.memory_space<vmem>>, vector<1x1x4x4xf32>
    %8 = vector.shape_cast %7 : vector<1x1x4x4xf32> to vector<4x4xf32>
    %cst_11 = arith.constant dense<0.000000e+00> : vector<384x4xf32>
    %9 = tpu.matmul %6, %8, %cst_11 {dimension_numbers = #tpu.dot_dimension_numbers<[1], [0], [0], [1], [0, 0, 1, 1], [], []>} : vector<384x4xf32>, vector<4x4xf32>, vector<384x4xf32> -> vector<384x4xf32>
    %10 = arith.addf %4, %9 : vector<384x4xf32>
    %c0_12 = arith.constant 0 : index
    %c48 = arith.constant 48 : index
    %c0_13 = arith.constant 0 : index
    %11 = vector.load %arg2[%c0_12, %c48, %c0_13] : memref<1x432x4xf32, #tpu.memory_space<vmem>>, vector<1x384x4xf32>
    %12 = vector.shape_cast %11 : vector<1x384x4xf32> to vector<384x4xf32>
    %c2 = arith.constant 2 : index
    %c0_14 = arith.constant 0 : index
    %c0_15 = arith.constant 0 : index
    %c0_16 = arith.constant 0 : index
    %13 = vector.load %arg3[%c2, %c0_14, %c0_15, %c0_16] : memref<3x3x4x4xf32, #tpu.memory_space<vmem>>, vector<1x1x4x4xf32>
    %14 = vector.shape_cast %13 : vector<1x1x4x4xf32> to vector<4x4xf32>
    %cst_17 = arith.constant dense<0.000000e+00> : vector<384x4xf32>
    %15 = tpu.matmul %12, %14, %cst_17 {dimension_numbers = #tpu.dot_dimension_numbers<[1], [0], [0], [1], [0, 0, 1, 1], [], []>} : vector<384x4xf32>, vector<4x4xf32>, vector<384x4xf32> -> vector<384x4xf32>
    %16 = arith.addf %10, %15 : vector<384x4xf32>
    %c0_18 = arith.constant 0 : index
    %c0_19 = arith.constant 0 : index
    %c0_20 = arith.constant 0 : index
    %17 = vector.load %arg2[%c0_18, %c0_19, %c0_20] : memref<1x432x4xf32, #tpu.memory_space<vmem>>, vector<1x384x4xf32>
    %18 = vector.shape_cast %17 : vector<1x384x4xf32> to vector<384x4xf32>
    %c0_21 = arith.constant 0 : index
    %c1_22 = arith.constant 1 : index
    %c0_23 = arith.constant 0 : index
    %c0_24 = arith.constant 0 : index
    %19 = vector.load %arg3[%c0_21, %c1_22, %c0_23, %c0_24] : memref<3x3x4x4xf32, #tpu.memory_space<vmem>>, vector<1x1x4x4xf32>
    %20 = vector.shape_cast %19 : vector<1x1x4x4xf32> to vector<4x4xf32>
    %cst_25 = arith.constant dense<0.000000e+00> : vector<384x4xf32>
    %21 = tpu.matmul %18, %20, %cst_25 {dimension_numbers = #tpu.dot_dimension_numbers<[1], [0], [0], [1], [0, 0, 1, 1], [], []>} : vector<384x4xf32>, vector<4x4xf32>, vector<384x4xf32> -> vector<384x4xf32>
    %c0_26 = arith.constant 0 : index
    %c24_27 = arith.constant 24 : index
    %c0_28 = arith.constant 0 : index
    %22 = vector.load %arg2[%c0_26, %c24_27, %c0_28] : memref<1x432x4xf32, #tpu.memory_space<vmem>>, vector<1x384x4xf32>
    %23 = vector.shape_cast %22 : vector<1x384x4xf32> to vector<384x4xf32>
    %c1_29 = arith.constant 1 : index
    %c1_30 = arith.constant 1 : index
    %c0_31 = arith.constant 0 : index
    %c0_32 = arith.constant 0 : index
    %24 = vector.load %arg3[%c1_29, %c1_30, %c0_31, %c0_32] : memref<3x3x4x4xf32, #tpu.memory_space<vmem>>, vector<1x1x4x4xf32>
    %25 = vector.shape_cast %24 : vector<1x1x4x4xf32> to vector<4x4xf32>
    %cst_33 = arith.constant dense<0.000000e+00> : vector<384x4xf32>
    %26 = tpu.matmul %23, %25, %cst_33 {dimension_numbers = #tpu.dot_dimension_numbers<[1], [0], [0], [1], [0, 0, 1, 1], [], []>} : vector<384x4xf32>, vector<4x4xf32>, vector<384x4xf32> -> vector<384x4xf32>
    %27 = arith.addf %21, %26 : vector<384x4xf32>
    %c0_34 = arith.constant 0 : index
    %c48_35 = arith.constant 48 : index
    %c0_36 = arith.constant 0 : index
    %28 = vector.load %arg2[%c0_34, %c48_35, %c0_36] : memref<1x432x4xf32, #tpu.memory_space<vmem>>, vector<1x384x4xf32>
    %29 = vector.shape_cast %28 : vector<1x384x4xf32> to vector<384x4xf32>
    %c2_37 = arith.constant 2 : index
    %c1_38 = arith.constant 1 : index
    %c0_39 = arith.constant 0 : index
    %c0_40 = arith.constant 0 : index
    %30 = vector.load %arg3[%c2_37, %c1_38, %c0_39, %c0_40] : memref<3x3x4x4xf32, #tpu.memory_space<vmem>>, vector<1x1x4x4xf32>
    %31 = vector.shape_cast %30 : vector<1x1x4x4xf32> to vector<4x4xf32>
    %cst_41 = arith.constant dense<0.000000e+00> : vector<384x4xf32>
    %32 = tpu.matmul %29, %31, %cst_41 {dimension_numbers = #tpu.dot_dimension_numbers<[1], [0], [0], [1], [0, 0, 1, 1], [], []>} : vector<384x4xf32>, vector<4x4xf32>, vector<384x4xf32> -> vector<384x4xf32>
    %33 = arith.addf %27, %32 : vector<384x4xf32>
    %c383_i32 = arith.constant 383 : i32
    %34 = tpu.dynamic_rotate %33 by %c383_i32 dim 0 : vector<384x4xf32>, i32 -> vector<384x4xf32>
    %35 = arith.addf %16, %34 : vector<384x4xf32>
    %c0_42 = arith.constant 0 : index
    %c0_43 = arith.constant 0 : index
    %c0_44 = arith.constant 0 : index
    %36 = vector.load %arg2[%c0_42, %c0_43, %c0_44] : memref<1x432x4xf32, #tpu.memory_space<vmem>>, vector<1x384x4xf32>
    %37 = vector.shape_cast %36 : vector<1x384x4xf32> to vector<384x4xf32>
    %c0_45 = arith.constant 0 : index
    %c2_46 = arith.constant 2 : index
    %c0_47 = arith.constant 0 : index
    %c0_48 = arith.constant 0 : index
    %38 = vector.load %arg3[%c0_45, %c2_46, %c0_47, %c0_48] : memref<3x3x4x4xf32, #tpu.memory_space<vmem>>, vector<1x1x4x4xf32>
    %39 = vector.shape_cast %38 : vector<1x1x4x4xf32> to vector<4x4xf32>
    %cst_49 = arith.constant dense<0.000000e+00> : vector<384x4xf32>
    %40 = tpu.matmul %37, %39, %cst_49 {dimension_numbers = #tpu.dot_dimension_numbers<[1], [0], [0], [1], [0, 0, 1, 1], [], []>} : vector<384x4xf32>, vector<4x4xf32>, vector<384x4xf32> -> vector<384x4xf32>
    %c0_50 = arith.constant 0 : index
    %c24_51 = arith.constant 24 : index
    %c0_52 = arith.constant 0 : index
    %41 = vector.load %arg2[%c0_50, %c24_51, %c0_52] : memref<1x432x4xf32, #tpu.memory_space<vmem>>, vector<1x384x4xf32>
    %42 = vector.shape_cast %41 : vector<1x384x4xf32> to vector<384x4xf32>
    %c1_53 = arith.constant 1 : index
    %c2_54 = arith.constant 2 : index
    %c0_55 = arith.constant 0 : index
    %c0_56 = arith.constant 0 : index
    %43 = vector.load %arg3[%c1_53, %c2_54, %c0_55, %c0_56] : memref<3x3x4x4xf32, #tpu.memory_space<vmem>>, vector<1x1x4x4xf32>
    %44 = vector.shape_cast %43 : vector<1x1x4x4xf32> to vector<4x4xf32>
    %cst_57 = arith.constant dense<0.000000e+00> : vector<384x4xf32>
    %45 = tpu.matmul %42, %44, %cst_57 {dimension_numbers = #tpu.dot_dimension_numbers<[1], [0], [0], [1], [0, 0, 1, 1], [], []>} : vector<384x4xf32>, vector<4x4xf32>, vector<384x4xf32> -> vector<384x4xf32>
    %46 = arith.addf %40, %45 : vector<384x4xf32>
    %c0_58 = arith.constant 0 : index
    %c48_59 = arith.constant 48 : index
    %c0_60 = arith.constant 0 : index
    %47 = vector.load %arg2[%c0_58, %c48_59, %c0_60] : memref<1x432x4xf32, #tpu.memory_space<vmem>>, vector<1x384x4xf32>
    %48 = vector.shape_cast %47 : vector<1x384x4xf32> to vector<384x4xf32>
    %c2_61 = arith.constant 2 : index
    %c2_62 = arith.constant 2 : index
    %c0_63 = arith.constant 0 : index
    %c0_64 = arith.constant 0 : index
    %49 = vector.load %arg3[%c2_61, %c2_62, %c0_63, %c0_64] : memref<3x3x4x4xf32, #tpu.memory_space<vmem>>, vector<1x1x4x4xf32>
    %50 = vector.shape_cast %49 : vector<1x1x4x4xf32> to vector<4x4xf32>
    %cst_65 = arith.constant dense<0.000000e+00> : vector<384x4xf32>
    %51 = tpu.matmul %48, %50, %cst_65 {dimension_numbers = #tpu.dot_dimension_numbers<[1], [0], [0], [1], [0, 0, 1, 1], [], []>} : vector<384x4xf32>, vector<4x4xf32>, vector<384x4xf32> -> vector<384x4xf32>
    %52 = arith.addf %46, %51 : vector<384x4xf32>
    %c382_i32 = arith.constant 382 : i32
    %53 = tpu.dynamic_rotate %52 by %c382_i32 dim 0 : vector<384x4xf32>, i32 -> vector<384x4xf32>
    %54 = arith.addf %35, %53 : vector<384x4xf32>
    %55 = vector.shape_cast %54 : vector<384x4xf32> to vector<16x24x4xf32>
    %56 = vector.extract_strided_slice %55 {offsets = [0, 0, 0], sizes = [16, 16, 4], strides = [1, 1, 1]} : vector<16x24x4xf32> to vector<16x16x4xf32>
    %cst_66 = arith.constant dense<0.000000e+00> : vector<4xf32>
    %57 = vector.multi_reduction <add>, %56, %cst_66 [0, 1] : vector<16x16x4xf32> to vector<4xf32>
    %58 = vector.shape_cast %57 : vector<4xf32> to vector<1x1x4xf32>
    %59 = arith.mulf %56, %56 : vector<16x16x4xf32>
    %cst_67 = arith.constant dense<0.000000e+00> : vector<4xf32>
    %60 = vector.multi_reduction <add>, %59, %cst_67 [0, 1] : vector<16x16x4xf32> to vector<4xf32>
    %61 = vector.shape_cast %60 : vector<4xf32> to vector<1x1x4xf32>
    %cst_68 = arith.constant 3.906250e-03 : f32
    %62 = vector.broadcast %cst_68 : f32 to vector<1x1x4xf32>
    %63 = arith.mulf %58, %62 : vector<1x1x4xf32>
    %cst_69 = arith.constant 3.906250e-03 : f32
    %64 = vector.broadcast %cst_69 : f32 to vector<1x1x4xf32>
    %65 = arith.mulf %61, %64 : vector<1x1x4xf32>
    %66 = arith.mulf %63, %63 : vector<1x1x4xf32>
    %67 = arith.subf %65, %66 : vector<1x1x4xf32>
    %cst_70 = arith.constant 9.99999974E-6 : f32
    %68 = vector.broadcast %cst_70 : f32 to vector<1x1x4xf32>
    %69 = arith.addf %67, %68 : vector<1x1x4xf32>
    %70 = math.rsqrt %69 : vector<1x1x4xf32>
    %71 = arith.mulf %63, %70 : vector<1x1x4xf32>
    %72 = vector.broadcast %70 : vector<1x1x4xf32> to vector<16x16x4xf32>
    %73 = arith.mulf %56, %72 : vector<16x16x4xf32>
    %74 = vector.broadcast %71 : vector<1x1x4xf32> to vector<16x16x4xf32>
    %75 = arith.subf %73, %74 : vector<16x16x4xf32>
    %cst_71 = arith.constant 0.000000e+00 : f32
    %76 = vector.broadcast %cst_71 : f32 to vector<16x16x4xf32>
    %77 = arith.maximumf %75, %76 : vector<16x16x4xf32>
    %c0_72 = arith.constant 0 : index
    %c0_73 = arith.constant 0 : index
    %c0_74 = arith.constant 0 : index
    %c0_75 = arith.constant 0 : index
    %78 = vector.load %arg4[%c0_72, %c0_73, %c0_74, %c0_75] : memref<1x16x16x4xf32, #tpu.memory_space<vmem>>, vector<1x16x16x4xf32>
    %79 = vector.shape_cast %78 : vector<1x16x16x4xf32> to vector<16x16x4xf32>
    %80 = vector.shape_cast %77 : vector<16x16x4xf32> to vector<1x16x16x4xf32>
    tpu.vector_store %arg4[%c0_72, %c0_73, %c0_74, %c0_75], %80 {strides = array<i32>} : memref<1x16x16x4xf32, #tpu.memory_space<vmem>>, vector<1x16x16x4xf32>,
    return
  }
  func.func @transform_0(%arg0: i32, %arg1: i32) -> (i32, i32, i32) {
    %c0_i32 = arith.constant 0 : i32
    %c0_i32_0 = arith.constant 0 : i32
    %c0_i32_1 = arith.constant 0 : i32
    return %arg0, %c0_i32, %c0_i32_0 : i32, i32, i32
  }
  func.func @transform_1(%arg0: i32, %arg1: i32) -> (i32, i32, i32, i32) {
    %c0_i32 = arith.constant 0 : i32
    %c0_i32_0 = arith.constant 0 : i32
    %c0_i32_1 = arith.constant 0 : i32
    %c0_i32_2 = arith.constant 0 : i32
    return %c0_i32, %c0_i32_0, %c0_i32_1, %arg1 : i32, i32, i32, i32
  }
  func.func @transform_2(%arg0: i32, %arg1: i32) -> (i32, i32, i32, i32) {
    %c0_i32 = arith.constant 0 : i32
    %c0_i32_0 = arith.constant 0 : i32
    %c0_i32_1 = arith.constant 0 : i32
    return %arg0, %c0_i32, %c0_i32_0, %arg1 : i32, i32, i32, i32
  }
}

</mosaic_0001>

<llo_original>
// kernel: tpu_custom_call.1
$region0: #{tpu_custom_call.1}
  #allocation0 [shape = 'u32[]', space=smem, size = 0x4, offset = 0x4, fixed_abs, tag = 'smem constant byte address 0x4 - core index']
  #allocation1 [shape = 'u32[144,128]{1,0:T(1,128)}', space=vmem, size = 0x12000, scoped, tag = 'internal scratch']
  %s0 = inlined_call_operand.hbm [shape: f32[2,432,4], index: 0, kind: input, shape index: {}]
  %s1 = inlined_call_operand.hbm [shape: f32[3,3,4,4], index: 1, kind: input, shape index: {}]
  %s2 = inlined_call_operand.hbm [shape: f32[2,16,16,4], index: 2, kind: output, shape index: {}]
  %s3 = sld [smem:[#allocation0]]
  $region49: #{tpu_custom_call.1} parent=0
    _
  %s5 = ssub.s32 1, %s3
  %s6 = scalar_select 0, %s5, %s3
  $region1: #{tpu_custom_call.1} parent=0
    #allocation2 [shape = 'u8[442368]{0}', space=vmem, size = 0x6c000, scoped, tag = 'input window, operand 0']
    #allocation3 [shape = 's32[2]{0}', space=sflag, size = 0x8, scoped, tag = 'scoped memory for tpu_custom_call.1']
    #allocation4 [shape = 's32[2]{0}', space=sflag, size = 0x8, scoped, tag = 'scoped memory for tpu_custom_call.1']
    #allocation5 [shape = 'u8[18432]{0}', space=vmem, size = 0x4800, scoped, tag = 'input window, operand 1, single buffered']
    #allocation6 [shape = 's32[1]{0}', space=sflag, size = 0x4, scoped, tag = 'scoped memory for tpu_custom_call.1']
    #allocation7 [shape = 'u8[262144]{0}', space=vmem, size = 0x40000, scoped, tag = 'output window, operand 0']
    %7 = vsyncpa [#allocation3], 0
    %s8 = scalar_lea.sflag [#allocation3], 1
    %9 = vsyncpa %s8, 0
    %10 = vsyncpa [#allocation6], 0
    %11 = vsyncpa [#allocation4], 0
    %s12 = scalar_lea.sflag [#allocation4], 1
    %13 = vsyncpa %s12, 0
    loop: start=0, step=1, limit=4
    $region2: #{tpu_custom_call.1} parent=1 // loop_pre_header
      _
    $region3: #{tpu_custom_call.1} parent=1 // loop_header
      %s15 = sphi 0, %s19
      %p16 = scmp.ge.s32.totalorder %s15, 4
      %s22 = sphi 0, %s34
      %s23 = sphi 0, %s30
      %s24 = sphi 0, %s22
      %s25 = sphi 0, %s23
      %s26 = sphi 0, %s24
      %s27 = sphi 0, %s25
      %s37 = sphi 0, %s39
      %s40 = sphi 0, %s37
      %s41 = sphi 0, %s40
      %s57 = sphi 0, %s41
      %s63 = sphi 0, %s65
      %s66 = sphi 0, %s63
      %s67 = sphi 0, %s66
      %s83 = sphi 0, %s67
      %s91 = sphi 0, %s93
      %s94 = sphi 0, %s91
      %s95 = sphi 0, %s94
      %s111 = sphi 0, %s95
    $region4: #{tpu_custom_call.1} parent=1 // loop_header_branch
      %18 = sbr.rel (%p16) target = $region8
    $region5: #{tpu_custom_call.1} parent=1 // loop_body
      %s20 = ssub.s32 %s15, 1
      %s21 = ssub.s32 %s15, 2
      %s28 = sadd.s32 1, %s23
      %p29 = scmp.ge.s32.totalorder %s28, 1
      %s30 = scalar_select %p29, 0, %s28
      %s31 = sadd.s32 1, %s22
      %s32 = scalar_select %p29, %s31, %s22
      %p33 = scmp.ge.s32.totalorder %s32, 2
      %s34 = scalar_select %p33, 0, %s32
      %s35 = ssub.s32 %s22, %s34
      %p36 = scmp.eq.s32.totalorder %s35, 0
      %s38 = sadd.s32 %s37, 1
      %s39 = scalar_select %p36, %s37, %s38
      %p42 = pneg %p36
      %p43 = scmp.eq.s32.totalorder %s15, 1
      %p44 = por %p42, %p43
      %p45 = scmp.ne.s32.totalorder %s37, %s40
      %p46 = scmp.eq.s32.totalorder %s15, 0
      %p47 = por %p45, %p46
      %p48 = scmp.ne.s32.totalorder %s37, %s40
      %p49 = scmp.eq.s32.totalorder %s20, 1
      %p50 = por %p48, %p49
      %p51 = scmp.ne.s32.totalorder %s40, %s41
      %p52 = scmp.eq.s32.totalorder %s20, 0
      %p53 = por %p51, %p52
      %p54 = scmp.ne.s32.totalorder %s40, %s41
      %p55 = scmp.eq.s32.totalorder %s21, 1
      %p56 = por %p54, %p55
      %p58 = scmp.ne.s32.totalorder %s41, %s57
      %p59 = scmp.eq.s32.totalorder %s21, 0
      %p60 = por %p58, %p59
      %s61 = ssub.s32 %s23, %s30
      %p62 = scmp.eq.s32.totalorder %s61, 0
      %s64 = sadd.s32 %s63, 1
      %s65 = scalar_select %p62, %s63, %s64
      %p68 = pneg %p62
      %p69 = scmp.eq.s32.totalorder %s15, 1
      %p70 = por %p68, %p69
      %p71 = scmp.ne.s32.totalorder %s63, %s66
      %p72 = scmp.eq.s32.totalorder %s15, 0
      %p73 = por %p71, %p72
      %p74 = scmp.ne.s32.totalorder %s63, %s66
      %p75 = scmp.eq.s32.totalorder %s20, 1
      %p76 = por %p74, %p75
      %p77 = scmp.ne.s32.totalorder %s66, %s67
      %p78 = scmp.eq.s32.totalorder %s20, 0
      %p79 = por %p77, %p78
      %p80 = scmp.ne.s32.totalorder %s66, %s67
      %p81 = scmp.eq.s32.totalorder %s21, 1
      %p82 = por %p80, %p81
      %p84 = scmp.ne.s32.totalorder %s67, %s83
      %p85 = scmp.eq.s32.totalorder %s21, 0
      %p86 = por %p84, %p85
      %s87 = ssub.s32 %s22, %s34
      %s88 = ssub.s32 %s23, %s30
      %s89 = sor.u32 %s87, %s88
      %p90 = scmp.eq.s32.totalorder %s89, 0
      %s92 = sadd.s32 %s91, 1
      %s93 = scalar_select %p90, %s91, %s92
      %p96 = pneg %p90
      %p97 = scmp.eq.s32.totalorder %s15, 1
      %p98 = por %p96, %p97
      %p99 = scmp.ne.s32.totalorder %s91, %s94
      %p100 = scmp.eq.s32.totalorder %s15, 0
      %p101 = por %p99, %p100
      %p102 = scmp.ne.s32.totalorder %s91, %s94
      %p103 = scmp.eq.s32.totalorder %s20, 1
      %p104 = por %p102, %p103
      %p105 = scmp.ne.s32.totalorder %s94, %s95
      %p106 = scmp.eq.s32.totalorder %s20, 0
      %p107 = por %p105, %p106
      %p108 = scmp.ne.s32.totalorder %s94, %s95
      %p109 = scmp.eq.s32.totalorder %s21, 1
      %p110 = por %p108, %p109
      %p112 = scmp.ne.s32.totalorder %s95, %s111
      %p113 = scmp.eq.s32.totalorder %s21, 0
      %p114 = por %p112, %p113
      %p115 = scmp.le.s32.totalorder 1, %s15
      %p116 = scmp.lt.s32.totalorder %s15, 3
      %p117 = pnand %p115, %p116
      %p118 = pneg %p117
      // Predicated region
      $region9: #{tpu_custom_call.1} parent=5 // pred_check
        _
      $region10: #{tpu_custom_call.1} parent=5 // pred_check_branch
        %120 = sbr.rel (%p117) target = $region12
      $region11: #{tpu_custom_call.1} parent=5 // pred_region
        %s121 = ssub.s32 %s15, 1
        // Predicated region
        $region13: #{tpu_custom_call.1} parent=11 // pred_check
          %p122 = pneg %p79
        $region14: #{tpu_custom_call.1} parent=11 // pred_check_branch
          %124 = sbr.rel (%p122) target = $region16
        $region15: #{tpu_custom_call.1} parent=11 // pred_region
          %s126 = ssub.s32 576, 576
          %127 = vsyncadd [#allocation6], %s126
          %s128 = smul.addr %s25, 64
          %s129 = scalar_lea.hbm %s1, %s128
          %s130 = sshll.u32 [#allocation5], 4
          %s131 = int_to_ptr.vmem [resolvable:$true] %s130
          %136 = dma.hbm_to_vmem [thread:$0]  %s129, 576, %s131, [#allocation6], 64, 64, 4
        $region16: #{tpu_custom_call.1} parent=11 // pred_fallthru
          _
      $region12: #{tpu_custom_call.1} parent=5 // pred_fallthru
        _
      %p137 = scmp.lt.s32.totalorder %s15, 2
      // Predicated region
      $region17: #{tpu_custom_call.1} parent=5 // pred_check
        %p138 = pneg %p137
      $region18: #{tpu_custom_call.1} parent=5 // pred_check_branch
        %140 = sbr.rel (%p138) target = $region20
      $region19: #{tpu_custom_call.1} parent=5 // pred_region
        // Predicated region
        $region21: #{tpu_custom_call.1} parent=19 // pred_check
          %p141 = pneg %p47
        $region22: #{tpu_custom_call.1} parent=19 // pred_check_branch
          %143 = sbr.rel (%p141) target = $region24
        $region23: #{tpu_custom_call.1} parent=19 // pred_region
          %s144 = sand.u32 %s37, 1
          %s145 = scalar_lea.sflag [#allocation3], %s144
          %s146 = sand.u32 %s37, 1
          %s147 = smul.addr %s146, 432
          %s148 = scalar_lea.vmem [#allocation2], %s147
          %s150 = ssub.s32 6912, 6912
          %151 = vsyncadd %s145, %s150
          %s152 = smul.addr %s22, 54
          %s153 = smul.addr %s152, 128
          %s154 = scalar_lea.hbm %s0, %s153
          %s155 = sshll.u32 %s148, 4
          %s156 = int_to_ptr.vmem [resolvable:$true] %s155
          %161 = dma.hbm_to_vmem [thread:$0]  %s154, 6912, %s156, %s145, 128, 128, 8
        $region24: #{tpu_custom_call.1} parent=19 // pred_fallthru
          _
      $region20: #{tpu_custom_call.1} parent=5 // pred_fallthru
        _
      %p162 = scmp.le.s32.totalorder 1, %s15
      %p163 = scmp.lt.s32.totalorder %s15, 3
      %p164 = pnand %p162, %p163
      %p165 = pneg %p164
      // Predicated region
      $region25: #{tpu_custom_call.1} parent=5 // pred_check
        _
      $region26: #{tpu_custom_call.1} parent=5 // pred_check_branch
        %167 = sbr.rel (%p164) target = $region28
      $region27: #{tpu_custom_call.1} parent=5 // pred_region
        %s168 = ssub.s32 %s15, 1
        %s169 = sand.u32 %s40, 1
        %s170 = scalar_lea.sflag [#allocation3], %s169
        %s171 = sand.u32 %s40, 1
        %s172 = smul.addr %s171, 432
        %s173 = scalar_lea.vmem [#allocation2], %s172
        // Predicated region
        $region29: #{tpu_custom_call.1} parent=27 // pred_check
          %p174 = pneg %p53
        $region30: #{tpu_custom_call.1} parent=27 // pred_check_branch
          %176 = sbr.rel (%p174) target = $region32
        $region31: #{tpu_custom_call.1} parent=27 // pred_region
          %177 = dma.done %s170, 6912
        $region32: #{tpu_custom_call.1} parent=27 // pred_fallthru
          _
        // Predicated region
        $region33: #{tpu_custom_call.1} parent=27 // pred_check
          %p178 = pneg %p79
        $region34: #{tpu_custom_call.1} parent=27 // pred_check_branch
          %180 = sbr.rel (%p178) target = $region36
        $region35: #{tpu_custom_call.1} parent=27 // pred_region
          %181 = dma.done [#allocation6], 576
        $region36: #{tpu_custom_call.1} parent=27 // pred_fallthru
          _
        %s182 = sand.u32 %s40, 1
        %s183 = scalar_lea.sflag [#allocation3], %s182
        %s184 = sand.u32 %s40, 1
        %s185 = smul.addr %s184, 432
        %s186 = scalar_lea.vmem [#allocation2], %s185
        %p187 = pneg %p53
        %p188 = pneg %p50
        %p189 = pneg %p79
        %p190 = pneg %p76
        %p191 = pneg %p107
        %p192 = pneg %p104
        %s193 = sand.u32 %s94, 1
        %s194 = scalar_lea.sflag [#allocation4], %s193
        %s195 = sand.u32 %s94, 1
        %s196 = smul.addr %s195, 256
        %s197 = scalar_lea.vmem [#allocation7], %s196
        %v198 = vld [vmem:[%s173] sm:$0xff]
        %v199 = vld [vmem:[%s173 + $0x8] sm:$0xff]
        %v200 = vld [vmem:[%s173 + $0x10] sm:$0xff]
        %v201 = vld [vmem:[%s173 + $0x18] sm:$0xff]
        %v202 = vld [vmem:[%s173 + $0x20] sm:$0xff]
        %v203 = vld [vmem:[%s173 + $0x28] sm:$0xff]
        %v204 = vld [vmem:[%s173 + $0x30] sm:$0xff]
        %v205 = vld [vmem:[%s173 + $0x38] sm:$0xff]
        %v206 = vld [vmem:[%s173 + $0x40] sm:$0xff]
        %v207 = vld [vmem:[%s173 + $0x48] sm:$0xff]
        %v208 = vld [vmem:[%s173 + $0x50] sm:$0xff]
        %v209 = vld [vmem:[%s173 + $0x58] sm:$0xff]
        %v210 = vld [vmem:[%s173 + $0x60] sm:$0xff]
        %v211 = vld [vmem:[%s173 + $0x68] sm:$0xff]
        %v212 = vld [vmem:[%s173 + $0x70] sm:$0xff]
        %v213 = vld [vmem:[%s173 + $0x78] sm:$0xff]
        %v214 = vld [vmem:[%s173 + $0x80] sm:$0xff]
        %v215 = vld [vmem:[%s173 + $0x88] sm:$0xff]
        %v216 = vld [vmem:[%s173 + $0x90] sm:$0xff]
        %v217 = vld [vmem:[%s173 + $0x98] sm:$0xff]
        %v218 = vld [vmem:[%s173 + $0xa0] sm:$0xff]
        %v219 = vld [vmem:[%s173 + $0xa8] sm:$0xff]
        %v220 = vld [vmem:[%s173 + $0xb0] sm:$0xff]
        %v221 = vld [vmem:[%s173 + $0xb8] sm:$0xff]
        %v222 = vld [vmem:[%s173 + $0xc0] sm:$0xff]
        %v223 = vld [vmem:[%s173 + $0xc8] sm:$0xff]
        %v224 = vld [vmem:[%s173 + $0xd0] sm:$0xff]
        %v225 = vld [vmem:[%s173 + $0xd8] sm:$0xff]
        %v226 = vld [vmem:[%s173 + $0xe0] sm:$0xff]
        %v227 = vld [vmem:[%s173 + $0xe8] sm:$0xff]
        %v228 = vld [vmem:[%s173 + $0xf0] sm:$0xff]
        %v229 = vld [vmem:[%s173 + $0xf8] sm:$0xff]
        %v230 = vld [vmem:[%s173 + $0x100] sm:$0xff]
        %v231 = vld [vmem:[%s173 + $0x108] sm:$0xff]
        %v232 = vld [vmem:[%s173 + $0x110] sm:$0xff]
        %v233 = vld [vmem:[%s173 + $0x118] sm:$0xff]
        %v234 = vld [vmem:[%s173 + $0x120] sm:$0xff]
        %v235 = vld [vmem:[%s173 + $0x128] sm:$0xff]
        %v236 = vld [vmem:[%s173 + $0x130] sm:$0xff]
        %v237 = vld [vmem:[%s173 + $0x138] sm:$0xff]
        %v238 = vld [vmem:[%s173 + $0x140] sm:$0xff]
        %v239 = vld [vmem:[%s173 + $0x148] sm:$0xff]
        %v240 = vld [vmem:[%s173 + $0x150] sm:$0xff]
        %v241 = vld [vmem:[%s173 + $0x158] sm:$0xff]
        %v242 = vld [vmem:[%s173 + $0x160] sm:$0xff]
        %v243 = vld [vmem:[%s173 + $0x168] sm:$0xff]
        %v244 = vld [vmem:[%s173 + $0x170] sm:$0xff]
        %v245 = vld [vmem:[%s173 + $0x178] sm:$0xff]
        %v246 = vld [vmem:[#allocation5] sm:$0xf]
        %v247 = vld [vmem:[%s173 + $0x180] sm:$0xff]
        %v248 = vld [vmem:[%s173 + $0x188] sm:$0xff]
        %v249 = vld [vmem:[%s173 + $0x190] sm:$0xff]
        %s250 = scalar_lea.vmem [#allocation5], 12
        %v251 = vld [vmem:[%s250] sm:$0xf]
        %vm252 = vcmask 31744
        %v254 = vsel %vm252, %v201, 0
        %v257 = vsel %vm252, %v202, 0
        %v260 = vsel %vm252, %v203, 0
        %v263 = vsel %vm252, %v204, 0
        %v266 = vsel %vm252, %v205, 0
        %v269 = vsel %vm252, %v206, 0
        %v272 = vsel %vm252, %v207, 0
        %v275 = vsel %vm252, %v208, 0
        %v278 = vsel %vm252, %v209, 0
        %v281 = vsel %vm252, %v210, 0
        %v284 = vsel %vm252, %v211, 0
        %v287 = vsel %vm252, %v212, 0
        %v290 = vsel %vm252, %v213, 0
        %v293 = vsel %vm252, %v214, 0
        %v296 = vsel %vm252, %v215, 0
        %v299 = vsel %vm252, %v216, 0
        %v302 = vsel %vm252, %v217, 0
        %v305 = vsel %vm252, %v218, 0
        %v308 = vsel %vm252, %v219, 0
        %v311 = vsel %vm252, %v220, 0
        %v314 = vsel %vm252, %v221, 0
        %v317 = vsel %vm252, %v222, 0
        %v320 = vsel %vm252, %v223, 0
        %v323 = vsel %vm252, %v224, 0
        %v326 = vsel %vm252, %v225, 0
        %v329 = vsel %vm252, %v226, 0
        %v332 = vsel %vm252, %v227, 0
        %v335 = vsel %vm252, %v228, 0
        %v338 = vsel %vm252, %v229, 0
        %v341 = vsel %vm252, %v230, 0
        %v344 = vsel %vm252, %v231, 0
        %v347 = vsel %vm252, %v232, 0
        %v350 = vsel %vm252, %v233, 0
        %v353 = vsel %vm252, %v234, 0
        %v356 = vsel %vm252, %v235, 0
        %v359 = vsel %vm252, %v236, 0
        %v362 = vsel %vm252, %v237, 0
        %v365 = vsel %vm252, %v238, 0
        %v368 = vsel %vm252, %v239, 0
        %v371 = vsel %vm252, %v240, 0
        %v374 = vsel %vm252, %v241, 0
        %v377 = vsel %vm252, %v242, 0
        %v380 = vsel %vm252, %v243, 0
        %v383 = vsel %vm252, %v244, 0
        %v386 = vsel %vm252, %v245, 0
        %v389 = vsel %vm252, %v247, 0
        %v392 = vsel %vm252, %v248, 0
        %v395 = vsel %vm252, %v249, 0
        %vm397 = vcmask 1043456
        %v399 = vsel %vm397, %v251, 0
        %401 = vmatprep.subr.mxu0 0.0
        %402 = vmatpush1.msra.mxu0 %v399
        %403 = vmatprep.subr.mxu0 0.0
        %404 = vmatpush1.msra.mxu0 0.0
        %405 = vmatprep.subr.mxu0 0.0
        %406 = vmatpush1.msra.mxu0 0.0
        %407 = vmatprep.subr.mxu0 0.0
        %408 = vmatpush1.msra.mxu0 0.0
        %409 = vmatprep.subr.mxu0 0.0
        %410 = vmatpush1.msra.mxu0 0.0
        %411 = vmatprep.subr.mxu0 0.0
        %412 = vmatpush1.msra.mxu0 0.0
        %413 = vmatprep.subr.mxu0 0.0
        %414 = vmatpush1.msra.mxu0 0.0
        %415 = vmatprep.subr.mxu0 0.0
        %416 = vmatpush1.msra.mxu0 0.0
        %417 = vmatprep.subr.mxu0 0.0
        %418 = vmatpush1.msra.mxu0 0.0
        %419 = vmatprep.subr.mxu0 0.0
        %420 = vmatpush1.msra.mxu0 0.0
        %421 = vmatprep.subr.mxu0 0.0
        %422 = vmatpush1.msra.mxu0 0.0
        %423 = vmatprep.subr.mxu0 0.0
        %424 = vmatpush1.msra.mxu0 0.0
        %425 = vmatprep.subr.mxu0 0.0
        %426 = vmatpush1.msra.mxu0 0.0
        %427 = vmatprep.subr.mxu0 0.0
        %428 = vmatpush1.msra.mxu0 0.0
        %429 = vmatprep.subr.mxu0 0.0
        %430 = vmatpush1.msra.mxu0 0.0
        %431 = vmatprep.subr.mxu0 0.0
        %432 = vmatpush1.msra.mxu0 0.0
        %433 = vmatprep.subr.mxu0 0.0
        %434 = vmatpush1.msra.mxu0 0.0
        %435 = vmatprep.subr.mxu0 0.0
        %436 = vmatpush1.msra.mxu0 0.0
        %437 = vmatprep.subr.mxu0 0.0
        %438 = vmatpush1.msra.mxu0 0.0
        %439 = vmatprep.subr.mxu0 0.0
        %440 = vmatpush1.msra.mxu0 0.0
        %441 = vmatprep.subr.mxu0 0.0
        %442 = vmatpush1.msra.mxu0 0.0
        %443 = vmatprep.subr.mxu0 0.0
        %444 = vmatpush1.msra.mxu0 0.0
        %445 = vmatprep.subr.mxu0 0.0
        %446 = vmatpush1.msra.mxu0 0.0
        %447 = vmatprep.subr.mxu0 0.0
        %448 = vmatpush1.msra.mxu0 0.0
        %449 = vmatprep.subr.mxu0 0.0
        %450 = vmatpush1.msra.mxu0 0.0
        %451 = vmatprep.subr.mxu0 0.0
        %452 = vmatpush1.msra.mxu0 0.0
        %453 = vmatprep.subr.mxu0 0.0
        %454 = vmatpush1.msra.mxu0 0.0
        %455 = vmatprep.subr.mxu0 0.0
        %456 = vmatpush1.msra.mxu0 0.0
        %457 = vmatprep.subr.mxu0 0.0
        %458 = vmatpush1.msra.mxu0 0.0
        %459 = vmatprep.subr.mxu0 0.0
        %460 = vmatpush1.msra.mxu0 0.0
        %461 = vmatprep.subr.mxu0 0.0
        %462 = vmatpush1.msra.mxu0 0.0
        %463 = vmatprep.subr.mxu0 0.0
        %464 = vmatpush1.msra.mxu0 0.0
        %465 = vmatprep.mubr.f32.mxu0 0.0
        %466 = vmatmul.mubr.f32.gmra.mrb[0].mxu0 %v254
        %v467 = vpop.f32.mrb[0].mxu0
        %v468 = vadd.f32 0.0, %v467
        %v469 = vpop.f32.mrb[0].mxu0
        %470 = vmatprep.mubr.f32.mxu0 0.0
        %471 = vmatmul.mubr.f32.gmra.mrb[0].mxu0 %v257
        %v472 = vpop.f32.mrb[0].mxu0
        %v473 = vadd.f32 0.0, %v472
        %v474 = vpop.f32.mrb[0].mxu0
        %475 = vmatprep.mubr.f32.mxu0 0.0
        %476 = vmatmul.mubr.f32.gmra.mrb[0].mxu0 %v260
        %v477 = vpop.f32.mrb[0].mxu0
        %v478 = vpop.f32.mrb[0].mxu0
        %479 = vmatprep.mubr.f32.mxu0 0.0
        %480 = vmatmul.mubr.f32.gmra.mrb[0].mxu0 %v263
        %v481 = vpop.f32.mrb[0].mxu0
        %v482 = vadd.f32 0.0, %v481
        %v483 = vpop.f32.mrb[0].mxu0
        %484 = vmatprep.mubr.f32.mxu0 0.0
        %485 = vmatmul.mubr.f32.gmra.mrb[0].mxu0 %v266
        %v486 = vpop.f32.mrb[0].mxu0
        %v487 = vadd.f32 0.0, %v486
        %v488 = vpop.f32.mrb[0].mxu0
        %489 = vmatprep.mubr.f32.mxu0 0.0
        %490 = vmatmul.mubr.f32.gmra.mrb[0].mxu0 %v269
        %v491 = vpop.f32.mrb[0].mxu0
        %v492 = vpop.f32.mrb[0].mxu0
        %493 = vmatprep.mubr.f32.mxu0 0.0
        %494 = vmatmul.mubr.f32.gmra.mrb[0].mxu0 %v272
        %v495 = vpop.f32.mrb[0].mxu0
        %v496 = vadd.f32 0.0, %v495
        %v497 = vpop.f32.mrb[0].mxu0
        %498 = vmatprep.mubr.f32.mxu0 0.0
        %499 = vmatmul.mubr.f32.gmra.mrb[0].mxu0 %v275
        %v500 = vpop.f32.mrb[0].mxu0
        %v501 = vadd.f32 0.0, %v500
        %v502 = vpop.f32.mrb[0].mxu0
        %503 = vmatprep.mubr.f32.mxu0 0.0
        %504 = vmatmul.mubr.f32.gmra.mrb[0].mxu0 %v278
        %v505 = vpop.f32.mrb[0].mxu0
        %v506 = vpop.f32.mrb[0].mxu0
        %507 = vmatprep.mubr.f32.mxu0 0.0
        %508 = vmatmul.mubr.f32.gmra.mrb[0].mxu0 %v281
        %v509 = vpop.f32.mrb[0].mxu0
        %v510 = vadd.f32 0.0, %v509
        %v511 = vpop.f32.mrb[0].mxu0
        %512 = vmatprep.mubr.f32.mxu0 0.0
        %513 = vmatmul.mubr.f32.gmra.mrb[0].mxu0 %v284
        %v514 = vpop.f32.mrb[0].mxu0
        %v515 = vadd.f32 0.0, %v514
        %v516 = vpop.f32.mrb[0].mxu0
        %517 = vmatprep.mubr.f32.mxu0 0.0
        %518 = vmatmul.mubr.f32.gmra.mrb[0].mxu0 %v287
        %v519 = vpop.f32.mrb[0].mxu0
        %v520 = vpop.f32.mrb[0].mxu0
        %521 = vmatprep.mubr.f32.mxu0 0.0
        %522 = vmatmul.mubr.f32.gmra.mrb[0].mxu0 %v290
        %v523 = vpop.f32.mrb[0].mxu0
        %v524 = vadd.f32 0.0, %v523
        %v525 = vpop.f32.mrb[0].mxu0
        %526 = vmatprep.mubr.f32.mxu0 0.0
        %527 = vmatmul.mubr.f32.gmra.mrb[0].mxu0 %v293
        %v528 = vpop.f32.mrb[0].mxu0
        %v529 = vadd.f32 0.0, %v528
        %v530 = vpop.f32.mrb[0].mxu0
        %531 = vmatprep.mubr.f32.mxu0 0.0
        %532 = vmatmul.mubr.f32.gmra.mrb[0].mxu0 %v296
        %v533 = vpop.f32.mrb[0].mxu0
        %v534 = vpop.f32.mrb[0].mxu0
        %535 = vmatprep.mubr.f32.mxu0 0.0
        %536 = vmatmul.mubr.f32.gmra.mrb[0].mxu0 %v299
        %v537 = vpop.f32.mrb[0].mxu0
        %v538 = vadd.f32 0.0, %v537
        %v539 = vpop.f32.mrb[0].mxu0
        %540 = vmatprep.mubr.f32.mxu0 0.0
        %541 = vmatmul.mubr.f32.gmra.mrb[0].mxu0 %v302
        %v542 = vpop.f32.mrb[0].mxu0
        %v543 = vadd.f32 0.0, %v542
        %v544 = vpop.f32.mrb[0].mxu0
        %545 = vmatprep.mubr.f32.mxu0 0.0
        %546 = vmatmul.mubr.f32.gmra.mrb[0].mxu0 %v305
        %v547 = vpop.f32.mrb[0].mxu0
        %v548 = vpop.f32.mrb[0].mxu0
        %549 = vmatprep.mubr.f32.mxu0 0.0
        %550 = vmatmul.mubr.f32.gmra.mrb[0].mxu0 %v308
        %v551 = vpop.f32.mrb[0].mxu0
        %v552 = vadd.f32 0.0, %v551
        %v553 = vpop.f32.mrb[0].mxu0
        %554 = vmatprep.mubr.f32.mxu0 0.0
        %555 = vmatmul.mubr.f32.gmra.mrb[0].mxu0 %v311
        %v556 = vpop.f32.mrb[0].mxu0
        %v557 = vadd.f32 0.0, %v556
        %v558 = vpop.f32.mrb[0].mxu0
        %559 = vmatprep.mubr.f32.mxu0 0.0
        %560 = vmatmul.mubr.f32.gmra.mrb[0].mxu0 %v314
        %v561 = vpop.f32.mrb[0].mxu0
        %v562 = vpop.f32.mrb[0].mxu0
        %563 = vmatprep.mubr.f32.mxu0 0.0
        %564 = vmatmul.mubr.f32.gmra.mrb[0].mxu0 %v317
        %v565 = vpop.f32.mrb[0].mxu0
        %v566 = vadd.f32 0.0, %v565
        %v567 = vpop.f32.mrb[0].mxu0
        %568 = vmatprep.mubr.f32.mxu0 0.0
        %569 = vmatmul.mubr.f32.gmra.mrb[0].mxu0 %v320
        %v570 = vpop.f32.mrb[0].mxu0
        %v571 = vadd.f32 0.0, %v570
        %v572 = vpop.f32.mrb[0].mxu0
        %573 = vmatprep.mubr.f32.mxu0 0.0
        %574 = vmatmul.mubr.f32.gmra.mrb[0].mxu0 %v323
        %v575 = vpop.f32.mrb[0].mxu0
        %v576 = vpop.f32.mrb[0].mxu0
        %577 = vmatprep.mubr.f32.mxu0 0.0
        %578 = vmatmul.mubr.f32.gmra.mrb[0].mxu0 %v326
        %v579 = vpop.f32.mrb[0].mxu0
        %v580 = vadd.f32 0.0, %v579
        %v581 = vpop.f32.mrb[0].mxu0
        %582 = vmatprep.mubr.f32.mxu0 0.0
        %583 = vmatmul.mubr.f32.gmra.mrb[0].mxu0 %v329
        %v584 = vpop.f32.mrb[0].mxu0
        %v585 = vadd.f32 0.0, %v584
        %v586 = vpop.f32.mrb[0].mxu0
        %587 = vmatprep.mubr.f32.mxu0 0.0
        %588 = vmatmul.mubr.f32.gmra.mrb[0].mxu0 %v332
        %v589 = vpop.f32.mrb[0].mxu0
        %v590 = vpop.f32.mrb[0].mxu0
        %591 = vmatprep.mubr.f32.mxu0 0.0
        %592 = vmatmul.mubr.f32.gmra.mrb[0].mxu0 %v335
        %v593 = vpop.f32.mrb[0].mxu0
        %v594 = vadd.f32 0.0, %v593
        %v595 = vpop.f32.mrb[0].mxu0
        %596 = vmatprep.mubr.f32.mxu0 0.0
        %597 = vmatmul.mubr.f32.gmra.mrb[0].mxu0 %v338
        %v598 = vpop.f32.mrb[0].mxu0
        %v599 = vadd.f32 0.0, %v598
        %v600 = vpop.f32.mrb[0].mxu0
        %601 = vmatprep.mubr.f32.mxu0 0.0
        %602 = vmatmul.mubr.f32.gmra.mrb[0].mxu0 %v341
        %v603 = vpop.f32.mrb[0].mxu0
        %v604 = vpop.f32.mrb[0].mxu0
        %605 = vmatprep.mubr.f32.mxu0 0.0
        %606 = vmatmul.mubr.f32.gmra.mrb[0].mxu0 %v344
        %v607 = vpop.f32.mrb[0].mxu0
        %v608 = vadd.f32 0.0, %v607
        %v609 = vpop.f32.mrb[0].mxu0
        %610 = vmatprep.mubr.f32.mxu0 0.0
        %611 = vmatmul.mubr.f32.gmra.mrb[0].mxu0 %v347
        %v612 = vpop.f32.mrb[0].mxu0
        %v613 = vadd.f32 0.0, %v612
        %v614 = vpop.f32.mrb[0].mxu0
        %615 = vmatprep.mubr.f32.mxu0 0.0
        %616 = vmatmul.mubr.f32.gmra.mrb[0].mxu0 %v350
        %v617 = vpop.f32.mrb[0].mxu0
        %v618 = vpop.f32.mrb[0].mxu0
        %619 = vmatprep.mubr.f32.mxu0 0.0
        %620 = vmatmul.mubr.f32.gmra.mrb[0].mxu0 %v353
        %v621 = vpop.f32.mrb[0].mxu0
        %v622 = vadd.f32 0.0, %v621
        %v623 = vpop.f32.mrb[0].mxu0
        %624 = vmatprep.mubr.f32.mxu0 0.0
        %625 = vmatmul.mubr.f32.gmra.mrb[0].mxu0 %v356
        %v626 = vpop.f32.mrb[0].mxu0
        %v627 = vadd.f32 0.0, %v626
        %v628 = vpop.f32.mrb[0].mxu0
        %629 = vmatprep.mubr.f32.mxu0 0.0
        %630 = vmatmul.mubr.f32.gmra.mrb[0].mxu0 %v359
        %v631 = vpop.f32.mrb[0].mxu0
        %v632 = vpop.f32.mrb[0].mxu0
        %633 = vmatprep.mubr.f32.mxu0 0.0
        %634 = vmatmul.mubr.f32.gmra.mrb[0].mxu0 %v362
        %v635 = vpop.f32.mrb[0].mxu0
        %v636 = vadd.f32 0.0, %v635
        %v637 = vpop.f32.mrb[0].mxu0
        %638 = vmatprep.mubr.f32.mxu0 0.0
        %639 = vmatmul.mubr.f32.gmra.mrb[0].mxu0 %v365
        %v640 = vpop.f32.mrb[0].mxu0
        %v641 = vadd.f32 0.0, %v640
        %v642 = vpop.f32.mrb[0].mxu0
        %643 = vmatprep.mubr.f32.mxu0 0.0
        %644 = vmatmul.mubr.f32.gmra.mrb[0].mxu0 %v368
        %v645 = vpop.f32.mrb[0].mxu0
        %v646 = vpop.f32.mrb[0].mxu0
        %647 = vmatprep.mubr.f32.mxu0 0.0
        %648 = vmatmul.mubr.f32.gmra.mrb[0].mxu0 %v371
        %v649 = vpop.f32.mrb[0].mxu0
        %v650 = vadd.f32 0.0, %v649
        %v651 = vpop.f32.mrb[0].mxu0
        %652 = vmatprep.mubr.f32.mxu0 0.0
        %653 = vmatmul.mubr.f32.gmra.mrb[0].mxu0 %v374
        %v654 = vpop.f32.mrb[0].mxu0
        %v655 = vadd.f32 0.0, %v654
        %v656 = vpop.f32.mrb[0].mxu0
        %657 = vmatprep.mubr.f32.mxu0 0.0
        %658 = vmatmul.mubr.f32.gmra.mrb[0].mxu0 %v377
        %v659 = vpop.f32.mrb[0].mxu0
        %v660 = vpop.f32.mrb[0].mxu0
        %661 = vmatprep.mubr.f32.mxu0 0.0
        %662 = vmatmul.mubr.f32.gmra.mrb[0].mxu0 %v380
        %v663 = vpop.f32.mrb[0].mxu0
        %v664 = vadd.f32 0.0, %v663
        %v665 = vpop.f32.mrb[0].mxu0
        %666 = vmatprep.mubr.f32.mxu0 0.0
        %667 = vmatmul.mubr.f32.gmra.mrb[0].mxu0 %v383
        %v668 = vpop.f32.mrb[0].mxu0
        %v669 = vadd.f32 0.0, %v668
        %v670 = vpop.f32.mrb[0].mxu0
        %671 = vmatprep.mubr.f32.mxu0 0.0
        %672 = vmatmul.mubr.f32.gmra.mrb[0].mxu0 %v386
        %v673 = vpop.f32.mrb[0].mxu0
        %v674 = vpop.f32.mrb[0].mxu0
        %675 = vmatprep.mubr.f32.mxu0 0.0
        %676 = vmatmul.mubr.f32.gmra.mrb[0].mxu0 %v389
        %v677 = vpop.f32.mrb[0].mxu0
        %v678 = vadd.f32 0.0, %v677
        %v679 = vpop.f32.mrb[0].mxu0
        %680 = vmatprep.mubr.f32.mxu0 0.0
        %681 = vmatmul.mubr.f32.gmra.mrb[0].mxu0 %v392
        %v682 = vpop.f32.mrb[0].mxu0
        %v683 = vadd.f32 0.0, %v682
        %v684 = vpop.f32.mrb[0].mxu0
        %685 = vmatprep.mubr.f32.mxu0 0.0
        %686 = vmatmul.mubr.f32.gmra.mrb[0].mxu0 %v395
        %v687 = vpop.f32.mrb[0].mxu0
        %v688 = vpop.f32.mrb[0].mxu0
        %689 = vdwg.mxu0
        %v691 = vsel %vm252, %v198, 0
        %v694 = vsel %vm252, %v199, 0
        %v697 = vsel %vm252, %v200, 0
        %v700 = vsel %vm397, %v246, 0
        %702 = vmatprep.subr.mxu0 0.0
        %703 = vmatpush1.msra.mxu0 %v700
        %704 = vmatprep.subr.mxu0 0.0
        %705 = vmatpush1.msra.mxu0 0.0
        %706 = vmatprep.subr.mxu0 0.0
        %707 = vmatpush1.msra.mxu0 0.0
        %708 = vmatprep.subr.mxu0 0.0
        %709 = vmatpush1.msra.mxu0 0.0
        %710 = vmatprep.subr.mxu0 0.0
        %711 = vmatpush1.msra.mxu0 0.0
        %712 = vmatprep.subr.mxu0 0.0
        %713 = vmatpush1.msra.mxu0 0.0
        %714 = vmatprep.subr.mxu0 0.0
        %715 = vmatpush1.msra.mxu0 0.0
        %716 = vmatprep.subr.mxu0 0.0
        %717 = vmatpush1.msra.mxu0 0.0
        %718 = vmatprep.subr.mxu0 0.0
        %719 = vmatpush1.msra.mxu0 0.0
        %720 = vmatprep.subr.mxu0 0.0
        %721 = vmatpush1.msra.mxu0 0.0
        %722 = vmatprep.subr.mxu0 0.0
        %723 = vmatpush1.msra.mxu0 0.0
        %724 = vmatprep.subr.mxu0 0.0
        %725 = vmatpush1.msra.mxu0 0.0
        %726 = vmatprep.subr.mxu0 0.0
        %727 = vmatpush1.msra.mxu0 0.0
        %728 = vmatprep.subr.mxu0 0.0
        %729 = vmatpush1.msra.mxu0 0.0
        %730 = vmatprep.subr.mxu0 0.0
        %731 = vmatpush1.msra.mxu0 0.0
        %732 = vmatprep.subr.mxu0 0.0
        %733 = vmatpush1.msra.mxu0 0.0
        %734 = vmatprep.subr.mxu0 0.0
        %735 = vmatpush1.msra.mxu0 0.0
        %736 = vmatprep.subr.mxu0 0.0
        %737 = vmatpush1.msra.mxu0 0.0
        %738 = vmatprep.subr.mxu0 0.0
        %739 = vmatpush1.msra.mxu0 0.0
        %740 = vmatprep.subr.mxu0 0.0
        %741 = vmatpush1.msra.mxu0 0.0
        %742 = vmatprep.subr.mxu0 0.0
        %743 = vmatpush1.msra.mxu0 0.0
        %744 = vmatprep.subr.mxu0 0.0
        %745 = vmatpush1.msra.mxu0 0.0
        %746 = vmatprep.subr.mxu0 0.0
        %747 = vmatpush1.msra.mxu0 0.0
        %748 = vmatprep.subr.mxu0 0.0
        %749 = vmatpush1.msra.mxu0 0.0
        %750 = vmatprep.subr.mxu0 0.0
        %751 = vmatpush1.msra.mxu0 0.0
        %752 = vmatprep.subr.mxu0 0.0
        %753 = vmatpush1.msra.mxu0 0.0
        %754 = vmatprep.subr.mxu0 0.0
        %755 = vmatpush1.msra.mxu0 0.0
        %756 = vmatprep.subr.mxu0 0.0
        %757 = vmatpush1.msra.mxu0 0.0
        %758 = vmatprep.subr.mxu0 0.0
        %759 = vmatpush1.msra.mxu0 0.0
        %760 = vmatprep.subr.mxu0 0.0
        %761 = vmatpush1.msra.mxu0 0.0
        %762 = vmatprep.subr.mxu0 0.0
        %763 = vmatpush1.msra.mxu0 0.0
        %764 = vmatprep.subr.mxu0 0.0
        %765 = vmatpush1.msra.mxu0 0.0
        %766 = vmatprep.mubr.f32.mxu0 0.0
        %767 = vmatmul.mubr.f32.gmra.mrb[0].mxu0 %v691
        %v768 = vpop.f32.mrb[0].mxu0
        %v769 = vadd.f32 %v468, %v768
        %v770 = vpop.f32.mrb[0].mxu0
        %771 = vmatprep.mubr.f32.mxu0 0.0
        %772 = vmatmul.mubr.f32.gmra.mrb[0].mxu0 %v694
        %v773 = vpop.f32.mrb[0].mxu0
        %v774 = vadd.f32 %v473, %v773
        %v775 = vpop.f32.mrb[0].mxu0
        %776 = vmatprep.mubr.f32.mxu0 0.0
        %777 = vmatmul.mubr.f32.gmra.mrb[0].mxu0 %v697
        %v778 = vpop.f32.mrb[0].mxu0
        %v779 = vpop.f32.mrb[0].mxu0
        %780 = vmatprep.mubr.f32.mxu0 0.0
        %781 = vmatmul.mubr.f32.gmra.mrb[0].mxu0 %v254
        %v782 = vpop.f32.mrb[0].mxu0
        %v783 = vadd.f32 %v482, %v782
        %v784 = vpop.f32.mrb[0].mxu0
        %785 = vmatprep.mubr.f32.mxu0 0.0
        %786 = vmatmul.mubr.f32.gmra.mrb[0].mxu0 %v257
        %v787 = vpop.f32.mrb[0].mxu0
        %v788 = vadd.f32 %v487, %v787
        %v789 = vpop.f32.mrb[0].mxu0
        %790 = vmatprep.mubr.f32.mxu0 0.0
        %791 = vmatmul.mubr.f32.gmra.mrb[0].mxu0 %v260
        %v792 = vpop.f32.mrb[0].mxu0
        %v793 = vpop.f32.mrb[0].mxu0
        %794 = vmatprep.mubr.f32.mxu0 0.0
        %795 = vmatmul.mubr.f32.gmra.mrb[0].mxu0 %v263
        %v796 = vpop.f32.mrb[0].mxu0
        %v797 = vadd.f32 %v496, %v796
        %v798 = vpop.f32.mrb[0].mxu0
        %799 = vmatprep.mubr.f32.mxu0 0.0
        %800 = vmatmul.mubr.f32.gmra.mrb[0].mxu0 %v266
        %v801 = vpop.f32.mrb[0].mxu0
        %v802 = vadd.f32 %v501, %v801
        %v803 = vpop.f32.mrb[0].mxu0
        %804 = vmatprep.mubr.f32.mxu0 0.0
        %805 = vmatmul.mubr.f32.gmra.mrb[0].mxu0 %v269
        %v806 = vpop.f32.mrb[0].mxu0
        %v807 = vpop.f32.mrb[0].mxu0
        %808 = vmatprep.mubr.f32.mxu0 0.0
        %809 = vmatmul.mubr.f32.gmra.mrb[0].mxu0 %v272
        %v810 = vpop.f32.mrb[0].mxu0
        %v811 = vadd.f32 %v510, %v810
        %v812 = vpop.f32.mrb[0].mxu0
        %813 = vmatprep.mubr.f32.mxu0 0.0
        %814 = vmatmul.mubr.f32.gmra.mrb[0].mxu0 %v275
        %v815 = vpop.f32.mrb[0].mxu0
        %v816 = vadd.f32 %v515, %v815
        %v817 = vpop.f32.mrb[0].mxu0
        %818 = vmatprep.mubr.f32.mxu0 0.0
        %819 = vmatmul.mubr.f32.gmra.mrb[0].mxu0 %v278
        %v820 = vpop.f32.mrb[0].mxu0
        %v821 = vpop.f32.mrb[0].mxu0
        %822 = vmatprep.mubr.f32.mxu0 0.0
        %823 = vmatmul.mubr.f32.gmra.mrb[0].mxu0 %v281
        %v824 = vpop.f32.mrb[0].mxu0
        %v825 = vadd.f32 %v524, %v824
        %v826 = vpop.f32.mrb[0].mxu0
        %827 = vmatprep.mubr.f32.mxu0 0.0
        %828 = vmatmul.mubr.f32.gmra.mrb[0].mxu0 %v284
        %v829 = vpop.f32.mrb[0].mxu0
        %v830 = vadd.f32 %v529, %v829
        %v831 = vpop.f32.mrb[0].mxu0
        %832 = vmatprep.mubr.f32.mxu0 0.0
        %833 = vmatmul.mubr.f32.gmra.mrb[0].mxu0 %v287
        %v834 = vpop.f32.mrb[0].mxu0
        %v835 = vpop.f32.mrb[0].mxu0
        %836 = vmatprep.mubr.f32.mxu0 0.0
        %837 = vmatmul.mubr.f32.gmra.mrb[0].mxu0 %v290
        %v838 = vpop.f32.mrb[0].mxu0
        %v839 = vadd.f32 %v538, %v838
        %v840 = vpop.f32.mrb[0].mxu0
        %841 = vmatprep.mubr.f32.mxu0 0.0
        %842 = vmatmul.mubr.f32.gmra.mrb[0].mxu0 %v293
        %v843 = vpop.f32.mrb[0].mxu0
        %v844 = vadd.f32 %v543, %v843
        %v845 = vpop.f32.mrb[0].mxu0
        %846 = vmatprep.mubr.f32.mxu0 0.0
        %847 = vmatmul.mubr.f32.gmra.mrb[0].mxu0 %v296
        %v848 = vpop.f32.mrb[0].mxu0
        %v849 = vpop.f32.mrb[0].mxu0
        %850 = vmatprep.mubr.f32.mxu0 0.0
        %851 = vmatmul.mubr.f32.gmra.mrb[0].mxu0 %v299
        %v852 = vpop.f32.mrb[0].mxu0
        %v853 = vadd.f32 %v552, %v852
        %v854 = vpop.f32.mrb[0].mxu0
        %855 = vmatprep.mubr.f32.mxu0 0.0
        %856 = vmatmul.mubr.f32.gmra.mrb[0].mxu0 %v302
        %v857 = vpop.f32.mrb[0].mxu0
        %v858 = vadd.f32 %v557, %v857
        %v859 = vpop.f32.mrb[0].mxu0
        %860 = vmatprep.mubr.f32.mxu0 0.0
        %861 = vmatmul.mubr.f32.gmra.mrb[0].mxu0 %v305
        %v862 = vpop.f32.mrb[0].mxu0
        %v863 = vpop.f32.mrb[0].mxu0
        %864 = vmatprep.mubr.f32.mxu0 0.0
        %865 = vmatmul.mubr.f32.gmra.mrb[0].mxu0 %v308
        %v866 = vpop.f32.mrb[0].mxu0
        %v867 = vadd.f32 %v566, %v866
        %v868 = vpop.f32.mrb[0].mxu0
        %869 = vmatprep.mubr.f32.mxu0 0.0
        %870 = vmatmul.mubr.f32.gmra.mrb[0].mxu0 %v311
        %v871 = vpop.f32.mrb[0].mxu0
        %v872 = vadd.f32 %v571, %v871
        %v873 = vpop.f32.mrb[0].mxu0
        %874 = vmatprep.mubr.f32.mxu0 0.0
        %875 = vmatmul.mubr.f32.gmra.mrb[0].mxu0 %v314
        %v876 = vpop.f32.mrb[0].mxu0
        %v877 = vpop.f32.mrb[0].mxu0
        %878 = vmatprep.mubr.f32.mxu0 0.0
        %879 = vmatmul.mubr.f32.gmra.mrb[0].mxu0 %v317
        %v880 = vpop.f32.mrb[0].mxu0
        %v881 = vadd.f32 %v580, %v880
        %v882 = vpop.f32.mrb[0].mxu0
        %883 = vmatprep.mubr.f32.mxu0 0.0
        %884 = vmatmul.mubr.f32.gmra.mrb[0].mxu0 %v320
        %v885 = vpop.f32.mrb[0].mxu0
        %v886 = vadd.f32 %v585, %v885
        %v887 = vpop.f32.mrb[0].mxu0
        %888 = vmatprep.mubr.f32.mxu0 0.0
        %889 = vmatmul.mubr.f32.gmra.mrb[0].mxu0 %v323
        %v890 = vpop.f32.mrb[0].mxu0
        %v891 = vpop.f32.mrb[0].mxu0
        %892 = vmatprep.mubr.f32.mxu0 0.0
        %893 = vmatmul.mubr.f32.gmra.mrb[0].mxu0 %v326
        %v894 = vpop.f32.mrb[0].mxu0
        %v895 = vadd.f32 %v594, %v894
        %v896 = vpop.f32.mrb[0].mxu0
        %897 = vmatprep.mubr.f32.mxu0 0.0
        %898 = vmatmul.mubr.f32.gmra.mrb[0].mxu0 %v329
        %v899 = vpop.f32.mrb[0].mxu0
        %v900 = vadd.f32 %v599, %v899
        %v901 = vpop.f32.mrb[0].mxu0
        %902 = vmatprep.mubr.f32.mxu0 0.0
        %903 = vmatmul.mubr.f32.gmra.mrb[0].mxu0 %v332
        %v904 = vpop.f32.mrb[0].mxu0
        %v905 = vpop.f32.mrb[0].mxu0
        %906 = vmatprep.mubr.f32.mxu0 0.0
        %907 = vmatmul.mubr.f32.gmra.mrb[0].mxu0 %v335
        %v908 = vpop.f32.mrb[0].mxu0
        %v909 = vadd.f32 %v608, %v908
        %v910 = vpop.f32.mrb[0].mxu0
        %911 = vmatprep.mubr.f32.mxu0 0.0
        %912 = vmatmul.mubr.f32.gmra.mrb[0].mxu0 %v338
        %v913 = vpop.f32.mrb[0].mxu0
        %v914 = vadd.f32 %v613, %v913
        %v915 = vpop.f32.mrb[0].mxu0
        %916 = vmatprep.mubr.f32.mxu0 0.0
        %917 = vmatmul.mubr.f32.gmra.mrb[0].mxu0 %v341
        %v918 = vpop.f32.mrb[0].mxu0
        %v919 = vpop.f32.mrb[0].mxu0
        %920 = vmatprep.mubr.f32.mxu0 0.0
        %921 = vmatmul.mubr.f32.gmra.mrb[0].mxu0 %v344
        %v922 = vpop.f32.mrb[0].mxu0
        %v923 = vadd.f32 %v622, %v922
        %v924 = vpop.f32.mrb[0].mxu0
        %925 = vmatprep.mubr.f32.mxu0 0.0
        %926 = vmatmul.mubr.f32.gmra.mrb[0].mxu0 %v347
        %v927 = vpop.f32.mrb[0].mxu0
        %v928 = vadd.f32 %v627, %v927
        %v929 = vpop.f32.mrb[0].mxu0
        %930 = vmatprep.mubr.f32.mxu0 0.0
        %931 = vmatmul.mubr.f32.gmra.mrb[0].mxu0 %v350
        %v932 = vpop.f32.mrb[0].mxu0
        %v933 = vpop.f32.mrb[0].mxu0
        %934 = vmatprep.mubr.f32.mxu0 0.0
        %935 = vmatmul.mubr.f32.gmra.mrb[0].mxu0 %v353
        %v936 = vpop.f32.mrb[0].mxu0
        %v937 = vadd.f32 %v636, %v936
        %v938 = vpop.f32.mrb[0].mxu0
        %939 = vmatprep.mubr.f32.mxu0 0.0
        %940 = vmatmul.mubr.f32.gmra.mrb[0].mxu0 %v356
        %v941 = vpop.f32.mrb[0].mxu0
        %v942 = vadd.f32 %v641, %v941
        %v943 = vpop.f32.mrb[0].mxu0
        %944 = vmatprep.mubr.f32.mxu0 0.0
        %945 = vmatmul.mubr.f32.gmra.mrb[0].mxu0 %v359
        %v946 = vpop.f32.mrb[0].mxu0
        %v947 = vpop.f32.mrb[0].mxu0
        %948 = vmatprep.mubr.f32.mxu0 0.0
        %949 = vmatmul.mubr.f32.gmra.mrb[0].mxu0 %v362
        %v950 = vpop.f32.mrb[0].mxu0
        %v951 = vadd.f32 %v650, %v950
        %v952 = vpop.f32.mrb[0].mxu0
        %953 = vmatprep.mubr.f32.mxu0 0.0
        %954 = vmatmul.mubr.f32.gmra.mrb[0].mxu0 %v365
        %v955 = vpop.f32.mrb[0].mxu0
        %v956 = vadd.f32 %v655, %v955
        %v957 = vpop.f32.mrb[0].mxu0
        %958 = vmatprep.mubr.f32.mxu0 0.0
        %959 = vmatmul.mubr.f32.gmra.mrb[0].mxu0 %v368
        %v960 = vpop.f32.mrb[0].mxu0
        %v961 = vpop.f32.mrb[0].mxu0
        %962 = vmatprep.mubr.f32.mxu0 0.0
        %963 = vmatmul.mubr.f32.gmra.mrb[0].mxu0 %v371
        %v964 = vpop.f32.mrb[0].mxu0
        %v965 = vadd.f32 %v664, %v964
        %v966 = vpop.f32.mrb[0].mxu0
        %967 = vmatprep.mubr.f32.mxu0 0.0
        %968 = vmatmul.mubr.f32.gmra.mrb[0].mxu0 %v374
        %v969 = vpop.f32.mrb[0].mxu0
        %v970 = vadd.f32 %v669, %v969
        %v971 = vpop.f32.mrb[0].mxu0
        %972 = vmatprep.mubr.f32.mxu0 0.0
        %973 = vmatmul.mubr.f32.gmra.mrb[0].mxu0 %v377
        %v974 = vpop.f32.mrb[0].mxu0
        %v975 = vpop.f32.mrb[0].mxu0
        %976 = vmatprep.mubr.f32.mxu0 0.0
        %977 = vmatmul.mubr.f32.gmra.mrb[0].mxu0 %v380
        %v978 = vpop.f32.mrb[0].mxu0
        %v979 = vadd.f32 %v678, %v978
        %v980 = vpop.f32.mrb[0].mxu0
        %981 = vmatprep.mubr.f32.mxu0 0.0
        %982 = vmatmul.mubr.f32.gmra.mrb[0].mxu0 %v383
        %v983 = vpop.f32.mrb[0].mxu0
        %v984 = vadd.f32 %v683, %v983
        %v985 = vpop.f32.mrb[0].mxu0
        %986 = vmatprep.mubr.f32.mxu0 0.0
        %987 = vmatmul.mubr.f32.gmra.mrb[0].mxu0 %v386
        %v988 = vpop.f32.mrb[0].mxu0
        %v989 = vpop.f32.mrb[0].mxu0
        %990 = vdwg.mxu0
        %v991 = vld [vmem:[%s173 + $0x30] sm:$0xff]
        %v992 = vld [vmem:[%s173 + $0x38] sm:$0xff]
        %v993 = vld [vmem:[%s173 + $0x40] sm:$0xff]
        %v994 = vld [vmem:[%s173 + $0x48] sm:$0xff]
        %v995 = vld [vmem:[%s173 + $0x50] sm:$0xff]
        %v996 = vld [vmem:[%s173 + $0x58] sm:$0xff]
        %v997 = vld [vmem:[%s173 + $0x60] sm:$0xff]
        %v998 = vld [vmem:[%s173 + $0x68] sm:$0xff]
        %v999 = vld [vmem:[%s173 + $0x70] sm:$0xff]
        %v1000 = vld [vmem:[%s173 + $0x78] sm:$0xff]
        %v1001 = vld [vmem:[%s173 + $0x80] sm:$0xff]
        %v1002 = vld [vmem:[%s173 + $0x88] sm:$0xff]
        %v1003 = vld [vmem:[%s173 + $0x90] sm:$0xff]
        %v1004 = vld [vmem:[%s173 + $0x98] sm:$0xff]
        %v1005 = vld [vmem:[%s173 + $0xa0] sm:$0xff]
        %v1006 = vld [vmem:[%s173 + $0xa8] sm:$0xff]
        %v1007 = vld [vmem:[%s173 + $0xb0] sm:$0xff]
        %v1008 = vld [vmem:[%s173 + $0xb8] sm:$0xff]
        %v1009 = vld [vmem:[%s173 + $0xc0] sm:$0xff]
        %v1010 = vld [vmem:[%s173 + $0xc8] sm:$0xff]
        %v1011 = vld [vmem:[%s173 + $0xd0] sm:$0xff]
        %v1012 = vld [vmem:[%s173 + $0xd8] sm:$0xff]
        %v1013 = vld [vmem:[%s173 + $0xe0] sm:$0xff]
        %v1014 = vld [vmem:[%s173 + $0xe8] sm:$0xff]
        %v1015 = vld [vmem:[%s173 + $0xf0] sm:$0xff]
        %v1016 = vld [vmem:[%s173 + $0xf8] sm:$0xff]
        %v1017 = vld [vmem:[%s173 + $0x100] sm:$0xff]
        %v1018 = vld [vmem:[%s173 + $0x108] sm:$0xff]
        %v1019 = vld [vmem:[%s173 + $0x110] sm:$0xff]
        %v1020 = vld [vmem:[%s173 + $0x118] sm:$0xff]
        %v1021 = vld [vmem:[%s173 + $0x120] sm:$0xff]
        %v1022 = vld [vmem:[%s173 + $0x128] sm:$0xff]
        %v1023 = vld [vmem:[%s173 + $0x130] sm:$0xff]
        %v1024 = vld [vmem:[%s173 + $0x138] sm:$0xff]
        %v1025 = vld [vmem:[%s173 + $0x140] sm:$0xff]
        %v1026 = vld [vmem:[%s173 + $0x148] sm:$0xff]
        %v1027 = vld [vmem:[%s173 + $0x150] sm:$0xff]
        %v1028 = vld [vmem:[%s173 + $0x158] sm:$0xff]
        %v1029 = vld [vmem:[%s173 + $0x160] sm:$0xff]
        %v1030 = vld [vmem:[%s173 + $0x168] sm:$0xff]
        %v1031 = vld [vmem:[%s173 + $0x170] sm:$0xff]
        %v1032 = vld [vmem:[%s173 + $0x178] sm:$0xff]
        %v1033 = vld [vmem:[%s173 + $0x180] sm:$0xff]
        %v1034 = vld [vmem:[%s173 + $0x188] sm:$0xff]
        %v1035 = vld [vmem:[%s173 + $0x190] sm:$0xff]
        %v1036 = vld [vmem:[%s173 + $0x198] sm:$0xff]
        %v1037 = vld [vmem:[%s173 + $0x1a0] sm:$0xff]
        %v1038 = vld [vmem:[%s173 + $0x1a8] sm:$0xff]
        %s1039 = scalar_lea.vmem [#allocation5], 24
        %v1040 = vld [vmem:[%s1039] sm:$0xf]
        %v1042 = vsel %vm252, %v991, 0
        %v1045 = vsel %vm252, %v992, 0
        %v1048 = vsel %vm252, %v993, 0
        %v1051 = vsel %vm252, %v994, 0
        %v1054 = vsel %vm252, %v995, 0
        %v1057 = vsel %vm252, %v996, 0
        %v1060 = vsel %vm252, %v997, 0
        %v1063 = vsel %vm252, %v998, 0
        %v1066 = vsel %vm252, %v999, 0
        %v1069 = vsel %vm252, %v1000, 0
        %v1072 = vsel %vm252, %v1001, 0
        %v1075 = vsel %vm252, %v1002, 0
        %v1078 = vsel %vm252, %v1003, 0
        %v1081 = vsel %vm252, %v1004, 0
        %v1084 = vsel %vm252, %v1005, 0
        %v1087 = vsel %vm252, %v1006, 0
        %v1090 = vsel %vm252, %v1007, 0
        %v1093 = vsel %vm252, %v1008, 0
        %v1096 = vsel %vm252, %v1009, 0
        %v1099 = vsel %vm252, %v1010, 0
        %v1102 = vsel %vm252, %v1011, 0
        %v1105 = vsel %vm252, %v1012, 0
        %v1108 = vsel %vm252, %v1013, 0
        %v1111 = vsel %vm252, %v1014, 0
        %v1114 = vsel %vm252, %v1015, 0
        %v1117 = vsel %vm252, %v1016, 0
        %v1120 = vsel %vm252, %v1017, 0
        %v1123 = vsel %vm252, %v1018, 0
        %v1126 = vsel %vm252, %v1019, 0
        %v1129 = vsel %vm252, %v1020, 0
        %v1132 = vsel %vm252, %v1021, 0
        %v1135 = vsel %vm252, %v1022, 0
        %v1138 = vsel %vm252, %v1023, 0
        %v1141 = vsel %vm252, %v1024, 0
        %v1144 = vsel %vm252, %v1025, 0
        %v1147 = vsel %vm252, %v1026, 0
        %v1150 = vsel %vm252, %v1027, 0
        %v1153 = vsel %vm252, %v1028, 0
        %v1156 = vsel %vm252, %v1029, 0
        %v1159 = vsel %vm252, %v1030, 0
        %v1162 = vsel %vm252, %v1031, 0
        %v1165 = vsel %vm252, %v1032, 0
        %v1168 = vsel %vm252, %v1033, 0
        %v1171 = vsel %vm252, %v1034, 0
        %v1174 = vsel %vm252, %v1035, 0
        %v1177 = vsel %vm252, %v1036, 0
        %v1180 = vsel %vm252, %v1037, 0
        %v1183 = vsel %vm252, %v1038, 0
        %v1186 = vsel %vm397, %v1040, 0
        %1188 = vmatprep.subr.mxu0 0.0
        %1189 = vmatpush1.msra.mxu0 %v1186
        %1190 = vmatprep.subr.mxu0 0.0
        %1191 = vmatpush1.msra.mxu0 0.0
        %1192 = vmatprep.subr.mxu0 0.0
        %1193 = vmatpush1.msra.mxu0 0.0
        %1194 = vmatprep.subr.mxu0 0.0
        %1195 = vmatpush1.msra.mxu0 0.0
        %1196 = vmatprep.subr.mxu0 0.0
        %1197 = vmatpush1.msra.mxu0 0.0
        %1198 = vmatprep.subr.mxu0 0.0
        %1199 = vmatpush1.msra.mxu0 0.0
        %1200 = vmatprep.subr.mxu0 0.0
        %1201 = vmatpush1.msra.mxu0 0.0
        %1202 = vmatprep.subr.mxu0 0.0
        %1203 = vmatpush1.msra.mxu0 0.0
        %1204 = vmatprep.subr.mxu0 0.0
        %1205 = vmatpush1.msra.mxu0 0.0
        %1206 = vmatprep.subr.mxu0 0.0
        %1207 = vmatpush1.msra.mxu0 0.0
        %1208 = vmatprep.subr.mxu0 0.0
        %1209 = vmatpush1.msra.mxu0 0.0
        %1210 = vmatprep.subr.mxu0 0.0
        %1211 = vmatpush1.msra.mxu0 0.0
        %1212 = vmatprep.subr.mxu0 0.0
        %1213 = vmatpush1.msra.mxu0 0.0
        %1214 = vmatprep.subr.mxu0 0.0
        %1215 = vmatpush1.msra.mxu0 0.0
        %1216 = vmatprep.subr.mxu0 0.0
        %1217 = vmatpush1.msra.mxu0 0.0
        %1218 = vmatprep.subr.mxu0 0.0
        %1219 = vmatpush1.msra.mxu0 0.0
        %1220 = vmatprep.subr.mxu0 0.0
        %1221 = vmatpush1.msra.mxu0 0.0
        %1222 = vmatprep.subr.mxu0 0.0
        %1223 = vmatpush1.msra.mxu0 0.0
        %1224 = vmatprep.subr.mxu0 0.0
        %1225 = vmatpush1.msra.mxu0 0.0
        %1226 = vmatprep.subr.mxu0 0.0
        %1227 = vmatpush1.msra.mxu0 0.0
        %1228 = vmatprep.subr.mxu0 0.0
        %1229 = vmatpush1.msra.mxu0 0.0
        %1230 = vmatprep.subr.mxu0 0.0
        %1231 = vmatpush1.msra.mxu0 0.0
        %1232 = vmatprep.subr.mxu0 0.0
        %1233 = vmatpush1.msra.mxu0 0.0
        %1234 = vmatprep.subr.mxu0 0.0
        %1235 = vmatpush1.msra.mxu0 0.0
        %1236 = vmatprep.subr.mxu0 0.0
        %1237 = vmatpush1.msra.mxu0 0.0
        %1238 = vmatprep.subr.mxu0 0.0
        %1239 = vmatpush1.msra.mxu0 0.0
        %1240 = vmatprep.subr.mxu0 0.0
        %1241 = vmatpush1.msra.mxu0 0.0
        %1242 = vmatprep.subr.mxu0 0.0
        %1243 = vmatpush1.msra.mxu0 0.0
        %1244 = vmatprep.subr.mxu0 0.0
        %1245 = vmatpush1.msra.mxu0 0.0
        %1246 = vmatprep.subr.mxu0 0.0
        %1247 = vmatpush1.msra.mxu0 0.0
        %1248 = vmatprep.subr.mxu0 0.0
        %1249 = vmatpush1.msra.mxu0 0.0
        %1250 = vmatprep.subr.mxu0 0.0
        %1251 = vmatpush1.msra.mxu0 0.0
        %1252 = vmatprep.mubr.f32.mxu0 0.0
        %1253 = vmatmul.mubr.f32.gmra.mrb[0].mxu0 %v1042
        %v1254 = vpop.f32.mrb[0].mxu0
        %v1255 = vadd.f32 0.0, %v1254
        %v1256 = vpop.f32.mrb[0].mxu0
        %1257 = vmatprep.mubr.f32.mxu0 0.0
        %1258 = vmatmul.mubr.f32.gmra.mrb[0].mxu0 %v1045
        %v1259 = vpop.f32.mrb[0].mxu0
        %v1260 = vadd.f32 0.0, %v1259
        %v1261 = vpop.f32.mrb[0].mxu0
        %1262 = vmatprep.mubr.f32.mxu0 0.0
        %1263 = vmatmul.mubr.f32.gmra.mrb[0].mxu0 %v1048
        %v1264 = vpop.f32.mrb[0].mxu0
        %v1265 = vpop.f32.mrb[0].mxu0
        %1266 = vmatprep.mubr.f32.mxu0 0.0
        %1267 = vmatmul.mubr.f32.gmra.mrb[0].mxu0 %v1051
        %v1268 = vpop.f32.mrb[0].mxu0
        %v1269 = vadd.f32 0.0, %v1268
        %v1270 = vpop.f32.mrb[0].mxu0
        %1271 = vmatprep.mubr.f32.mxu0 0.0
        %1272 = vmatmul.mubr.f32.gmra.mrb[0].mxu0 %v1054
        %v1273 = vpop.f32.mrb[0].mxu0
        %v1274 = vadd.f32 0.0, %v1273
        %v1275 = vpop.f32.mrb[0].mxu0
        %1276 = vmatprep.mubr.f32.mxu0 0.0
        %1277 = vmatmul.mubr.f32.gmra.mrb[0].mxu0 %v1057
        %v1278 = vpop.f32.mrb[0].mxu0
        %v1279 = vpop.f32.mrb[0].mxu0
        %1280 = vmatprep.mubr.f32.mxu0 0.0
        %1281 = vmatmul.mubr.f32.gmra.mrb[0].mxu0 %v1060
        %v1282 = vpop.f32.mrb[0].mxu0
        %v1283 = vadd.f32 0.0, %v1282
        %v1284 = vpop.f32.mrb[0].mxu0
        %1285 = vmatprep.mubr.f32.mxu0 0.0
        %1286 = vmatmul.mubr.f32.gmra.mrb[0].mxu0 %v1063
        %v1287 = vpop.f32.mrb[0].mxu0
        %v1288 = vadd.f32 0.0, %v1287
        %v1289 = vpop.f32.mrb[0].mxu0
        %1290 = vmatprep.mubr.f32.mxu0 0.0
        %1291 = vmatmul.mubr.f32.gmra.mrb[0].mxu0 %v1066
        %v1292 = vpop.f32.mrb[0].mxu0
        %v1293 = vpop.f32.mrb[0].mxu0
        %1294 = vmatprep.mubr.f32.mxu0 0.0
        %1295 = vmatmul.mubr.f32.gmra.mrb[0].mxu0 %v1069
        %v1296 = vpop.f32.mrb[0].mxu0
        %v1297 = vadd.f32 0.0, %v1296
        %v1298 = vpop.f32.mrb[0].mxu0
        %1299 = vmatprep.mubr.f32.mxu0 0.0
        %1300 = vmatmul.mubr.f32.gmra.mrb[0].mxu0 %v1072
        %v1301 = vpop.f32.mrb[0].mxu0
        %v1302 = vadd.f32 0.0, %v1301
        %v1303 = vpop.f32.mrb[0].mxu0
        %1304 = vmatprep.mubr.f32.mxu0 0.0
        %1305 = vmatmul.mubr.f32.gmra.mrb[0].mxu0 %v1075
        %v1306 = vpop.f32.mrb[0].mxu0
        %v1307 = vpop.f32.mrb[0].mxu0
        %1308 = vmatprep.mubr.f32.mxu0 0.0
        %1309 = vmatmul.mubr.f32.gmra.mrb[0].mxu0 %v1078
        %v1310 = vpop.f32.mrb[0].mxu0
        %v1311 = vadd.f32 0.0, %v1310
        %v1312 = vpop.f32.mrb[0].mxu0
        %1313 = vmatprep.mubr.f32.mxu0 0.0
        %1314 = vmatmul.mubr.f32.gmra.mrb[0].mxu0 %v1081
        %v1315 = vpop.f32.mrb[0].mxu0
        %v1316 = vadd.f32 0.0, %v1315
        %v1317 = vpop.f32.mrb[0].mxu0
        %1318 = vmatprep.mubr.f32.mxu0 0.0
        %1319 = vmatmul.mubr.f32.gmra.mrb[0].mxu0 %v1084
        %v1320 = vpop.f32.mrb[0].mxu0
        %v1321 = vpop.f32.mrb[0].mxu0
        %1322 = vmatprep.mubr.f32.mxu0 0.0
        %1323 = vmatmul.mubr.f32.gmra.mrb[0].mxu0 %v1087
        %v1324 = vpop.f32.mrb[0].mxu0
        %v1325 = vadd.f32 0.0, %v1324
        %v1326 = vpop.f32.mrb[0].mxu0
        %1327 = vmatprep.mubr.f32.mxu0 0.0
        %1328 = vmatmul.mubr.f32.gmra.mrb[0].mxu0 %v1090
        %v1329 = vpop.f32.mrb[0].mxu0
        %v1330 = vadd.f32 0.0, %v1329
        %v1331 = vpop.f32.mrb[0].mxu0
        %1332 = vmatprep.mubr.f32.mxu0 0.0
        %1333 = vmatmul.mubr.f32.gmra.mrb[0].mxu0 %v1093
        %v1334 = vpop.f32.mrb[0].mxu0
        %v1335 = vpop.f32.mrb[0].mxu0
        %1336 = vmatprep.mubr.f32.mxu0 0.0
        %1337 = vmatmul.mubr.f32.gmra.mrb[0].mxu0 %v1096
        %v1338 = vpop.f32.mrb[0].mxu0
        %v1339 = vadd.f32 0.0, %v1338
        %v1340 = vpop.f32.mrb[0].mxu0
        %1341 = vmatprep.mubr.f32.mxu0 0.0
        %1342 = vmatmul.mubr.f32.gmra.mrb[0].mxu0 %v1099
        %v1343 = vpop.f32.mrb[0].mxu0
        %v1344 = vadd.f32 0.0, %v1343
        %v1345 = vpop.f32.mrb[0].mxu0
        %1346 = vmatprep.mubr.f32.mxu0 0.0
        %1347 = vmatmul.mubr.f32.gmra.mrb[0].mxu0 %v1102
        %v1348 = vpop.f32.mrb[0].mxu0
        %v1349 = vpop.f32.mrb[0].mxu0
        %1350 = vmatprep.mubr.f32.mxu0 0.0
        %1351 = vmatmul.mubr.f32.gmra.mrb[0].mxu0 %v1105
        %v1352 = vpop.f32.mrb[0].mxu0
        %v1353 = vadd.f32 0.0, %v1352
        %v1354 = vpop.f32.mrb[0].mxu0
        %1355 = vmatprep.mubr.f32.mxu0 0.0
        %1356 = vmatmul.mubr.f32.gmra.mrb[0].mxu0 %v1108
        %v1357 = vpop.f32.mrb[0].mxu0
        %v1358 = vadd.f32 0.0, %v1357
        %v1359 = vpop.f32.mrb[0].mxu0
        %1360 = vmatprep.mubr.f32.mxu0 0.0
        %1361 = vmatmul.mubr.f32.gmra.mrb[0].mxu0 %v1111
        %v1362 = vpop.f32.mrb[0].mxu0
        %v1363 = vpop.f32.mrb[0].mxu0
        %1364 = vmatprep.mubr.f32.mxu0 0.0
        %1365 = vmatmul.mubr.f32.gmra.mrb[0].mxu0 %v1114
        %v1366 = vpop.f32.mrb[0].mxu0
        %v1367 = vadd.f32 0.0, %v1366
        %v1368 = vpop.f32.mrb[0].mxu0
        %1369 = vmatprep.mubr.f32.mxu0 0.0
        %1370 = vmatmul.mubr.f32.gmra.mrb[0].mxu0 %v1117
        %v1371 = vpop.f32.mrb[0].mxu0
        %v1372 = vadd.f32 0.0, %v1371
        %v1373 = vpop.f32.mrb[0].mxu0
        %1374 = vmatprep.mubr.f32.mxu0 0.0
        %1375 = vmatmul.mubr.f32.gmra.mrb[0].mxu0 %v1120
        %v1376 = vpop.f32.mrb[0].mxu0
        %v1377 = vpop.f32.mrb[0].mxu0
        %1378 = vmatprep.mubr.f32.mxu0 0.0
        %1379 = vmatmul.mubr.f32.gmra.mrb[0].mxu0 %v1123
        %v1380 = vpop.f32.mrb[0].mxu0
        %v1381 = vadd.f32 0.0, %v1380
        %v1382 = vpop.f32.mrb[0].mxu0
        %1383 = vmatprep.mubr.f32.mxu0 0.0
        %1384 = vmatmul.mubr.f32.gmra.mrb[0].mxu0 %v1126
        %v1385 = vpop.f32.mrb[0].mxu0
        %v1386 = vadd.f32 0.0, %v1385
        %v1387 = vpop.f32.mrb[0].mxu0
        %1388 = vmatprep.mubr.f32.mxu0 0.0
        %1389 = vmatmul.mubr.f32.gmra.mrb[0].mxu0 %v1129
        %v1390 = vpop.f32.mrb[0].mxu0
        %v1391 = vpop.f32.mrb[0].mxu0
        %1392 = vmatprep.mubr.f32.mxu0 0.0
        %1393 = vmatmul.mubr.f32.gmra.mrb[0].mxu0 %v1132
        %v1394 = vpop.f32.mrb[0].mxu0
        %v1395 = vadd.f32 0.0, %v1394
        %v1396 = vpop.f32.mrb[0].mxu0
        %1397 = vmatprep.mubr.f32.mxu0 0.0
        %1398 = vmatmul.mubr.f32.gmra.mrb[0].mxu0 %v1135
        %v1399 = vpop.f32.mrb[0].mxu0
        %v1400 = vadd.f32 0.0, %v1399
        %v1401 = vpop.f32.mrb[0].mxu0
        %1402 = vmatprep.mubr.f32.mxu0 0.0
        %1403 = vmatmul.mubr.f32.gmra.mrb[0].mxu0 %v1138
        %v1404 = vpop.f32.mrb[0].mxu0
        %v1405 = vpop.f32.mrb[0].mxu0
        %1406 = vmatprep.mubr.f32.mxu0 0.0
        %1407 = vmatmul.mubr.f32.gmra.mrb[0].mxu0 %v1141
        %v1408 = vpop.f32.mrb[0].mxu0
        %v1409 = vadd.f32 0.0, %v1408
        %v1410 = vpop.f32.mrb[0].mxu0
        %1411 = vmatprep.mubr.f32.mxu0 0.0
        %1412 = vmatmul.mubr.f32.gmra.mrb[0].mxu0 %v1144
        %v1413 = vpop.f32.mrb[0].mxu0
        %v1414 = vadd.f32 0.0, %v1413
        %v1415 = vpop.f32.mrb[0].mxu0
        %1416 = vmatprep.mubr.f32.mxu0 0.0
        %1417 = vmatmul.mubr.f32.gmra.mrb[0].mxu0 %v1147
        %v1418 = vpop.f32.mrb[0].mxu0
        %v1419 = vpop.f32.mrb[0].mxu0
        %1420 = vmatprep.mubr.f32.mxu0 0.0
        %1421 = vmatmul.mubr.f32.gmra.mrb[0].mxu0 %v1150
        %v1422 = vpop.f32.mrb[0].mxu0
        %v1423 = vadd.f32 0.0, %v1422
        %v1424 = vpop.f32.mrb[0].mxu0
        %1425 = vmatprep.mubr.f32.mxu0 0.0
        %1426 = vmatmul.mubr.f32.gmra.mrb[0].mxu0 %v1153
        %v1427 = vpop.f32.mrb[0].mxu0
        %v1428 = vadd.f32 0.0, %v1427
        %v1429 = vpop.f32.mrb[0].mxu0
        %1430 = vmatprep.mubr.f32.mxu0 0.0
        %1431 = vmatmul.mubr.f32.gmra.mrb[0].mxu0 %v1156
        %v1432 = vpop.f32.mrb[0].mxu0
        %v1433 = vpop.f32.mrb[0].mxu0
        %1434 = vmatprep.mubr.f32.mxu0 0.0
        %1435 = vmatmul.mubr.f32.gmra.mrb[0].mxu0 %v1159
        %v1436 = vpop.f32.mrb[0].mxu0
        %v1437 = vadd.f32 0.0, %v1436
        %v1438 = vpop.f32.mrb[0].mxu0
        %1439 = vmatprep.mubr.f32.mxu0 0.0
        %1440 = vmatmul.mubr.f32.gmra.mrb[0].mxu0 %v1162
        %v1441 = vpop.f32.mrb[0].mxu0
        %v1442 = vadd.f32 0.0, %v1441
        %v1443 = vpop.f32.mrb[0].mxu0
        %1444 = vmatprep.mubr.f32.mxu0 0.0
        %1445 = vmatmul.mubr.f32.gmra.mrb[0].mxu0 %v1165
        %v1446 = vpop.f32.mrb[0].mxu0
        %v1447 = vpop.f32.mrb[0].mxu0
        %1448 = vmatprep.mubr.f32.mxu0 0.0
        %1449 = vmatmul.mubr.f32.gmra.mrb[0].mxu0 %v1168
        %v1450 = vpop.f32.mrb[0].mxu0
        %v1451 = vadd.f32 0.0, %v1450
        %v1452 = vpop.f32.mrb[0].mxu0
        %1453 = vmatprep.mubr.f32.mxu0 0.0
        %1454 = vmatmul.mubr.f32.gmra.mrb[0].mxu0 %v1171
        %v1455 = vpop.f32.mrb[0].mxu0
        %v1456 = vadd.f32 0.0, %v1455
        %v1457 = vpop.f32.mrb[0].mxu0
        %1458 = vmatprep.mubr.f32.mxu0 0.0
        %1459 = vmatmul.mubr.f32.gmra.mrb[0].mxu0 %v1174
        %v1460 = vpop.f32.mrb[0].mxu0
        %v1461 = vpop.f32.mrb[0].mxu0
        %1462 = vmatprep.mubr.f32.mxu0 0.0
        %1463 = vmatmul.mubr.f32.gmra.mrb[0].mxu0 %v1177
        %v1464 = vpop.f32.mrb[0].mxu0
        %v1465 = vadd.f32 0.0, %v1464
        %v1466 = vpop.f32.mrb[0].mxu0
        %1467 = vmatprep.mubr.f32.mxu0 0.0
        %1468 = vmatmul.mubr.f32.gmra.mrb[0].mxu0 %v1180
        %v1469 = vpop.f32.mrb[0].mxu0
        %v1470 = vadd.f32 0.0, %v1469
        %v1471 = vpop.f32.mrb[0].mxu0
        %1472 = vmatprep.mubr.f32.mxu0 0.0
        %1473 = vmatmul.mubr.f32.gmra.mrb[0].mxu0 %v1183
        %v1474 = vpop.f32.mrb[0].mxu0
        %v1475 = vpop.f32.mrb[0].mxu0
        %1476 = vdwg.mxu0
        %v1477 = vadd.f32 %v769, %v1255
        %v1478 = vadd.f32 %v774, %v1260
        %v1479 = vadd.f32 %v783, %v1269
        %v1480 = vadd.f32 %v788, %v1274
        %v1481 = vadd.f32 %v797, %v1283
        %v1482 = vadd.f32 %v802, %v1288
        %v1483 = vadd.f32 %v811, %v1297
        %v1484 = vadd.f32 %v816, %v1302
        %v1485 = vadd.f32 %v825, %v1311
        %v1486 = vadd.f32 %v830, %v1316
        %v1487 = vadd.f32 %v839, %v1325
        %v1488 = vadd.f32 %v844, %v1330
        %v1489 = vadd.f32 %v853, %v1339
        %v1490 = vadd.f32 %v858, %v1344
        %v1491 = vadd.f32 %v867, %v1353
        %v1492 = vadd.f32 %v872, %v1358
        %v1493 = vadd.f32 %v881, %v1367
        %v1494 = vadd.f32 %v886, %v1372
        %v1495 = vadd.f32 %v895, %v1381
        %v1496 = vadd.f32 %v900, %v1386
        %v1497 = vadd.f32 %v909, %v1395
        %v1498 = vadd.f32 %v914, %v1400
        %v1499 = vadd.f32 %v923, %v1409
        %v1500 = vadd.f32 %v928, %v1414
        %v1501 = vadd.f32 %v937, %v1423
        %v1502 = vadd.f32 %v942, %v1428
        %v1503 = vadd.f32 %v951, %v1437
        %v1504 = vadd.f32 %v956, %v1442
        %v1505 = vadd.f32 %v965, %v1451
        %v1506 = vadd.f32 %v970, %v1456
        %v1507 = vadd.f32 %v979, %v1465
        %v1508 = vadd.f32 %v984, %v1470
        %s1509 = scalar_lea.vmem [#allocation5], 4
        %v1510 = vld [vmem:[%s1509] sm:$0xf]
        %s1511 = scalar_lea.vmem [#allocation5], 16
        %v1512 = vld [vmem:[%s1511] sm:$0xf]
        %v1514 = vsel %vm397, %v1512, 0
        %1516 = vmatprep.subr.mxu0 0.0
        %1517 = vmatpush1.msra.mxu0 %v1514
        %1518 = vmatprep.subr.mxu0 0.0
        %1519 = vmatpush1.msra.mxu0 0.0
        %1520 = vmatprep.subr.mxu0 0.0
        %1521 = vmatpush1.msra.mxu0 0.0
        %1522 = vmatprep.subr.mxu0 0.0
        %1523 = vmatpush1.msra.mxu0 0.0
        %1524 = vmatprep.subr.mxu0 0.0
        %1525 = vmatpush1.msra.mxu0 0.0
        %1526 = vmatprep.subr.mxu0 0.0
        %1527 = vmatpush1.msra.mxu0 0.0
        %1528 = vmatprep.subr.mxu0 0.0
        %1529 = vmatpush1.msra.mxu0 0.0
        %1530 = vmatprep.subr.mxu0 0.0
        %1531 = vmatpush1.msra.mxu0 0.0
        %1532 = vmatprep.subr.mxu0 0.0
        %1533 = vmatpush1.msra.mxu0 0.0
        %1534 = vmatprep.subr.mxu0 0.0
        %1535 = vmatpush1.msra.mxu0 0.0
        %1536 = vmatprep.subr.mxu0 0.0
        %1537 = vmatpush1.msra.mxu0 0.0
        %1538 = vmatprep.subr.mxu0 0.0
        %1539 = vmatpush1.msra.mxu0 0.0
        %1540 = vmatprep.subr.mxu0 0.0
        %1541 = vmatpush1.msra.mxu0 0.0
        %1542 = vmatprep.subr.mxu0 0.0
        %1543 = vmatpush1.msra.mxu0 0.0
        %1544 = vmatprep.subr.mxu0 0.0
        %1545 = vmatpush1.msra.mxu0 0.0
        %1546 = vmatprep.subr.mxu0 0.0
        %1547 = vmatpush1.msra.mxu0 0.0
        %1548 = vmatprep.subr.mxu0 0.0
        %1549 = vmatpush1.msra.mxu0 0.0
        %1550 = vmatprep.subr.mxu0 0.0
        %1551 = vmatpush1.msra.mxu0 0.0
        %1552 = vmatprep.subr.mxu0 0.0
        %1553 = vmatpush1.msra.mxu0 0.0
        %1554 = vmatprep.subr.mxu0 0.0
        %1555 = vmatpush1.msra.mxu0 0.0
        %1556 = vmatprep.subr.mxu0 0.0
        %1557 = vmatpush1.msra.mxu0 0.0
        %1558 = vmatprep.subr.mxu0 0.0
        %1559 = vmatpush1.msra.mxu0 0.0
        %1560 = vmatprep.subr.mxu0 0.0
        %1561 = vmatpush1.msra.mxu0 0.0
        %1562 = vmatprep.subr.mxu0 0.0
        %1563 = vmatpush1.msra.mxu0 0.0
        %1564 = vmatprep.subr.mxu0 0.0
        %1565 = vmatpush1.msra.mxu0 0.0
        %1566 = vmatprep.subr.mxu0 0.0
        %1567 = vmatpush1.msra.mxu0 0.0
        %1568 = vmatprep.subr.mxu0 0.0
        %1569 = vmatpush1.msra.mxu0 0.0
        %1570 = vmatprep.subr.mxu0 0.0
        %1571 = vmatpush1.msra.mxu0 0.0
        %1572 = vmatprep.subr.mxu0 0.0
        %1573 = vmatpush1.msra.mxu0 0.0
        %1574 = vmatprep.subr.mxu0 0.0
        %1575 = vmatpush1.msra.mxu0 0.0
        %1576 = vmatprep.subr.mxu0 0.0
        %1577 = vmatpush1.msra.mxu0 0.0
        %1578 = vmatprep.subr.mxu0 0.0
        %1579 = vmatpush1.msra.mxu0 0.0
        %1580 = vmatprep.mubr.f32.mxu0 0.0
        %1581 = vmatmul.mubr.f32.gmra.mrb[0].mxu0 %v254
        %v1582 = vpop.f32.mrb[0].mxu0
        %v1583 = vadd.f32 0.0, %v1582
        %v1584 = vpop.f32.mrb[0].mxu0
        %1585 = vmatprep.mubr.f32.mxu0 0.0
        %1586 = vmatmul.mubr.f32.gmra.mrb[0].mxu0 %v257
        %v1587 = vpop.f32.mrb[0].mxu0
        %v1588 = vadd.f32 0.0, %v1587
        %v1589 = vpop.f32.mrb[0].mxu0
        %1590 = vmatprep.mubr.f32.mxu0 0.0
        %1591 = vmatmul.mubr.f32.gmra.mrb[0].mxu0 %v260
        %v1592 = vpop.f32.mrb[0].mxu0
        %v1593 = vadd.f32 0.0, %v1592
        %v1594 = vpop.f32.mrb[0].mxu0
        %1595 = vmatprep.mubr.f32.mxu0 0.0
        %1596 = vmatmul.mubr.f32.gmra.mrb[0].mxu0 %v263
        %v1597 = vpop.f32.mrb[0].mxu0
        %v1598 = vadd.f32 0.0, %v1597
        %v1599 = vpop.f32.mrb[0].mxu0
        %1600 = vmatprep.mubr.f32.mxu0 0.0
        %1601 = vmatmul.mubr.f32.gmra.mrb[0].mxu0 %v266
        %v1602 = vpop.f32.mrb[0].mxu0
        %v1603 = vadd.f32 0.0, %v1602
        %v1604 = vpop.f32.mrb[0].mxu0
        %1605 = vmatprep.mubr.f32.mxu0 0.0
        %1606 = vmatmul.mubr.f32.gmra.mrb[0].mxu0 %v269
        %v1607 = vpop.f32.mrb[0].mxu0
        %v1608 = vadd.f32 0.0, %v1607
        %v1609 = vpop.f32.mrb[0].mxu0
        %1610 = vmatprep.mubr.f32.mxu0 0.0
        %1611 = vmatmul.mubr.f32.gmra.mrb[0].mxu0 %v272
        %v1612 = vpop.f32.mrb[0].mxu0
        %v1613 = vadd.f32 0.0, %v1612
        %v1614 = vpop.f32.mrb[0].mxu0
        %1615 = vmatprep.mubr.f32.mxu0 0.0
        %1616 = vmatmul.mubr.f32.gmra.mrb[0].mxu0 %v275
        %v1617 = vpop.f32.mrb[0].mxu0
        %v1618 = vadd.f32 0.0, %v1617
        %v1619 = vpop.f32.mrb[0].mxu0
        %1620 = vmatprep.mubr.f32.mxu0 0.0
        %1621 = vmatmul.mubr.f32.gmra.mrb[0].mxu0 %v278
        %v1622 = vpop.f32.mrb[0].mxu0
        %v1623 = vadd.f32 0.0, %v1622
        %v1624 = vpop.f32.mrb[0].mxu0
        %1625 = vmatprep.mubr.f32.mxu0 0.0
        %1626 = vmatmul.mubr.f32.gmra.mrb[0].mxu0 %v281
        %v1627 = vpop.f32.mrb[0].mxu0
        %v1628 = vadd.f32 0.0, %v1627
        %v1629 = vpop.f32.mrb[0].mxu0
        %1630 = vmatprep.mubr.f32.mxu0 0.0
        %1631 = vmatmul.mubr.f32.gmra.mrb[0].mxu0 %v284
        %v1632 = vpop.f32.mrb[0].mxu0
        %v1633 = vadd.f32 0.0, %v1632
        %v1634 = vpop.f32.mrb[0].mxu0
        %1635 = vmatprep.mubr.f32.mxu0 0.0
        %1636 = vmatmul.mubr.f32.gmra.mrb[0].mxu0 %v287
        %v1637 = vpop.f32.mrb[0].mxu0
        %v1638 = vadd.f32 0.0, %v1637
        %v1639 = vpop.f32.mrb[0].mxu0
        %1640 = vmatprep.mubr.f32.mxu0 0.0
        %1641 = vmatmul.mubr.f32.gmra.mrb[0].mxu0 %v290
        %v1642 = vpop.f32.mrb[0].mxu0
        %v1643 = vadd.f32 0.0, %v1642
        %v1644 = vpop.f32.mrb[0].mxu0
        %1645 = vmatprep.mubr.f32.mxu0 0.0
        %1646 = vmatmul.mubr.f32.gmra.mrb[0].mxu0 %v293
        %v1647 = vpop.f32.mrb[0].mxu0
        %v1648 = vadd.f32 0.0, %v1647
        %v1649 = vpop.f32.mrb[0].mxu0
        %1650 = vmatprep.mubr.f32.mxu0 0.0
        %1651 = vmatmul.mubr.f32.gmra.mrb[0].mxu0 %v296
        %v1652 = vpop.f32.mrb[0].mxu0
        %v1653 = vadd.f32 0.0, %v1652
        %v1654 = vpop.f32.mrb[0].mxu0
        %1655 = vmatprep.mubr.f32.mxu0 0.0
        %1656 = vmatmul.mubr.f32.gmra.mrb[0].mxu0 %v299
        %v1657 = vpop.f32.mrb[0].mxu0
        %v1658 = vadd.f32 0.0, %v1657
        %v1659 = vpop.f32.mrb[0].mxu0
        %1660 = vmatprep.mubr.f32.mxu0 0.0
        %1661 = vmatmul.mubr.f32.gmra.mrb[0].mxu0 %v302
        %v1662 = vpop.f32.mrb[0].mxu0
        %v1663 = vadd.f32 0.0, %v1662
        %v1664 = vpop.f32.mrb[0].mxu0
        %1665 = vmatprep.mubr.f32.mxu0 0.0
        %1666 = vmatmul.mubr.f32.gmra.mrb[0].mxu0 %v305
        %v1667 = vpop.f32.mrb[0].mxu0
        %v1668 = vadd.f32 0.0, %v1667
        %v1669 = vpop.f32.mrb[0].mxu0
        %1670 = vmatprep.mubr.f32.mxu0 0.0
        %1671 = vmatmul.mubr.f32.gmra.mrb[0].mxu0 %v308
        %v1672 = vpop.f32.mrb[0].mxu0
        %v1673 = vadd.f32 0.0, %v1672
        %v1674 = vpop.f32.mrb[0].mxu0
        %1675 = vmatprep.mubr.f32.mxu0 0.0
        %1676 = vmatmul.mubr.f32.gmra.mrb[0].mxu0 %v311
        %v1677 = vpop.f32.mrb[0].mxu0
        %v1678 = vadd.f32 0.0, %v1677
        %v1679 = vpop.f32.mrb[0].mxu0
        %1680 = vmatprep.mubr.f32.mxu0 0.0
        %1681 = vmatmul.mubr.f32.gmra.mrb[0].mxu0 %v314
        %v1682 = vpop.f32.mrb[0].mxu0
        %v1683 = vadd.f32 0.0, %v1682
        %v1684 = vpop.f32.mrb[0].mxu0
        %1685 = vmatprep.mubr.f32.mxu0 0.0
        %1686 = vmatmul.mubr.f32.gmra.mrb[0].mxu0 %v317
        %v1687 = vpop.f32.mrb[0].mxu0
        %v1688 = vadd.f32 0.0, %v1687
        %v1689 = vpop.f32.mrb[0].mxu0
        %1690 = vmatprep.mubr.f32.mxu0 0.0
        %1691 = vmatmul.mubr.f32.gmra.mrb[0].mxu0 %v320
        %v1692 = vpop.f32.mrb[0].mxu0
        %v1693 = vadd.f32 0.0, %v1692
        %v1694 = vpop.f32.mrb[0].mxu0
        %1695 = vmatprep.mubr.f32.mxu0 0.0
        %1696 = vmatmul.mubr.f32.gmra.mrb[0].mxu0 %v323
        %v1697 = vpop.f32.mrb[0].mxu0
        %v1698 = vadd.f32 0.0, %v1697
        %v1699 = vpop.f32.mrb[0].mxu0
        %1700 = vmatprep.mubr.f32.mxu0 0.0
        %1701 = vmatmul.mubr.f32.gmra.mrb[0].mxu0 %v326
        %v1702 = vpop.f32.mrb[0].mxu0
        %v1703 = vadd.f32 0.0, %v1702
        %v1704 = vpop.f32.mrb[0].mxu0
        %1705 = vmatprep.mubr.f32.mxu0 0.0
        %1706 = vmatmul.mubr.f32.gmra.mrb[0].mxu0 %v329
        %v1707 = vpop.f32.mrb[0].mxu0
        %v1708 = vadd.f32 0.0, %v1707
        %v1709 = vpop.f32.mrb[0].mxu0
        %1710 = vmatprep.mubr.f32.mxu0 0.0
        %1711 = vmatmul.mubr.f32.gmra.mrb[0].mxu0 %v332
        %v1712 = vpop.f32.mrb[0].mxu0
        %v1713 = vadd.f32 0.0, %v1712
        %v1714 = vpop.f32.mrb[0].mxu0
        %1715 = vmatprep.mubr.f32.mxu0 0.0
        %1716 = vmatmul.mubr.f32.gmra.mrb[0].mxu0 %v335
        %v1717 = vpop.f32.mrb[0].mxu0
        %v1718 = vadd.f32 0.0, %v1717
        %v1719 = vpop.f32.mrb[0].mxu0
        %1720 = vmatprep.mubr.f32.mxu0 0.0
        %1721 = vmatmul.mubr.f32.gmra.mrb[0].mxu0 %v338
        %v1722 = vpop.f32.mrb[0].mxu0
        %v1723 = vadd.f32 0.0, %v1722
        %v1724 = vpop.f32.mrb[0].mxu0
        %1725 = vmatprep.mubr.f32.mxu0 0.0
        %1726 = vmatmul.mubr.f32.gmra.mrb[0].mxu0 %v341
        %v1727 = vpop.f32.mrb[0].mxu0
        %v1728 = vadd.f32 0.0, %v1727
        %v1729 = vpop.f32.mrb[0].mxu0
        %1730 = vmatprep.mubr.f32.mxu0 0.0
        %1731 = vmatmul.mubr.f32.gmra.mrb[0].mxu0 %v344
        %v1732 = vpop.f32.mrb[0].mxu0
        %v1733 = vadd.f32 0.0, %v1732
        %v1734 = vpop.f32.mrb[0].mxu0
        %1735 = vmatprep.mubr.f32.mxu0 0.0
        %1736 = vmatmul.mubr.f32.gmra.mrb[0].mxu0 %v347
        %v1737 = vpop.f32.mrb[0].mxu0
        %v1738 = vadd.f32 0.0, %v1737
        %v1739 = vpop.f32.mrb[0].mxu0
        %1740 = vmatprep.mubr.f32.mxu0 0.0
        %1741 = vmatmul.mubr.f32.gmra.mrb[0].mxu0 %v350
        %v1742 = vpop.f32.mrb[0].mxu0
        %v1743 = vadd.f32 0.0, %v1742
        %v1744 = vpop.f32.mrb[0].mxu0
        %1745 = vmatprep.mubr.f32.mxu0 0.0
        %1746 = vmatmul.mubr.f32.gmra.mrb[0].mxu0 %v353
        %v1747 = vpop.f32.mrb[0].mxu0
        %v1748 = vadd.f32 0.0, %v1747
        %v1749 = vpop.f32.mrb[0].mxu0
        %1750 = vmatprep.mubr.f32.mxu0 0.0
        %1751 = vmatmul.mubr.f32.gmra.mrb[0].mxu0 %v356
        %v1752 = vpop.f32.mrb[0].mxu0
        %v1753 = vadd.f32 0.0, %v1752
        %v1754 = vpop.f32.mrb[0].mxu0
        %1755 = vmatprep.mubr.f32.mxu0 0.0
        %1756 = vmatmul.mubr.f32.gmra.mrb[0].mxu0 %v359
        %v1757 = vpop.f32.mrb[0].mxu0
        %v1758 = vadd.f32 0.0, %v1757
        %v1759 = vpop.f32.mrb[0].mxu0
        %1760 = vmatprep.mubr.f32.mxu0 0.0
        %1761 = vmatmul.mubr.f32.gmra.mrb[0].mxu0 %v362
        %v1762 = vpop.f32.mrb[0].mxu0
        %v1763 = vadd.f32 0.0, %v1762
        %v1764 = vpop.f32.mrb[0].mxu0
        %1765 = vmatprep.mubr.f32.mxu0 0.0
        %1766 = vmatmul.mubr.f32.gmra.mrb[0].mxu0 %v365
        %v1767 = vpop.f32.mrb[0].mxu0
        %v1768 = vadd.f32 0.0, %v1767
        %v1769 = vpop.f32.mrb[0].mxu0
        %1770 = vmatprep.mubr.f32.mxu0 0.0
        %1771 = vmatmul.mubr.f32.gmra.mrb[0].mxu0 %v368
        %v1772 = vpop.f32.mrb[0].mxu0
        %v1773 = vadd.f32 0.0, %v1772
        %v1774 = vpop.f32.mrb[0].mxu0
        %1775 = vmatprep.mubr.f32.mxu0 0.0
        %1776 = vmatmul.mubr.f32.gmra.mrb[0].mxu0 %v371
        %v1777 = vpop.f32.mrb[0].mxu0
        %v1778 = vadd.f32 0.0, %v1777
        %v1779 = vpop.f32.mrb[0].mxu0
        %1780 = vmatprep.mubr.f32.mxu0 0.0
        %1781 = vmatmul.mubr.f32.gmra.mrb[0].mxu0 %v374
        %v1782 = vpop.f32.mrb[0].mxu0
        %v1783 = vadd.f32 0.0, %v1782
        %v1784 = vpop.f32.mrb[0].mxu0
        %1785 = vmatprep.mubr.f32.mxu0 0.0
        %1786 = vmatmul.mubr.f32.gmra.mrb[0].mxu0 %v377
        %v1787 = vpop.f32.mrb[0].mxu0
        %v1788 = vadd.f32 0.0, %v1787
        %v1789 = vpop.f32.mrb[0].mxu0
        %1790 = vmatprep.mubr.f32.mxu0 0.0
        %1791 = vmatmul.mubr.f32.gmra.mrb[0].mxu0 %v380
        %v1792 = vpop.f32.mrb[0].mxu0
        %v1793 = vadd.f32 0.0, %v1792
        %v1794 = vpop.f32.mrb[0].mxu0
        %1795 = vmatprep.mubr.f32.mxu0 0.0
        %1796 = vmatmul.mubr.f32.gmra.mrb[0].mxu0 %v383
        %v1797 = vpop.f32.mrb[0].mxu0
        %v1798 = vadd.f32 0.0, %v1797
        %v1799 = vpop.f32.mrb[0].mxu0
        %1800 = vmatprep.mubr.f32.mxu0 0.0
        %1801 = vmatmul.mubr.f32.gmra.mrb[0].mxu0 %v386
        %v1802 = vpop.f32.mrb[0].mxu0
        %v1803 = vadd.f32 0.0, %v1802
        %v1804 = vpop.f32.mrb[0].mxu0
        %1805 = vmatprep.mubr.f32.mxu0 0.0
        %1806 = vmatmul.mubr.f32.gmra.mrb[0].mxu0 %v389
        %v1807 = vpop.f32.mrb[0].mxu0
        %v1808 = vadd.f32 0.0, %v1807
        %v1809 = vpop.f32.mrb[0].mxu0
        %1810 = vmatprep.mubr.f32.mxu0 0.0
        %1811 = vmatmul.mubr.f32.gmra.mrb[0].mxu0 %v392
        %v1812 = vpop.f32.mrb[0].mxu0
        %v1813 = vadd.f32 0.0, %v1812
        %v1814 = vpop.f32.mrb[0].mxu0
        %1815 = vmatprep.mubr.f32.mxu0 0.0
        %1816 = vmatmul.mubr.f32.gmra.mrb[0].mxu0 %v395
        %v1817 = vpop.f32.mrb[0].mxu0
        %v1818 = vadd.f32 0.0, %v1817
        %v1819 = vpop.f32.mrb[0].mxu0
        %1820 = vdwg.mxu0
        %v1822 = vsel %vm397, %v1510, 0
        %1824 = vmatprep.subr.mxu0 0.0
        %1825 = vmatpush1.msra.mxu0 %v1822
        %1826 = vmatprep.subr.mxu0 0.0
        %1827 = vmatpush1.msra.mxu0 0.0
        %1828 = vmatprep.subr.mxu0 0.0
        %1829 = vmatpush1.msra.mxu0 0.0
        %1830 = vmatprep.subr.mxu0 0.0
        %1831 = vmatpush1.msra.mxu0 0.0
        %1832 = vmatprep.subr.mxu0 0.0
        %1833 = vmatpush1.msra.mxu0 0.0
        %1834 = vmatprep.subr.mxu0 0.0
        %1835 = vmatpush1.msra.mxu0 0.0
        %1836 = vmatprep.subr.mxu0 0.0
        %1837 = vmatpush1.msra.mxu0 0.0
        %1838 = vmatprep.subr.mxu0 0.0
        %1839 = vmatpush1.msra.mxu0 0.0
        %1840 = vmatprep.subr.mxu0 0.0
        %1841 = vmatpush1.msra.mxu0 0.0
        %1842 = vmatprep.subr.mxu0 0.0
        %1843 = vmatpush1.msra.mxu0 0.0
        %1844 = vmatprep.subr.mxu0 0.0
        %1845 = vmatpush1.msra.mxu0 0.0
        %1846 = vmatprep.subr.mxu0 0.0
        %1847 = vmatpush1.msra.mxu0 0.0
        %1848 = vmatprep.subr.mxu0 0.0
        %1849 = vmatpush1.msra.mxu0 0.0
        %1850 = vmatprep.subr.mxu0 0.0
        %1851 = vmatpush1.msra.mxu0 0.0
        %1852 = vmatprep.subr.mxu0 0.0
        %1853 = vmatpush1.msra.mxu0 0.0
        %1854 = vmatprep.subr.mxu0 0.0
        %1855 = vmatpush1.msra.mxu0 0.0
        %1856 = vmatprep.subr.mxu0 0.0
        %1857 = vmatpush1.msra.mxu0 0.0
        %1858 = vmatprep.subr.mxu0 0.0
        %1859 = vmatpush1.msra.mxu0 0.0
        %1860 = vmatprep.subr.mxu0 0.0
        %1861 = vmatpush1.msra.mxu0 0.0
        %1862 = vmatprep.subr.mxu0 0.0
        %1863 = vmatpush1.msra.mxu0 0.0
        %1864 = vmatprep.subr.mxu0 0.0
        %1865 = vmatpush1.msra.mxu0 0.0
        %1866 = vmatprep.subr.mxu0 0.0
        %1867 = vmatpush1.msra.mxu0 0.0
        %1868 = vmatprep.subr.mxu0 0.0
        %1869 = vmatpush1.msra.mxu0 0.0
        %1870 = vmatprep.subr.mxu0 0.0
        %1871 = vmatpush1.msra.mxu0 0.0
        %1872 = vmatprep.subr.mxu0 0.0
        %1873 = vmatpush1.msra.mxu0 0.0
        %1874 = vmatprep.subr.mxu0 0.0
        %1875 = vmatpush1.msra.mxu0 0.0
        %1876 = vmatprep.subr.mxu0 0.0
        %1877 = vmatpush1.msra.mxu0 0.0
        %1878 = vmatprep.subr.mxu0 0.0
        %1879 = vmatpush1.msra.mxu0 0.0
        %1880 = vmatprep.subr.mxu0 0.0
        %1881 = vmatpush1.msra.mxu0 0.0
        %1882 = vmatprep.subr.mxu0 0.0
        %1883 = vmatpush1.msra.mxu0 0.0
        %1884 = vmatprep.subr.mxu0 0.0
        %1885 = vmatpush1.msra.mxu0 0.0
        %1886 = vmatprep.subr.mxu0 0.0
        %1887 = vmatpush1.msra.mxu0 0.0
        %1888 = vmatprep.mubr.f32.mxu0 0.0
        %1889 = vmatmul.mubr.f32.gmra.mrb[0].mxu0 %v691
        %v1890 = vpop.f32.mrb[0].mxu0
        %v1891 = vadd.f32 %v1583, %v1890
        %v1892 = vpop.f32.mrb[0].mxu0
        %1893 = vmatprep.mubr.f32.mxu0 0.0
        %1894 = vmatmul.mubr.f32.gmra.mrb[0].mxu0 %v694
        %v1895 = vpop.f32.mrb[0].mxu0
        %v1896 = vadd.f32 %v1588, %v1895
        %v1897 = vpop.f32.mrb[0].mxu0
        %1898 = vmatprep.mubr.f32.mxu0 0.0
        %1899 = vmatmul.mubr.f32.gmra.mrb[0].mxu0 %v697
        %v1900 = vpop.f32.mrb[0].mxu0
        %v1901 = vadd.f32 %v1593, %v1900
        %v1902 = vpop.f32.mrb[0].mxu0
        %1903 = vmatprep.mubr.f32.mxu0 0.0
        %1904 = vmatmul.mubr.f32.gmra.mrb[0].mxu0 %v254
        %v1905 = vpop.f32.mrb[0].mxu0
        %v1906 = vadd.f32 %v1598, %v1905
        %v1907 = vpop.f32.mrb[0].mxu0
        %1908 = vmatprep.mubr.f32.mxu0 0.0
        %1909 = vmatmul.mubr.f32.gmra.mrb[0].mxu0 %v257
        %v1910 = vpop.f32.mrb[0].mxu0
        %v1911 = vadd.f32 %v1603, %v1910
        %v1912 = vpop.f32.mrb[0].mxu0
        %1913 = vmatprep.mubr.f32.mxu0 0.0
        %1914 = vmatmul.mubr.f32.gmra.mrb[0].mxu0 %v260
        %v1915 = vpop.f32.mrb[0].mxu0
        %v1916 = vadd.f32 %v1608, %v1915
        %v1917 = vpop.f32.mrb[0].mxu0
        %1918 = vmatprep.mubr.f32.mxu0 0.0
        %1919 = vmatmul.mubr.f32.gmra.mrb[0].mxu0 %v263
        %v1920 = vpop.f32.mrb[0].mxu0
        %v1921 = vadd.f32 %v1613, %v1920
        %v1922 = vpop.f32.mrb[0].mxu0
        %1923 = vmatprep.mubr.f32.mxu0 0.0
        %1924 = vmatmul.mubr.f32.gmra.mrb[0].mxu0 %v266
        %v1925 = vpop.f32.mrb[0].mxu0
        %v1926 = vadd.f32 %v1618, %v1925
        %v1927 = vpop.f32.mrb[0].mxu0
        %1928 = vmatprep.mubr.f32.mxu0 0.0
        %1929 = vmatmul.mubr.f32.gmra.mrb[0].mxu0 %v269
        %v1930 = vpop.f32.mrb[0].mxu0
        %v1931 = vadd.f32 %v1623, %v1930
        %v1932 = vpop.f32.mrb[0].mxu0
        %1933 = vmatprep.mubr.f32.mxu0 0.0
        %1934 = vmatmul.mubr.f32.gmra.mrb[0].mxu0 %v272
        %v1935 = vpop.f32.mrb[0].mxu0
        %v1936 = vadd.f32 %v1628, %v1935
        %v1937 = vpop.f32.mrb[0].mxu0
        %1938 = vmatprep.mubr.f32.mxu0 0.0
        %1939 = vmatmul.mubr.f32.gmra.mrb[0].mxu0 %v275
        %v1940 = vpop.f32.mrb[0].mxu0
        %v1941 = vadd.f32 %v1633, %v1940
        %v1942 = vpop.f32.mrb[0].mxu0
        %1943 = vmatprep.mubr.f32.mxu0 0.0
        %1944 = vmatmul.mubr.f32.gmra.mrb[0].mxu0 %v278
        %v1945 = vpop.f32.mrb[0].mxu0
        %v1946 = vadd.f32 %v1638, %v1945
        %v1947 = vpop.f32.mrb[0].mxu0
        %1948 = vmatprep.mubr.f32.mxu0 0.0
        %1949 = vmatmul.mubr.f32.gmra.mrb[0].mxu0 %v281
        %v1950 = vpop.f32.mrb[0].mxu0
        %v1951 = vadd.f32 %v1643, %v1950
        %v1952 = vpop.f32.mrb[0].mxu0
        %1953 = vmatprep.mubr.f32.mxu0 0.0
        %1954 = vmatmul.mubr.f32.gmra.mrb[0].mxu0 %v284
        %v1955 = vpop.f32.mrb[0].mxu0
        %v1956 = vadd.f32 %v1648, %v1955
        %v1957 = vpop.f32.mrb[0].mxu0
        %1958 = vmatprep.mubr.f32.mxu0 0.0
        %1959 = vmatmul.mubr.f32.gmra.mrb[0].mxu0 %v287
        %v1960 = vpop.f32.mrb[0].mxu0
        %v1961 = vadd.f32 %v1653, %v1960
        %v1962 = vpop.f32.mrb[0].mxu0
        %1963 = vmatprep.mubr.f32.mxu0 0.0
        %1964 = vmatmul.mubr.f32.gmra.mrb[0].mxu0 %v290
        %v1965 = vpop.f32.mrb[0].mxu0
        %v1966 = vadd.f32 %v1658, %v1965
        %v1967 = vpop.f32.mrb[0].mxu0
        %1968 = vmatprep.mubr.f32.mxu0 0.0
        %1969 = vmatmul.mubr.f32.gmra.mrb[0].mxu0 %v293
        %v1970 = vpop.f32.mrb[0].mxu0
        %v1971 = vadd.f32 %v1663, %v1970
        %v1972 = vpop.f32.mrb[0].mxu0
        %1973 = vmatprep.mubr.f32.mxu0 0.0
        %1974 = vmatmul.mubr.f32.gmra.mrb[0].mxu0 %v296
        %v1975 = vpop.f32.mrb[0].mxu0
        %v1976 = vadd.f32 %v1668, %v1975
        %v1977 = vpop.f32.mrb[0].mxu0
        %1978 = vmatprep.mubr.f32.mxu0 0.0
        %1979 = vmatmul.mubr.f32.gmra.mrb[0].mxu0 %v299
        %v1980 = vpop.f32.mrb[0].mxu0
        %v1981 = vadd.f32 %v1673, %v1980
        %v1982 = vpop.f32.mrb[0].mxu0
        %1983 = vmatprep.mubr.f32.mxu0 0.0
        %1984 = vmatmul.mubr.f32.gmra.mrb[0].mxu0 %v302
        %v1985 = vpop.f32.mrb[0].mxu0
        %v1986 = vadd.f32 %v1678, %v1985
        %v1987 = vpop.f32.mrb[0].mxu0
        %1988 = vmatprep.mubr.f32.mxu0 0.0
        %1989 = vmatmul.mubr.f32.gmra.mrb[0].mxu0 %v305
        %v1990 = vpop.f32.mrb[0].mxu0
        %v1991 = vadd.f32 %v1683, %v1990
        %v1992 = vpop.f32.mrb[0].mxu0
        %1993 = vmatprep.mubr.f32.mxu0 0.0
        %1994 = vmatmul.mubr.f32.gmra.mrb[0].mxu0 %v308
        %v1995 = vpop.f32.mrb[0].mxu0
        %v1996 = vadd.f32 %v1688, %v1995
        %v1997 = vpop.f32.mrb[0].mxu0
        %1998 = vmatprep.mubr.f32.mxu0 0.0
        %1999 = vmatmul.mubr.f32.gmra.mrb[0].mxu0 %v311
        %v2000 = vpop.f32.mrb[0].mxu0
        %v2001 = vadd.f32 %v1693, %v2000
        %v2002 = vpop.f32.mrb[0].mxu0
        %2003 = vmatprep.mubr.f32.mxu0 0.0
        %2004 = vmatmul.mubr.f32.gmra.mrb[0].mxu0 %v314
        %v2005 = vpop.f32.mrb[0].mxu0
        %v2006 = vadd.f32 %v1698, %v2005
        %v2007 = vpop.f32.mrb[0].mxu0
        %2008 = vmatprep.mubr.f32.mxu0 0.0
        %2009 = vmatmul.mubr.f32.gmra.mrb[0].mxu0 %v317
        %v2010 = vpop.f32.mrb[0].mxu0
        %v2011 = vadd.f32 %v1703, %v2010
        %v2012 = vpop.f32.mrb[0].mxu0
        %2013 = vmatprep.mubr.f32.mxu0 0.0
        %2014 = vmatmul.mubr.f32.gmra.mrb[0].mxu0 %v320
        %v2015 = vpop.f32.mrb[0].mxu0
        %v2016 = vadd.f32 %v1708, %v2015
        %v2017 = vpop.f32.mrb[0].mxu0
        %2018 = vmatprep.mubr.f32.mxu0 0.0
        %2019 = vmatmul.mubr.f32.gmra.mrb[0].mxu0 %v323
        %v2020 = vpop.f32.mrb[0].mxu0
        %v2021 = vadd.f32 %v1713, %v2020
        %v2022 = vpop.f32.mrb[0].mxu0
        %2023 = vmatprep.mubr.f32.mxu0 0.0
        %2024 = vmatmul.mubr.f32.gmra.mrb[0].mxu0 %v326
        %v2025 = vpop.f32.mrb[0].mxu0
        %v2026 = vadd.f32 %v1718, %v2025
        %v2027 = vpop.f32.mrb[0].mxu0
        %2028 = vmatprep.mubr.f32.mxu0 0.0
        %2029 = vmatmul.mubr.f32.gmra.mrb[0].mxu0 %v329
        %v2030 = vpop.f32.mrb[0].mxu0
        %v2031 = vadd.f32 %v1723, %v2030
        %v2032 = vpop.f32.mrb[0].mxu0
        %2033 = vmatprep.mubr.f32.mxu0 0.0
        %2034 = vmatmul.mubr.f32.gmra.mrb[0].mxu0 %v332
        %v2035 = vpop.f32.mrb[0].mxu0
        %v2036 = vadd.f32 %v1728, %v2035
        %v2037 = vpop.f32.mrb[0].mxu0
        %2038 = vmatprep.mubr.f32.mxu0 0.0
        %2039 = vmatmul.mubr.f32.gmra.mrb[0].mxu0 %v335
        %v2040 = vpop.f32.mrb[0].mxu0
        %v2041 = vadd.f32 %v1733, %v2040
        %v2042 = vpop.f32.mrb[0].mxu0
        %2043 = vmatprep.mubr.f32.mxu0 0.0
        %2044 = vmatmul.mubr.f32.gmra.mrb[0].mxu0 %v338
        %v2045 = vpop.f32.mrb[0].mxu0
        %v2046 = vadd.f32 %v1738, %v2045
        %v2047 = vpop.f32.mrb[0].mxu0
        %2048 = vmatprep.mubr.f32.mxu0 0.0
        %2049 = vmatmul.mubr.f32.gmra.mrb[0].mxu0 %v341
        %v2050 = vpop.f32.mrb[0].mxu0
        %v2051 = vadd.f32 %v1743, %v2050
        %v2052 = vpop.f32.mrb[0].mxu0
        %2053 = vmatprep.mubr.f32.mxu0 0.0
        %2054 = vmatmul.mubr.f32.gmra.mrb[0].mxu0 %v344
        %v2055 = vpop.f32.mrb[0].mxu0
        %v2056 = vadd.f32 %v1748, %v2055
        %v2057 = vpop.f32.mrb[0].mxu0
        %2058 = vmatprep.mubr.f32.mxu0 0.0
        %2059 = vmatmul.mubr.f32.gmra.mrb[0].mxu0 %v347
        %v2060 = vpop.f32.mrb[0].mxu0
        %v2061 = vadd.f32 %v1753, %v2060
        %v2062 = vpop.f32.mrb[0].mxu0
        %2063 = vmatprep.mubr.f32.mxu0 0.0
        %2064 = vmatmul.mubr.f32.gmra.mrb[0].mxu0 %v350
        %v2065 = vpop.f32.mrb[0].mxu0
        %v2066 = vadd.f32 %v1758, %v2065
        %v2067 = vpop.f32.mrb[0].mxu0
        %2068 = vmatprep.mubr.f32.mxu0 0.0
        %2069 = vmatmul.mubr.f32.gmra.mrb[0].mxu0 %v353
        %v2070 = vpop.f32.mrb[0].mxu0
        %v2071 = vadd.f32 %v1763, %v2070
        %v2072 = vpop.f32.mrb[0].mxu0
        %2073 = vmatprep.mubr.f32.mxu0 0.0
        %2074 = vmatmul.mubr.f32.gmra.mrb[0].mxu0 %v356
        %v2075 = vpop.f32.mrb[0].mxu0
        %v2076 = vadd.f32 %v1768, %v2075
        %v2077 = vpop.f32.mrb[0].mxu0
        %2078 = vmatprep.mubr.f32.mxu0 0.0
        %2079 = vmatmul.mubr.f32.gmra.mrb[0].mxu0 %v359
        %v2080 = vpop.f32.mrb[0].mxu0
        %v2081 = vadd.f32 %v1773, %v2080
        %v2082 = vpop.f32.mrb[0].mxu0
        %2083 = vmatprep.mubr.f32.mxu0 0.0
        %2084 = vmatmul.mubr.f32.gmra.mrb[0].mxu0 %v362
        %v2085 = vpop.f32.mrb[0].mxu0
        %v2086 = vadd.f32 %v1778, %v2085
        %v2087 = vpop.f32.mrb[0].mxu0
        %2088 = vmatprep.mubr.f32.mxu0 0.0
        %2089 = vmatmul.mubr.f32.gmra.mrb[0].mxu0 %v365
        %v2090 = vpop.f32.mrb[0].mxu0
        %v2091 = vadd.f32 %v1783, %v2090
        %v2092 = vpop.f32.mrb[0].mxu0
        %2093 = vmatprep.mubr.f32.mxu0 0.0
        %2094 = vmatmul.mubr.f32.gmra.mrb[0].mxu0 %v368
        %v2095 = vpop.f32.mrb[0].mxu0
        %v2096 = vadd.f32 %v1788, %v2095
        %v2097 = vpop.f32.mrb[0].mxu0
        %2098 = vmatprep.mubr.f32.mxu0 0.0
        %2099 = vmatmul.mubr.f32.gmra.mrb[0].mxu0 %v371
        %v2100 = vpop.f32.mrb[0].mxu0
        %v2101 = vadd.f32 %v1793, %v2100
        %v2102 = vpop.f32.mrb[0].mxu0
        %2103 = vmatprep.mubr.f32.mxu0 0.0
        %2104 = vmatmul.mubr.f32.gmra.mrb[0].mxu0 %v374
        %v2105 = vpop.f32.mrb[0].mxu0
        %v2106 = vadd.f32 %v1798, %v2105
        %v2107 = vpop.f32.mrb[0].mxu0
        %2108 = vmatprep.mubr.f32.mxu0 0.0
        %2109 = vmatmul.mubr.f32.gmra.mrb[0].mxu0 %v377
        %v2110 = vpop.f32.mrb[0].mxu0
        %v2111 = vadd.f32 %v1803, %v2110
        %v2112 = vpop.f32.mrb[0].mxu0
        %2113 = vmatprep.mubr.f32.mxu0 0.0
        %2114 = vmatmul.mubr.f32.gmra.mrb[0].mxu0 %v380
        %v2115 = vpop.f32.mrb[0].mxu0
        %v2116 = vadd.f32 %v1808, %v2115
        %v2117 = vpop.f32.mrb[0].mxu0
        %2118 = vmatprep.mubr.f32.mxu0 0.0
        %2119 = vmatmul.mubr.f32.gmra.mrb[0].mxu0 %v383
        %v2120 = vpop.f32.mrb[0].mxu0
        %v2121 = vadd.f32 %v1813, %v2120
        %v2122 = vpop.f32.mrb[0].mxu0
        %2123 = vmatprep.mubr.f32.mxu0 0.0
        %2124 = vmatmul.mubr.f32.gmra.mrb[0].mxu0 %v386
        %v2125 = vpop.f32.mrb[0].mxu0
        %v2126 = vadd.f32 %v1818, %v2125
        %v2127 = vpop.f32.mrb[0].mxu0
        %2128 = vdwg.mxu0
        %s2129 = scalar_lea.vmem [#allocation5], 28
        %v2130 = vld [vmem:[%s2129] sm:$0xf]
        %v2132 = vsel %vm397, %v2130, 0
        %2134 = vmatprep.subr.mxu0 0.0
        %2135 = vmatpush1.msra.mxu0 %v2132
        %2136 = vmatprep.subr.mxu0 0.0
        %2137 = vmatpush1.msra.mxu0 0.0
        %2138 = vmatprep.subr.mxu0 0.0
        %2139 = vmatpush1.msra.mxu0 0.0
        %2140 = vmatprep.subr.mxu0 0.0
        %2141 = vmatpush1.msra.mxu0 0.0
        %2142 = vmatprep.subr.mxu0 0.0
        %2143 = vmatpush1.msra.mxu0 0.0
        %2144 = vmatprep.subr.mxu0 0.0
        %2145 = vmatpush1.msra.mxu0 0.0
        %2146 = vmatprep.subr.mxu0 0.0
        %2147 = vmatpush1.msra.mxu0 0.0
        %2148 = vmatprep.subr.mxu0 0.0
        %2149 = vmatpush1.msra.mxu0 0.0
        %2150 = vmatprep.subr.mxu0 0.0
        %2151 = vmatpush1.msra.mxu0 0.0
        %2152 = vmatprep.subr.mxu0 0.0
        %2153 = vmatpush1.msra.mxu0 0.0
        %2154 = vmatprep.subr.mxu0 0.0
        %2155 = vmatpush1.msra.mxu0 0.0
        %2156 = vmatprep.subr.mxu0 0.0
        %2157 = vmatpush1.msra.mxu0 0.0
        %2158 = vmatprep.subr.mxu0 0.0
        %2159 = vmatpush1.msra.mxu0 0.0
        %2160 = vmatprep.subr.mxu0 0.0
        %2161 = vmatpush1.msra.mxu0 0.0
        %2162 = vmatprep.subr.mxu0 0.0
        %2163 = vmatpush1.msra.mxu0 0.0
        %2164 = vmatprep.subr.mxu0 0.0
        %2165 = vmatpush1.msra.mxu0 0.0
        %2166 = vmatprep.subr.mxu0 0.0
        %2167 = vmatpush1.msra.mxu0 0.0
        %2168 = vmatprep.subr.mxu0 0.0
        %2169 = vmatpush1.msra.mxu0 0.0
        %2170 = vmatprep.subr.mxu0 0.0
        %2171 = vmatpush1.msra.mxu0 0.0
        %2172 = vmatprep.subr.mxu0 0.0
        %2173 = vmatpush1.msra.mxu0 0.0
        %2174 = vmatprep.subr.mxu0 0.0
        %2175 = vmatpush1.msra.mxu0 0.0
        %2176 = vmatprep.subr.mxu0 0.0
        %2177 = vmatpush1.msra.mxu0 0.0
        %2178 = vmatprep.subr.mxu0 0.0
        %2179 = vmatpush1.msra.mxu0 0.0
        %2180 = vmatprep.subr.mxu0 0.0
        %2181 = vmatpush1.msra.mxu0 0.0
        %2182 = vmatprep.subr.mxu0 0.0
        %2183 = vmatpush1.msra.mxu0 0.0
        %2184 = vmatprep.subr.mxu0 0.0
        %2185 = vmatpush1.msra.mxu0 0.0
        %2186 = vmatprep.subr.mxu0 0.0
        %2187 = vmatpush1.msra.mxu0 0.0
        %2188 = vmatprep.subr.mxu0 0.0
        %2189 = vmatpush1.msra.mxu0 0.0
        %2190 = vmatprep.subr.mxu0 0.0
        %2191 = vmatpush1.msra.mxu0 0.0
        %2192 = vmatprep.subr.mxu0 0.0
        %2193 = vmatpush1.msra.mxu0 0.0
        %2194 = vmatprep.subr.mxu0 0.0
        %2195 = vmatpush1.msra.mxu0 0.0
        %2196 = vmatprep.subr.mxu0 0.0
        %2197 = vmatpush1.msra.mxu0 0.0
        %2198 = vmatprep.mubr.f32.mxu0 0.0
        %2199 = vmatmul.mubr.f32.gmra.mrb[0].mxu0 %v1042
        %v2200 = vpop.f32.mrb[0].mxu0
        %v2201 = vadd.f32 0.0, %v2200
        %v2202 = vpop.f32.mrb[0].mxu0
        %2203 = vmatprep.mubr.f32.mxu0 0.0
        %2204 = vmatmul.mubr.f32.gmra.mrb[0].mxu0 %v1045
        %v2205 = vpop.f32.mrb[0].mxu0
        %v2206 = vadd.f32 0.0, %v2205
        %v2207 = vpop.f32.mrb[0].mxu0
        %2208 = vmatprep.mubr.f32.mxu0 0.0
        %2209 = vmatmul.mubr.f32.gmra.mrb[0].mxu0 %v1048
        %v2210 = vpop.f32.mrb[0].mxu0
        %v2211 = vadd.f32 0.0, %v2210
        %v2212 = vpop.f32.mrb[0].mxu0
        %2213 = vmatprep.mubr.f32.mxu0 0.0
        %2214 = vmatmul.mubr.f32.gmra.mrb[0].mxu0 %v1051
        %v2215 = vpop.f32.mrb[0].mxu0
        %v2216 = vadd.f32 0.0, %v2215
        %v2217 = vpop.f32.mrb[0].mxu0
        %2218 = vmatprep.mubr.f32.mxu0 0.0
        %2219 = vmatmul.mubr.f32.gmra.mrb[0].mxu0 %v1054
        %v2220 = vpop.f32.mrb[0].mxu0
        %v2221 = vadd.f32 0.0, %v2220
        %v2222 = vpop.f32.mrb[0].mxu0
        %2223 = vmatprep.mubr.f32.mxu0 0.0
        %2224 = vmatmul.mubr.f32.gmra.mrb[0].mxu0 %v1057
        %v2225 = vpop.f32.mrb[0].mxu0
        %v2226 = vadd.f32 0.0, %v2225
        %v2227 = vpop.f32.mrb[0].mxu0
        %2228 = vmatprep.mubr.f32.mxu0 0.0
        %2229 = vmatmul.mubr.f32.gmra.mrb[0].mxu0 %v1060
        %v2230 = vpop.f32.mrb[0].mxu0
        %v2231 = vadd.f32 0.0, %v2230
        %v2232 = vpop.f32.mrb[0].mxu0
        %2233 = vmatprep.mubr.f32.mxu0 0.0
        %2234 = vmatmul.mubr.f32.gmra.mrb[0].mxu0 %v1063
        %v2235 = vpop.f32.mrb[0].mxu0
        %v2236 = vadd.f32 0.0, %v2235
        %v2237 = vpop.f32.mrb[0].mxu0
        %2238 = vmatprep.mubr.f32.mxu0 0.0
        %2239 = vmatmul.mubr.f32.gmra.mrb[0].mxu0 %v1066
        %v2240 = vpop.f32.mrb[0].mxu0
        %v2241 = vadd.f32 0.0, %v2240
        %v2242 = vpop.f32.mrb[0].mxu0
        %2243 = vmatprep.mubr.f32.mxu0 0.0
        %2244 = vmatmul.mubr.f32.gmra.mrb[0].mxu0 %v1069
        %v2245 = vpop.f32.mrb[0].mxu0
        %v2246 = vadd.f32 0.0, %v2245
        %v2247 = vpop.f32.mrb[0].mxu0
        %2248 = vmatprep.mubr.f32.mxu0 0.0
        %2249 = vmatmul.mubr.f32.gmra.mrb[0].mxu0 %v1072
        %v2250 = vpop.f32.mrb[0].mxu0
        %v2251 = vadd.f32 0.0, %v2250
        %v2252 = vpop.f32.mrb[0].mxu0
        %2253 = vmatprep.mubr.f32.mxu0 0.0
        %2254 = vmatmul.mubr.f32.gmra.mrb[0].mxu0 %v1075
        %v2255 = vpop.f32.mrb[0].mxu0
        %v2256 = vadd.f32 0.0, %v2255
        %v2257 = vpop.f32.mrb[0].mxu0
        %2258 = vmatprep.mubr.f32.mxu0 0.0
        %2259 = vmatmul.mubr.f32.gmra.mrb[0].mxu0 %v1078
        %v2260 = vpop.f32.mrb[0].mxu0
        %v2261 = vadd.f32 0.0, %v2260
        %v2262 = vpop.f32.mrb[0].mxu0
        %2263 = vmatprep.mubr.f32.mxu0 0.0
        %2264 = vmatmul.mubr.f32.gmra.mrb[0].mxu0 %v1081
        %v2265 = vpop.f32.mrb[0].mxu0
        %v2266 = vadd.f32 0.0, %v2265
        %v2267 = vpop.f32.mrb[0].mxu0
        %2268 = vmatprep.mubr.f32.mxu0 0.0
        %2269 = vmatmul.mubr.f32.gmra.mrb[0].mxu0 %v1084
        %v2270 = vpop.f32.mrb[0].mxu0
        %v2271 = vadd.f32 0.0, %v2270
        %v2272 = vpop.f32.mrb[0].mxu0
        %2273 = vmatprep.mubr.f32.mxu0 0.0
        %2274 = vmatmul.mubr.f32.gmra.mrb[0].mxu0 %v1087
        %v2275 = vpop.f32.mrb[0].mxu0
        %v2276 = vadd.f32 0.0, %v2275
        %v2277 = vpop.f32.mrb[0].mxu0
        %2278 = vmatprep.mubr.f32.mxu0 0.0
        %2279 = vmatmul.mubr.f32.gmra.mrb[0].mxu0 %v1090
        %v2280 = vpop.f32.mrb[0].mxu0
        %v2281 = vadd.f32 0.0, %v2280
        %v2282 = vpop.f32.mrb[0].mxu0
        %2283 = vmatprep.mubr.f32.mxu0 0.0
        %2284 = vmatmul.mubr.f32.gmra.mrb[0].mxu0 %v1093
        %v2285 = vpop.f32.mrb[0].mxu0
        %v2286 = vadd.f32 0.0, %v2285
        %v2287 = vpop.f32.mrb[0].mxu0
        %2288 = vmatprep.mubr.f32.mxu0 0.0
        %2289 = vmatmul.mubr.f32.gmra.mrb[0].mxu0 %v1096
        %v2290 = vpop.f32.mrb[0].mxu0
        %v2291 = vadd.f32 0.0, %v2290
        %v2292 = vpop.f32.mrb[0].mxu0
        %2293 = vmatprep.mubr.f32.mxu0 0.0
        %2294 = vmatmul.mubr.f32.gmra.mrb[0].mxu0 %v1099
        %v2295 = vpop.f32.mrb[0].mxu0
        %v2296 = vadd.f32 0.0, %v2295
        %v2297 = vpop.f32.mrb[0].mxu0
        %2298 = vmatprep.mubr.f32.mxu0 0.0
        %2299 = vmatmul.mubr.f32.gmra.mrb[0].mxu0 %v1102
        %v2300 = vpop.f32.mrb[0].mxu0
        %v2301 = vadd.f32 0.0, %v2300
        %v2302 = vpop.f32.mrb[0].mxu0
        %2303 = vmatprep.mubr.f32.mxu0 0.0
        %2304 = vmatmul.mubr.f32.gmra.mrb[0].mxu0 %v1105
        %v2305 = vpop.f32.mrb[0].mxu0
        %v2306 = vadd.f32 0.0, %v2305
        %v2307 = vpop.f32.mrb[0].mxu0
        %2308 = vmatprep.mubr.f32.mxu0 0.0
        %2309 = vmatmul.mubr.f32.gmra.mrb[0].mxu0 %v1108
        %v2310 = vpop.f32.mrb[0].mxu0
        %v2311 = vadd.f32 0.0, %v2310
        %v2312 = vpop.f32.mrb[0].mxu0
        %2313 = vmatprep.mubr.f32.mxu0 0.0
        %2314 = vmatmul.mubr.f32.gmra.mrb[0].mxu0 %v1111
        %v2315 = vpop.f32.mrb[0].mxu0
        %v2316 = vadd.f32 0.0, %v2315
        %v2317 = vpop.f32.mrb[0].mxu0
        %2318 = vmatprep.mubr.f32.mxu0 0.0
        %2319 = vmatmul.mubr.f32.gmra.mrb[0].mxu0 %v1114
        %v2320 = vpop.f32.mrb[0].mxu0
        %v2321 = vadd.f32 0.0, %v2320
        %v2322 = vpop.f32.mrb[0].mxu0
        %2323 = vmatprep.mubr.f32.mxu0 0.0
        %2324 = vmatmul.mubr.f32.gmra.mrb[0].mxu0 %v1117
        %v2325 = vpop.f32.mrb[0].mxu0
        %v2326 = vadd.f32 0.0, %v2325
        %v2327 = vpop.f32.mrb[0].mxu0
        %2328 = vmatprep.mubr.f32.mxu0 0.0
        %2329 = vmatmul.mubr.f32.gmra.mrb[0].mxu0 %v1120
        %v2330 = vpop.f32.mrb[0].mxu0
        %v2331 = vadd.f32 0.0, %v2330
        %v2332 = vpop.f32.mrb[0].mxu0
        %2333 = vmatprep.mubr.f32.mxu0 0.0
        %2334 = vmatmul.mubr.f32.gmra.mrb[0].mxu0 %v1123
        %v2335 = vpop.f32.mrb[0].mxu0
        %v2336 = vadd.f32 0.0, %v2335
        %v2337 = vpop.f32.mrb[0].mxu0
        %2338 = vmatprep.mubr.f32.mxu0 0.0
        %2339 = vmatmul.mubr.f32.gmra.mrb[0].mxu0 %v1126
        %v2340 = vpop.f32.mrb[0].mxu0
        %v2341 = vadd.f32 0.0, %v2340
        %v2342 = vpop.f32.mrb[0].mxu0
        %2343 = vmatprep.mubr.f32.mxu0 0.0
        %2344 = vmatmul.mubr.f32.gmra.mrb[0].mxu0 %v1129
        %v2345 = vpop.f32.mrb[0].mxu0
        %v2346 = vadd.f32 0.0, %v2345
        %v2347 = vpop.f32.mrb[0].mxu0
        %2348 = vmatprep.mubr.f32.mxu0 0.0
        %2349 = vmatmul.mubr.f32.gmra.mrb[0].mxu0 %v1132
        %v2350 = vpop.f32.mrb[0].mxu0
        %v2351 = vadd.f32 0.0, %v2350
        %v2352 = vpop.f32.mrb[0].mxu0
        %2353 = vmatprep.mubr.f32.mxu0 0.0
        %2354 = vmatmul.mubr.f32.gmra.mrb[0].mxu0 %v1135
        %v2355 = vpop.f32.mrb[0].mxu0
        %v2356 = vadd.f32 0.0, %v2355
        %v2357 = vpop.f32.mrb[0].mxu0
        %2358 = vmatprep.mubr.f32.mxu0 0.0
        %2359 = vmatmul.mubr.f32.gmra.mrb[0].mxu0 %v1138
        %v2360 = vpop.f32.mrb[0].mxu0
        %v2361 = vadd.f32 0.0, %v2360
        %v2362 = vpop.f32.mrb[0].mxu0
        %2363 = vmatprep.mubr.f32.mxu0 0.0
        %2364 = vmatmul.mubr.f32.gmra.mrb[0].mxu0 %v1141
        %v2365 = vpop.f32.mrb[0].mxu0
        %v2366 = vadd.f32 0.0, %v2365
        %v2367 = vpop.f32.mrb[0].mxu0
        %2368 = vmatprep.mubr.f32.mxu0 0.0
        %2369 = vmatmul.mubr.f32.gmra.mrb[0].mxu0 %v1144
        %v2370 = vpop.f32.mrb[0].mxu0
        %v2371 = vadd.f32 0.0, %v2370
        %v2372 = vpop.f32.mrb[0].mxu0
        %2373 = vmatprep.mubr.f32.mxu0 0.0
        %2374 = vmatmul.mubr.f32.gmra.mrb[0].mxu0 %v1147
        %v2375 = vpop.f32.mrb[0].mxu0
        %v2376 = vadd.f32 0.0, %v2375
        %v2377 = vpop.f32.mrb[0].mxu0
        %2378 = vmatprep.mubr.f32.mxu0 0.0
        %2379 = vmatmul.mubr.f32.gmra.mrb[0].mxu0 %v1150
        %v2380 = vpop.f32.mrb[0].mxu0
        %v2381 = vadd.f32 0.0, %v2380
        %v2382 = vpop.f32.mrb[0].mxu0
        %2383 = vmatprep.mubr.f32.mxu0 0.0
        %2384 = vmatmul.mubr.f32.gmra.mrb[0].mxu0 %v1153
        %v2385 = vpop.f32.mrb[0].mxu0
        %v2386 = vadd.f32 0.0, %v2385
        %v2387 = vpop.f32.mrb[0].mxu0
        %2388 = vmatprep.mubr.f32.mxu0 0.0
        %2389 = vmatmul.mubr.f32.gmra.mrb[0].mxu0 %v1156
        %v2390 = vpop.f32.mrb[0].mxu0
        %v2391 = vadd.f32 0.0, %v2390
        %v2392 = vpop.f32.mrb[0].mxu0
        %2393 = vmatprep.mubr.f32.mxu0 0.0
        %2394 = vmatmul.mubr.f32.gmra.mrb[0].mxu0 %v1159
        %v2395 = vpop.f32.mrb[0].mxu0
        %v2396 = vadd.f32 0.0, %v2395
        %v2397 = vpop.f32.mrb[0].mxu0
        %2398 = vmatprep.mubr.f32.mxu0 0.0
        %2399 = vmatmul.mubr.f32.gmra.mrb[0].mxu0 %v1162
        %v2400 = vpop.f32.mrb[0].mxu0
        %v2401 = vadd.f32 0.0, %v2400
        %v2402 = vpop.f32.mrb[0].mxu0
        %2403 = vmatprep.mubr.f32.mxu0 0.0
        %2404 = vmatmul.mubr.f32.gmra.mrb[0].mxu0 %v1165
        %v2405 = vpop.f32.mrb[0].mxu0
        %v2406 = vadd.f32 0.0, %v2405
        %v2407 = vpop.f32.mrb[0].mxu0
        %2408 = vmatprep.mubr.f32.mxu0 0.0
        %2409 = vmatmul.mubr.f32.gmra.mrb[0].mxu0 %v1168
        %v2410 = vpop.f32.mrb[0].mxu0
        %v2411 = vadd.f32 0.0, %v2410
        %v2412 = vpop.f32.mrb[0].mxu0
        %2413 = vmatprep.mubr.f32.mxu0 0.0
        %2414 = vmatmul.mubr.f32.gmra.mrb[0].mxu0 %v1171
        %v2415 = vpop.f32.mrb[0].mxu0
        %v2416 = vadd.f32 0.0, %v2415
        %v2417 = vpop.f32.mrb[0].mxu0
        %2418 = vmatprep.mubr.f32.mxu0 0.0
        %2419 = vmatmul.mubr.f32.gmra.mrb[0].mxu0 %v1174
        %v2420 = vpop.f32.mrb[0].mxu0
        %v2421 = vadd.f32 0.0, %v2420
        %v2422 = vpop.f32.mrb[0].mxu0
        %2423 = vmatprep.mubr.f32.mxu0 0.0
        %2424 = vmatmul.mubr.f32.gmra.mrb[0].mxu0 %v1177
        %v2425 = vpop.f32.mrb[0].mxu0
        %v2426 = vadd.f32 0.0, %v2425
        %v2427 = vpop.f32.mrb[0].mxu0
        %2428 = vmatprep.mubr.f32.mxu0 0.0
        %2429 = vmatmul.mubr.f32.gmra.mrb[0].mxu0 %v1180
        %v2430 = vpop.f32.mrb[0].mxu0
        %v2431 = vadd.f32 0.0, %v2430
        %v2432 = vpop.f32.mrb[0].mxu0
        %2433 = vmatprep.mubr.f32.mxu0 0.0
        %2434 = vmatmul.mubr.f32.gmra.mrb[0].mxu0 %v1183
        %v2435 = vpop.f32.mrb[0].mxu0
        %v2436 = vadd.f32 0.0, %v2435
        %v2437 = vpop.f32.mrb[0].mxu0
        %2438 = vdwg.mxu0
        %v2439 = vadd.f32 %v1891, %v2201
        %v2440 = vadd.f32 %v1896, %v2206
        %v2441 = vadd.f32 %v1901, %v2211
        %v2442 = vadd.f32 %v1906, %v2216
        %v2443 = vadd.f32 %v1911, %v2221
        %v2444 = vadd.f32 %v1916, %v2226
        %v2445 = vadd.f32 %v1921, %v2231
        %v2446 = vadd.f32 %v1926, %v2236
        %v2447 = vadd.f32 %v1931, %v2241
        %v2448 = vadd.f32 %v1936, %v2246
        %v2449 = vadd.f32 %v1941, %v2251
        %v2450 = vadd.f32 %v1946, %v2256
        %v2451 = vadd.f32 %v1951, %v2261
        %v2452 = vadd.f32 %v1956, %v2266
        %v2453 = vadd.f32 %v1961, %v2271
        %v2454 = vadd.f32 %v1966, %v2276
        %v2455 = vadd.f32 %v1971, %v2281
        %v2456 = vadd.f32 %v1976, %v2286
        %v2457 = vadd.f32 %v1981, %v2291
        %v2458 = vadd.f32 %v1986, %v2296
        %v2459 = vadd.f32 %v1991, %v2301
        %v2460 = vadd.f32 %v1996, %v2306
        %v2461 = vadd.f32 %v2001, %v2311
        %v2462 = vadd.f32 %v2006, %v2316
        %v2463 = vadd.f32 %v2011, %v2321
        %v2464 = vadd.f32 %v2016, %v2326
        %v2465 = vadd.f32 %v2021, %v2331
        %v2466 = vadd.f32 %v2026, %v2336
        %v2467 = vadd.f32 %v2031, %v2341
        %v2468 = vadd.f32 %v2036, %v2346
        %v2469 = vadd.f32 %v2041, %v2351
        %v2470 = vadd.f32 %v2046, %v2356
        %v2471 = vadd.f32 %v2051, %v2361
        %v2472 = vadd.f32 %v2056, %v2366
        %v2473 = vadd.f32 %v2061, %v2371
        %v2474 = vadd.f32 %v2066, %v2376
        %v2475 = vadd.f32 %v2071, %v2381
        %v2476 = vadd.f32 %v2076, %v2386
        %v2477 = vadd.f32 %v2081, %v2391
        %v2478 = vadd.f32 %v2086, %v2396
        %v2479 = vadd.f32 %v2091, %v2401
        %v2480 = vadd.f32 %v2096, %v2406
        %v2481 = vadd.f32 %v2101, %v2411
        %v2482 = vadd.f32 %v2106, %v2416
        %v2483 = vadd.f32 %v2111, %v2421
        %v2484 = vadd.f32 %v2116, %v2426
        %v2485 = vadd.f32 %v2121, %v2431
        %v2486 = vadd.f32 %v2126, %v2436
        %v2487 = vrot.slane %v2439, 1
        %v2488 = vrot.slane %v2440, 1
        %v2489 = vrot.slane %v2441, 1
        %v2490 = vrot.slane %v2442, 1
        %v2491 = vrot.slane %v2443, 1
        %v2492 = vrot.slane %v2444, 1
        %v2493 = vrot.slane %v2445, 1
        %v2494 = vrot.slane %v2446, 1
        %v2495 = vrot.slane %v2447, 1
        %v2496 = vrot.slane %v2448, 1
        %v2497 = vrot.slane %v2449, 1
        %v2498 = vrot.slane %v2450, 1
        %v2499 = vrot.slane %v2451, 1
        %v2500 = vrot.slane %v2452, 1
        %v2501 = vrot.slane %v2453, 1
        %v2502 = vrot.slane %v2454, 1
        %v2503 = vrot.slane %v2455, 1
        %v2504 = vrot.slane %v2456, 1
        %v2505 = vrot.slane %v2457, 1
        %v2506 = vrot.slane %v2458, 1
        %v2507 = vrot.slane %v2459, 1
        %v2508 = vrot.slane %v2460, 1
        %v2509 = vrot.slane %v2461, 1
        %v2510 = vrot.slane %v2462, 1
        %v2511 = vrot.slane %v2463, 1
        %v2512 = vrot.slane %v2464, 1
        %v2513 = vrot.slane %v2465, 1
        %v2514 = vrot.slane %v2466, 1
        %v2515 = vrot.slane %v2467, 1
        %v2516 = vrot.slane %v2468, 1
        %v2517 = vrot.slane %v2469, 1
        %v2518 = vrot.slane %v2470, 1
        %v2519 = vrot.slane %v2471, 1
        %v2520 = vrot.slane %v2472, 1
        %v2521 = vrot.slane %v2473, 1
        %v2522 = vrot.slane %v2474, 1
        %v2523 = vrot.slane %v2475, 1
        %v2524 = vrot.slane %v2476, 1
        %v2525 = vrot.slane %v2477, 1
        %v2526 = vrot.slane %v2478, 1
        %v2527 = vrot.slane %v2479, 1
        %v2528 = vrot.slane %v2480, 1
        %v2529 = vrot.slane %v2481, 1
        %v2530 = vrot.slane %v2482, 1
        %v2531 = vrot.slane %v2483, 1
        %v2532 = vrot.slane %v2484, 1
        %v2533 = vrot.slane %v2485, 1
        %v2534 = vrot.slane %v2486, 1
        %v2535 = vlaneseq
        %v2536 = vshrl.u32 %v2535, 7
        %vm2537 = vcmp.lt.s32.totalorder %v2536, 7
        %v2538 = vsel %vm2537, %v2533, %v2534
        %v2539 = vsel %vm2537, %v2532, %v2533
        %v2540 = vsel %vm2537, %v2530, %v2531
        %v2541 = vsel %vm2537, %v2529, %v2530
        %v2542 = vsel %vm2537, %v2527, %v2528
        %v2543 = vsel %vm2537, %v2526, %v2527
        %v2544 = vsel %vm2537, %v2524, %v2525
        %v2545 = vsel %vm2537, %v2523, %v2524
        %v2546 = vsel %vm2537, %v2521, %v2522
        %v2547 = vsel %vm2537, %v2520, %v2521
        %v2548 = vsel %vm2537, %v2518, %v2519
        %v2549 = vsel %vm2537, %v2517, %v2518
        %v2550 = vsel %vm2537, %v2515, %v2516
        %v2551 = vsel %vm2537, %v2514, %v2515
        %v2552 = vsel %vm2537, %v2512, %v2513
        %v2553 = vsel %vm2537, %v2511, %v2512
        %v2554 = vsel %vm2537, %v2509, %v2510
        %v2555 = vsel %vm2537, %v2508, %v2509
        %v2556 = vsel %vm2537, %v2506, %v2507
        %v2557 = vsel %vm2537, %v2505, %v2506
        %v2558 = vsel %vm2537, %v2503, %v2504
        %v2559 = vsel %vm2537, %v2502, %v2503
        %v2560 = vsel %vm2537, %v2500, %v2501
        %v2561 = vsel %vm2537, %v2499, %v2500
        %v2562 = vsel %vm2537, %v2497, %v2498
        %v2563 = vsel %vm2537, %v2496, %v2497
        %v2564 = vsel %vm2537, %v2494, %v2495
        %v2565 = vsel %vm2537, %v2493, %v2494
        %v2566 = vsel %vm2537, %v2491, %v2492
        %v2567 = vsel %vm2537, %v2490, %v2491
        %v2568 = vsel %vm2537, %v2488, %v2489
        %v2569 = vsel %vm2537, %v2487, %v2488
        %v2570 = vadd.f32 %v1477, %v2569
        %v2571 = vadd.f32 %v1478, %v2568
        %v2572 = vadd.f32 %v1479, %v2567
        %v2573 = vadd.f32 %v1480, %v2566
        %v2574 = vadd.f32 %v1481, %v2565
        %v2575 = vadd.f32 %v1482, %v2564
        %v2576 = vadd.f32 %v1483, %v2563
        %v2577 = vadd.f32 %v1484, %v2562
        %v2578 = vadd.f32 %v1485, %v2561
        %v2579 = vadd.f32 %v1486, %v2560
        %v2580 = vadd.f32 %v1487, %v2559
        %v2581 = vadd.f32 %v1488, %v2558
        %v2582 = vadd.f32 %v1489, %v2557
        %v2583 = vadd.f32 %v1490, %v2556
        %v2584 = vadd.f32 %v1491, %v2555
        %v2585 = vadd.f32 %v1492, %v2554
        %v2586 = vadd.f32 %v1493, %v2553
        %v2587 = vadd.f32 %v1494, %v2552
        %v2588 = vadd.f32 %v1495, %v2551
        %v2589 = vadd.f32 %v1496, %v2550
        %v2590 = vadd.f32 %v1497, %v2549
        %v2591 = vadd.f32 %v1498, %v2548
        %v2592 = vadd.f32 %v1499, %v2547
        %v2593 = vadd.f32 %v1500, %v2546
        %v2594 = vadd.f32 %v1501, %v2545
        %v2595 = vadd.f32 %v1502, %v2544
        %v2596 = vadd.f32 %v1503, %v2543
        %v2597 = vadd.f32 %v1504, %v2542
        %v2598 = vadd.f32 %v1505, %v2541
        %v2599 = vadd.f32 %v1506, %v2540
        %v2600 = vadd.f32 %v1507, %v2539
        %v2601 = vadd.f32 %v1508, %v2538
        %s2602 = scalar_lea.vmem [#allocation5], 8
        %v2603 = vld [vmem:[%s2602] sm:$0xf]
        %s2604 = scalar_lea.vmem [#allocation5], 20
        %v2605 = vld [vmem:[%s2604] sm:$0xf]
        %v2607 = vsel %vm397, %v2605, 0
        %2609 = vmatprep.subr.mxu0 0.0
        %2610 = vmatpush1.msra.mxu0 %v2607
        %2611 = vmatprep.subr.mxu0 0.0
        %2612 = vmatpush1.msra.mxu0 0.0
        %2613 = vmatprep.subr.mxu0 0.0
        %2614 = vmatpush1.msra.mxu0 0.0
        %2615 = vmatprep.subr.mxu0 0.0
        %2616 = vmatpush1.msra.mxu0 0.0
        %2617 = vmatprep.subr.mxu0 0.0
        %2618 = vmatpush1.msra.mxu0 0.0
        %2619 = vmatprep.subr.mxu0 0.0
        %2620 = vmatpush1.msra.mxu0 0.0
        %2621 = vmatprep.subr.mxu0 0.0
        %2622 = vmatpush1.msra.mxu0 0.0
        %2623 = vmatprep.subr.mxu0 0.0
        %2624 = vmatpush1.msra.mxu0 0.0
        %2625 = vmatprep.subr.mxu0 0.0
        %2626 = vmatpush1.msra.mxu0 0.0
        %2627 = vmatprep.subr.mxu0 0.0
        %2628 = vmatpush1.msra.mxu0 0.0
        %2629 = vmatprep.subr.mxu0 0.0
        %2630 = vmatpush1.msra.mxu0 0.0
        %2631 = vmatprep.subr.mxu0 0.0
        %2632 = vmatpush1.msra.mxu0 0.0
        %2633 = vmatprep.subr.mxu0 0.0
        %2634 = vmatpush1.msra.mxu0 0.0
        %2635 = vmatprep.subr.mxu0 0.0
        %2636 = vmatpush1.msra.mxu0 0.0
        %2637 = vmatprep.subr.mxu0 0.0
        %2638 = vmatpush1.msra.mxu0 0.0
        %2639 = vmatprep.subr.mxu0 0.0
        %2640 = vmatpush1.msra.mxu0 0.0
        %2641 = vmatprep.subr.mxu0 0.0
        %2642 = vmatpush1.msra.mxu0 0.0
        %2643 = vmatprep.subr.mxu0 0.0
        %2644 = vmatpush1.msra.mxu0 0.0
        %2645 = vmatprep.subr.mxu0 0.0
        %2646 = vmatpush1.msra.mxu0 0.0
        %2647 = vmatprep.subr.mxu0 0.0
        %2648 = vmatpush1.msra.mxu0 0.0
        %2649 = vmatprep.subr.mxu0 0.0
        %2650 = vmatpush1.msra.mxu0 0.0
        %2651 = vmatprep.subr.mxu0 0.0
        %2652 = vmatpush1.msra.mxu0 0.0
        %2653 = vmatprep.subr.mxu0 0.0
        %2654 = vmatpush1.msra.mxu0 0.0
        %2655 = vmatprep.subr.mxu0 0.0
        %2656 = vmatpush1.msra.mxu0 0.0
        %2657 = vmatprep.subr.mxu0 0.0
        %2658 = vmatpush1.msra.mxu0 0.0
        %2659 = vmatprep.subr.mxu0 0.0
        %2660 = vmatpush1.msra.mxu0 0.0
        %2661 = vmatprep.subr.mxu0 0.0
        %2662 = vmatpush1.msra.mxu0 0.0
        %2663 = vmatprep.subr.mxu0 0.0
        %2664 = vmatpush1.msra.mxu0 0.0
        %2665 = vmatprep.subr.mxu0 0.0
        %2666 = vmatpush1.msra.mxu0 0.0
        %2667 = vmatprep.subr.mxu0 0.0
        %2668 = vmatpush1.msra.mxu0 0.0
        %2669 = vmatprep.subr.mxu0 0.0
        %2670 = vmatpush1.msra.mxu0 0.0
        %2671 = vmatprep.subr.mxu0 0.0
        %2672 = vmatpush1.msra.mxu0 0.0
        %2673 = vmatprep.mubr.f32.mxu0 0.0
        %2674 = vmatmul.mubr.f32.gmra.mrb[0].mxu0 %v254
        %v2675 = vpop.f32.mrb[0].mxu0
        %v2676 = vadd.f32 0.0, %v2675
        %v2677 = vpop.f32.mrb[0].mxu0
        %2678 = vmatprep.mubr.f32.mxu0 0.0
        %2679 = vmatmul.mubr.f32.gmra.mrb[0].mxu0 %v257
        %v2680 = vpop.f32.mrb[0].mxu0
        %v2681 = vadd.f32 0.0, %v2680
        %v2682 = vpop.f32.mrb[0].mxu0
        %2683 = vmatprep.mubr.f32.mxu0 0.0
        %2684 = vmatmul.mubr.f32.gmra.mrb[0].mxu0 %v260
        %v2685 = vpop.f32.mrb[0].mxu0
        %v2686 = vadd.f32 0.0, %v2685
        %v2687 = vpop.f32.mrb[0].mxu0
        %2688 = vmatprep.mubr.f32.mxu0 0.0
        %2689 = vmatmul.mubr.f32.gmra.mrb[0].mxu0 %v263
        %v2690 = vpop.f32.mrb[0].mxu0
        %v2691 = vadd.f32 0.0, %v2690
        %v2692 = vpop.f32.mrb[0].mxu0
        %2693 = vmatprep.mubr.f32.mxu0 0.0
        %2694 = vmatmul.mubr.f32.gmra.mrb[0].mxu0 %v266
        %v2695 = vpop.f32.mrb[0].mxu0
        %v2696 = vadd.f32 0.0, %v2695
        %v2697 = vpop.f32.mrb[0].mxu0
        %2698 = vmatprep.mubr.f32.mxu0 0.0
        %2699 = vmatmul.mubr.f32.gmra.mrb[0].mxu0 %v269
        %v2700 = vpop.f32.mrb[0].mxu0
        %v2701 = vadd.f32 0.0, %v2700
        %v2702 = vpop.f32.mrb[0].mxu0
        %2703 = vmatprep.mubr.f32.mxu0 0.0
        %2704 = vmatmul.mubr.f32.gmra.mrb[0].mxu0 %v272
        %v2705 = vpop.f32.mrb[0].mxu0
        %v2706 = vadd.f32 0.0, %v2705
        %v2707 = vpop.f32.mrb[0].mxu0
        %2708 = vmatprep.mubr.f32.mxu0 0.0
        %2709 = vmatmul.mubr.f32.gmra.mrb[0].mxu0 %v275
        %v2710 = vpop.f32.mrb[0].mxu0
        %v2711 = vadd.f32 0.0, %v2710
        %v2712 = vpop.f32.mrb[0].mxu0
        %2713 = vmatprep.mubr.f32.mxu0 0.0
        %2714 = vmatmul.mubr.f32.gmra.mrb[0].mxu0 %v278
        %v2715 = vpop.f32.mrb[0].mxu0
        %v2716 = vadd.f32 0.0, %v2715
        %v2717 = vpop.f32.mrb[0].mxu0
        %2718 = vmatprep.mubr.f32.mxu0 0.0
        %2719 = vmatmul.mubr.f32.gmra.mrb[0].mxu0 %v281
        %v2720 = vpop.f32.mrb[0].mxu0
        %v2721 = vadd.f32 0.0, %v2720
        %v2722 = vpop.f32.mrb[0].mxu0
        %2723 = vmatprep.mubr.f32.mxu0 0.0
        %2724 = vmatmul.mubr.f32.gmra.mrb[0].mxu0 %v284
        %v2725 = vpop.f32.mrb[0].mxu0
        %v2726 = vadd.f32 0.0, %v2725
        %v2727 = vpop.f32.mrb[0].mxu0
        %2728 = vmatprep.mubr.f32.mxu0 0.0
        %2729 = vmatmul.mubr.f32.gmra.mrb[0].mxu0 %v287
        %v2730 = vpop.f32.mrb[0].mxu0
        %v2731 = vadd.f32 0.0, %v2730
        %v2732 = vpop.f32.mrb[0].mxu0
        %2733 = vmatprep.mubr.f32.mxu0 0.0
        %2734 = vmatmul.mubr.f32.gmra.mrb[0].mxu0 %v290
        %v2735 = vpop.f32.mrb[0].mxu0
        %v2736 = vadd.f32 0.0, %v2735
        %v2737 = vpop.f32.mrb[0].mxu0
        %2738 = vmatprep.mubr.f32.mxu0 0.0
        %2739 = vmatmul.mubr.f32.gmra.mrb[0].mxu0 %v293
        %v2740 = vpop.f32.mrb[0].mxu0
        %v2741 = vadd.f32 0.0, %v2740
        %v2742 = vpop.f32.mrb[0].mxu0
        %2743 = vmatprep.mubr.f32.mxu0 0.0
        %2744 = vmatmul.mubr.f32.gmra.mrb[0].mxu0 %v296
        %v2745 = vpop.f32.mrb[0].mxu0
        %v2746 = vadd.f32 0.0, %v2745
        %v2747 = vpop.f32.mrb[0].mxu0
        %2748 = vmatprep.mubr.f32.mxu0 0.0
        %2749 = vmatmul.mubr.f32.gmra.mrb[0].mxu0 %v299
        %v2750 = vpop.f32.mrb[0].mxu0
        %v2751 = vadd.f32 0.0, %v2750
        %v2752 = vpop.f32.mrb[0].mxu0
        %2753 = vmatprep.mubr.f32.mxu0 0.0
        %2754 = vmatmul.mubr.f32.gmra.mrb[0].mxu0 %v302
        %v2755 = vpop.f32.mrb[0].mxu0
        %v2756 = vadd.f32 0.0, %v2755
        %v2757 = vpop.f32.mrb[0].mxu0
        %2758 = vmatprep.mubr.f32.mxu0 0.0
        %2759 = vmatmul.mubr.f32.gmra.mrb[0].mxu0 %v305
        %v2760 = vpop.f32.mrb[0].mxu0
        %v2761 = vadd.f32 0.0, %v2760
        %v2762 = vpop.f32.mrb[0].mxu0
        %2763 = vmatprep.mubr.f32.mxu0 0.0
        %2764 = vmatmul.mubr.f32.gmra.mrb[0].mxu0 %v308
        %v2765 = vpop.f32.mrb[0].mxu0
        %v2766 = vadd.f32 0.0, %v2765
        %v2767 = vpop.f32.mrb[0].mxu0
        %2768 = vmatprep.mubr.f32.mxu0 0.0
        %2769 = vmatmul.mubr.f32.gmra.mrb[0].mxu0 %v311
        %v2770 = vpop.f32.mrb[0].mxu0
        %v2771 = vadd.f32 0.0, %v2770
        %v2772 = vpop.f32.mrb[0].mxu0
        %2773 = vmatprep.mubr.f32.mxu0 0.0
        %2774 = vmatmul.mubr.f32.gmra.mrb[0].mxu0 %v314
        %v2775 = vpop.f32.mrb[0].mxu0
        %v2776 = vadd.f32 0.0, %v2775
        %v2777 = vpop.f32.mrb[0].mxu0
        %2778 = vmatprep.mubr.f32.mxu0 0.0
        %2779 = vmatmul.mubr.f32.gmra.mrb[0].mxu0 %v317
        %v2780 = vpop.f32.mrb[0].mxu0
        %v2781 = vadd.f32 0.0, %v2780
        %v2782 = vpop.f32.mrb[0].mxu0
        %2783 = vmatprep.mubr.f32.mxu0 0.0
        %2784 = vmatmul.mubr.f32.gmra.mrb[0].mxu0 %v320
        %v2785 = vpop.f32.mrb[0].mxu0
        %v2786 = vadd.f32 0.0, %v2785
        %v2787 = vpop.f32.mrb[0].mxu0
        %2788 = vmatprep.mubr.f32.mxu0 0.0
        %2789 = vmatmul.mubr.f32.gmra.mrb[0].mxu0 %v323
        %v2790 = vpop.f32.mrb[0].mxu0
        %v2791 = vadd.f32 0.0, %v2790
        %v2792 = vpop.f32.mrb[0].mxu0
        %2793 = vmatprep.mubr.f32.mxu0 0.0
        %2794 = vmatmul.mubr.f32.gmra.mrb[0].mxu0 %v326
        %v2795 = vpop.f32.mrb[0].mxu0
        %v2796 = vadd.f32 0.0, %v2795
        %v2797 = vpop.f32.mrb[0].mxu0
        %2798 = vmatprep.mubr.f32.mxu0 0.0
        %2799 = vmatmul.mubr.f32.gmra.mrb[0].mxu0 %v329
        %v2800 = vpop.f32.mrb[0].mxu0
        %v2801 = vadd.f32 0.0, %v2800
        %v2802 = vpop.f32.mrb[0].mxu0
        %2803 = vmatprep.mubr.f32.mxu0 0.0
        %2804 = vmatmul.mubr.f32.gmra.mrb[0].mxu0 %v332
        %v2805 = vpop.f32.mrb[0].mxu0
        %v2806 = vadd.f32 0.0, %v2805
        %v2807 = vpop.f32.mrb[0].mxu0
        %2808 = vmatprep.mubr.f32.mxu0 0.0
        %2809 = vmatmul.mubr.f32.gmra.mrb[0].mxu0 %v335
        %v2810 = vpop.f32.mrb[0].mxu0
        %v2811 = vadd.f32 0.0, %v2810
        %v2812 = vpop.f32.mrb[0].mxu0
        %2813 = vmatprep.mubr.f32.mxu0 0.0
        %2814 = vmatmul.mubr.f32.gmra.mrb[0].mxu0 %v338
        %v2815 = vpop.f32.mrb[0].mxu0
        %v2816 = vadd.f32 0.0, %v2815
        %v2817 = vpop.f32.mrb[0].mxu0
        %2818 = vmatprep.mubr.f32.mxu0 0.0
        %2819 = vmatmul.mubr.f32.gmra.mrb[0].mxu0 %v341
        %v2820 = vpop.f32.mrb[0].mxu0
        %v2821 = vadd.f32 0.0, %v2820
        %v2822 = vpop.f32.mrb[0].mxu0
        %2823 = vmatprep.mubr.f32.mxu0 0.0
        %2824 = vmatmul.mubr.f32.gmra.mrb[0].mxu0 %v344
        %v2825 = vpop.f32.mrb[0].mxu0
        %v2826 = vadd.f32 0.0, %v2825
        %v2827 = vpop.f32.mrb[0].mxu0
        %2828 = vmatprep.mubr.f32.mxu0 0.0
        %2829 = vmatmul.mubr.f32.gmra.mrb[0].mxu0 %v347
        %v2830 = vpop.f32.mrb[0].mxu0
        %v2831 = vadd.f32 0.0, %v2830
        %v2832 = vpop.f32.mrb[0].mxu0
        %2833 = vmatprep.mubr.f32.mxu0 0.0
        %2834 = vmatmul.mubr.f32.gmra.mrb[0].mxu0 %v350
        %v2835 = vpop.f32.mrb[0].mxu0
        %v2836 = vadd.f32 0.0, %v2835
        %v2837 = vpop.f32.mrb[0].mxu0
        %2838 = vmatprep.mubr.f32.mxu0 0.0
        %2839 = vmatmul.mubr.f32.gmra.mrb[0].mxu0 %v353
        %v2840 = vpop.f32.mrb[0].mxu0
        %v2841 = vadd.f32 0.0, %v2840
        %v2842 = vpop.f32.mrb[0].mxu0
        %2843 = vmatprep.mubr.f32.mxu0 0.0
        %2844 = vmatmul.mubr.f32.gmra.mrb[0].mxu0 %v356
        %v2845 = vpop.f32.mrb[0].mxu0
        %v2846 = vadd.f32 0.0, %v2845
        %v2847 = vpop.f32.mrb[0].mxu0
        %2848 = vmatprep.mubr.f32.mxu0 0.0
        %2849 = vmatmul.mubr.f32.gmra.mrb[0].mxu0 %v359
        %v2850 = vpop.f32.mrb[0].mxu0
        %v2851 = vadd.f32 0.0, %v2850
        %v2852 = vpop.f32.mrb[0].mxu0
        %2853 = vmatprep.mubr.f32.mxu0 0.0
        %2854 = vmatmul.mubr.f32.gmra.mrb[0].mxu0 %v362
        %v2855 = vpop.f32.mrb[0].mxu0
        %v2856 = vadd.f32 0.0, %v2855
        %v2857 = vpop.f32.mrb[0].mxu0
        %2858 = vmatprep.mubr.f32.mxu0 0.0
        %2859 = vmatmul.mubr.f32.gmra.mrb[0].mxu0 %v365
        %v2860 = vpop.f32.mrb[0].mxu0
        %v2861 = vadd.f32 0.0, %v2860
        %v2862 = vpop.f32.mrb[0].mxu0
        %2863 = vmatprep.mubr.f32.mxu0 0.0
        %2864 = vmatmul.mubr.f32.gmra.mrb[0].mxu0 %v368
        %v2865 = vpop.f32.mrb[0].mxu0
        %v2866 = vadd.f32 0.0, %v2865
        %v2867 = vpop.f32.mrb[0].mxu0
        %2868 = vmatprep.mubr.f32.mxu0 0.0
        %2869 = vmatmul.mubr.f32.gmra.mrb[0].mxu0 %v371
        %v2870 = vpop.f32.mrb[0].mxu0
        %v2871 = vadd.f32 0.0, %v2870
        %v2872 = vpop.f32.mrb[0].mxu0
        %2873 = vmatprep.mubr.f32.mxu0 0.0
        %2874 = vmatmul.mubr.f32.gmra.mrb[0].mxu0 %v374
        %v2875 = vpop.f32.mrb[0].mxu0
        %v2876 = vadd.f32 0.0, %v2875
        %v2877 = vpop.f32.mrb[0].mxu0
        %2878 = vmatprep.mubr.f32.mxu0 0.0
        %2879 = vmatmul.mubr.f32.gmra.mrb[0].mxu0 %v377
        %v2880 = vpop.f32.mrb[0].mxu0
        %v2881 = vadd.f32 0.0, %v2880
        %v2882 = vpop.f32.mrb[0].mxu0
        %2883 = vmatprep.mubr.f32.mxu0 0.0
        %2884 = vmatmul.mubr.f32.gmra.mrb[0].mxu0 %v380
        %v2885 = vpop.f32.mrb[0].mxu0
        %v2886 = vadd.f32 0.0, %v2885
        %v2887 = vpop.f32.mrb[0].mxu0
        %2888 = vmatprep.mubr.f32.mxu0 0.0
        %2889 = vmatmul.mubr.f32.gmra.mrb[0].mxu0 %v383
        %v2890 = vpop.f32.mrb[0].mxu0
        %v2891 = vadd.f32 0.0, %v2890
        %v2892 = vpop.f32.mrb[0].mxu0
        %2893 = vmatprep.mubr.f32.mxu0 0.0
        %2894 = vmatmul.mubr.f32.gmra.mrb[0].mxu0 %v386
        %v2895 = vpop.f32.mrb[0].mxu0
        %v2896 = vadd.f32 0.0, %v2895
        %v2897 = vpop.f32.mrb[0].mxu0
        %2898 = vmatprep.mubr.f32.mxu0 0.0
        %2899 = vmatmul.mubr.f32.gmra.mrb[0].mxu0 %v389
        %v2900 = vpop.f32.mrb[0].mxu0
        %v2901 = vadd.f32 0.0, %v2900
        %v2902 = vpop.f32.mrb[0].mxu0
        %2903 = vmatprep.mubr.f32.mxu0 0.0
        %2904 = vmatmul.mubr.f32.gmra.mrb[0].mxu0 %v392
        %v2905 = vpop.f32.mrb[0].mxu0
        %v2906 = vadd.f32 0.0, %v2905
        %v2907 = vpop.f32.mrb[0].mxu0
        %2908 = vmatprep.mubr.f32.mxu0 0.0
        %2909 = vmatmul.mubr.f32.gmra.mrb[0].mxu0 %v395
        %v2910 = vpop.f32.mrb[0].mxu0
        %v2911 = vadd.f32 0.0, %v2910
        %v2912 = vpop.f32.mrb[0].mxu0
        %2913 = vdwg.mxu0
        %v2915 = vsel %vm397, %v2603, 0
        %2917 = vmatprep.subr.mxu0 0.0
        %2918 = vmatpush1.msra.mxu0 %v2915
        %2919 = vmatprep.subr.mxu0 0.0
        %2920 = vmatpush1.msra.mxu0 0.0
        %2921 = vmatprep.subr.mxu0 0.0
        %2922 = vmatpush1.msra.mxu0 0.0
        %2923 = vmatprep.subr.mxu0 0.0
        %2924 = vmatpush1.msra.mxu0 0.0
        %2925 = vmatprep.subr.mxu0 0.0
        %2926 = vmatpush1.msra.mxu0 0.0
        %2927 = vmatprep.subr.mxu0 0.0
        %2928 = vmatpush1.msra.mxu0 0.0
        %2929 = vmatprep.subr.mxu0 0.0
        %2930 = vmatpush1.msra.mxu0 0.0
        %2931 = vmatprep.subr.mxu0 0.0
        %2932 = vmatpush1.msra.mxu0 0.0
        %2933 = vmatprep.subr.mxu0 0.0
        %2934 = vmatpush1.msra.mxu0 0.0
        %2935 = vmatprep.subr.mxu0 0.0
        %2936 = vmatpush1.msra.mxu0 0.0
        %2937 = vmatprep.subr.mxu0 0.0
        %2938 = vmatpush1.msra.mxu0 0.0
        %2939 = vmatprep.subr.mxu0 0.0
        %2940 = vmatpush1.msra.mxu0 0.0
        %2941 = vmatprep.subr.mxu0 0.0
        %2942 = vmatpush1.msra.mxu0 0.0
        %2943 = vmatprep.subr.mxu0 0.0
        %2944 = vmatpush1.msra.mxu0 0.0
        %2945 = vmatprep.subr.mxu0 0.0
        %2946 = vmatpush1.msra.mxu0 0.0
        %2947 = vmatprep.subr.mxu0 0.0
        %2948 = vmatpush1.msra.mxu0 0.0
        %2949 = vmatprep.subr.mxu0 0.0
        %2950 = vmatpush1.msra.mxu0 0.0
        %2951 = vmatprep.subr.mxu0 0.0
        %2952 = vmatpush1.msra.mxu0 0.0
        %2953 = vmatprep.subr.mxu0 0.0
        %2954 = vmatpush1.msra.mxu0 0.0
        %2955 = vmatprep.subr.mxu0 0.0
        %2956 = vmatpush1.msra.mxu0 0.0
        %2957 = vmatprep.subr.mxu0 0.0
        %2958 = vmatpush1.msra.mxu0 0.0
        %2959 = vmatprep.subr.mxu0 0.0
        %2960 = vmatpush1.msra.mxu0 0.0
        %2961 = vmatprep.subr.mxu0 0.0
        %2962 = vmatpush1.msra.mxu0 0.0
        %2963 = vmatprep.subr.mxu0 0.0
        %2964 = vmatpush1.msra.mxu0 0.0
        %2965 = vmatprep.subr.mxu0 0.0
        %2966 = vmatpush1.msra.mxu0 0.0
        %2967 = vmatprep.subr.mxu0 0.0
        %2968 = vmatpush1.msra.mxu0 0.0
        %2969 = vmatprep.subr.mxu0 0.0
        %2970 = vmatpush1.msra.mxu0 0.0
        %2971 = vmatprep.subr.mxu0 0.0
        %2972 = vmatpush1.msra.mxu0 0.0
        %2973 = vmatprep.subr.mxu0 0.0
        %2974 = vmatpush1.msra.mxu0 0.0
        %2975 = vmatprep.subr.mxu0 0.0
        %2976 = vmatpush1.msra.mxu0 0.0
        %2977 = vmatprep.subr.mxu0 0.0
        %2978 = vmatpush1.msra.mxu0 0.0
        %2979 = vmatprep.subr.mxu0 0.0
        %2980 = vmatpush1.msra.mxu0 0.0
        %2981 = vmatprep.mubr.f32.mxu0 0.0
        %2982 = vmatmul.mubr.f32.gmra.mrb[0].mxu0 %v691
        %v2983 = vpop.f32.mrb[0].mxu0
        %v2984 = vadd.f32 %v2676, %v2983
        %v2985 = vpop.f32.mrb[0].mxu0
        %2986 = vmatprep.mubr.f32.mxu0 0.0
        %2987 = vmatmul.mubr.f32.gmra.mrb[0].mxu0 %v694
        %v2988 = vpop.f32.mrb[0].mxu0
        %v2989 = vadd.f32 %v2681, %v2988
        %v2990 = vpop.f32.mrb[0].mxu0
        %2991 = vmatprep.mubr.f32.mxu0 0.0
        %2992 = vmatmul.mubr.f32.gmra.mrb[0].mxu0 %v697
        %v2993 = vpop.f32.mrb[0].mxu0
        %v2994 = vadd.f32 %v2686, %v2993
        %v2995 = vpop.f32.mrb[0].mxu0
        %2996 = vmatprep.mubr.f32.mxu0 0.0
        %2997 = vmatmul.mubr.f32.gmra.mrb[0].mxu0 %v254
        %v2998 = vpop.f32.mrb[0].mxu0
        %v2999 = vadd.f32 %v2691, %v2998
        %v3000 = vpop.f32.mrb[0].mxu0
        %3001 = vmatprep.mubr.f32.mxu0 0.0
        %3002 = vmatmul.mubr.f32.gmra.mrb[0].mxu0 %v257
        %v3003 = vpop.f32.mrb[0].mxu0
        %v3004 = vadd.f32 %v2696, %v3003
        %v3005 = vpop.f32.mrb[0].mxu0
        %3006 = vmatprep.mubr.f32.mxu0 0.0
        %3007 = vmatmul.mubr.f32.gmra.mrb[0].mxu0 %v260
        %v3008 = vpop.f32.mrb[0].mxu0
        %v3009 = vadd.f32 %v2701, %v3008
        %v3010 = vpop.f32.mrb[0].mxu0
        %3011 = vmatprep.mubr.f32.mxu0 0.0
        %3012 = vmatmul.mubr.f32.gmra.mrb[0].mxu0 %v263
        %v3013 = vpop.f32.mrb[0].mxu0
        %v3014 = vadd.f32 %v2706, %v3013
        %v3015 = vpop.f32.mrb[0].mxu0
        %3016 = vmatprep.mubr.f32.mxu0 0.0
        %3017 = vmatmul.mubr.f32.gmra.mrb[0].mxu0 %v266
        %v3018 = vpop.f32.mrb[0].mxu0
        %v3019 = vadd.f32 %v2711, %v3018
        %v3020 = vpop.f32.mrb[0].mxu0
        %3021 = vmatprep.mubr.f32.mxu0 0.0
        %3022 = vmatmul.mubr.f32.gmra.mrb[0].mxu0 %v269
        %v3023 = vpop.f32.mrb[0].mxu0
        %v3024 = vadd.f32 %v2716, %v3023
        %v3025 = vpop.f32.mrb[0].mxu0
        %3026 = vmatprep.mubr.f32.mxu0 0.0
        %3027 = vmatmul.mubr.f32.gmra.mrb[0].mxu0 %v272
        %v3028 = vpop.f32.mrb[0].mxu0
        %v3029 = vadd.f32 %v2721, %v3028
        %v3030 = vpop.f32.mrb[0].mxu0
        %3031 = vmatprep.mubr.f32.mxu0 0.0
        %3032 = vmatmul.mubr.f32.gmra.mrb[0].mxu0 %v275
        %v3033 = vpop.f32.mrb[0].mxu0
        %v3034 = vadd.f32 %v2726, %v3033
        %v3035 = vpop.f32.mrb[0].mxu0
        %3036 = vmatprep.mubr.f32.mxu0 0.0
        %3037 = vmatmul.mubr.f32.gmra.mrb[0].mxu0 %v278
        %v3038 = vpop.f32.mrb[0].mxu0
        %v3039 = vadd.f32 %v2731, %v3038
        %v3040 = vpop.f32.mrb[0].mxu0
        %3041 = vmatprep.mubr.f32.mxu0 0.0
        %3042 = vmatmul.mubr.f32.gmra.mrb[0].mxu0 %v281
        %v3043 = vpop.f32.mrb[0].mxu0
        %v3044 = vadd.f32 %v2736, %v3043
        %v3045 = vpop.f32.mrb[0].mxu0
        %3046 = vmatprep.mubr.f32.mxu0 0.0
        %3047 = vmatmul.mubr.f32.gmra.mrb[0].mxu0 %v284
        %v3048 = vpop.f32.mrb[0].mxu0
        %v3049 = vadd.f32 %v2741, %v3048
        %v3050 = vpop.f32.mrb[0].mxu0
        %3051 = vmatprep.mubr.f32.mxu0 0.0
        %3052 = vmatmul.mubr.f32.gmra.mrb[0].mxu0 %v287
        %v3053 = vpop.f32.mrb[0].mxu0
        %v3054 = vadd.f32 %v2746, %v3053
        %v3055 = vpop.f32.mrb[0].mxu0
        %3056 = vmatprep.mubr.f32.mxu0 0.0
        %3057 = vmatmul.mubr.f32.gmra.mrb[0].mxu0 %v290
        %v3058 = vpop.f32.mrb[0].mxu0
        %v3059 = vadd.f32 %v2751, %v3058
        %v3060 = vpop.f32.mrb[0].mxu0
        %3061 = vmatprep.mubr.f32.mxu0 0.0
        %3062 = vmatmul.mubr.f32.gmra.mrb[0].mxu0 %v293
        %v3063 = vpop.f32.mrb[0].mxu0
        %v3064 = vadd.f32 %v2756, %v3063
        %v3065 = vpop.f32.mrb[0].mxu0
        %3066 = vmatprep.mubr.f32.mxu0 0.0
        %3067 = vmatmul.mubr.f32.gmra.mrb[0].mxu0 %v296
        %v3068 = vpop.f32.mrb[0].mxu0
        %v3069 = vadd.f32 %v2761, %v3068
        %v3070 = vpop.f32.mrb[0].mxu0
        %3071 = vmatprep.mubr.f32.mxu0 0.0
        %3072 = vmatmul.mubr.f32.gmra.mrb[0].mxu0 %v299
        %v3073 = vpop.f32.mrb[0].mxu0
        %v3074 = vadd.f32 %v2766, %v3073
        %v3075 = vpop.f32.mrb[0].mxu0
        %3076 = vmatprep.mubr.f32.mxu0 0.0
        %3077 = vmatmul.mubr.f32.gmra.mrb[0].mxu0 %v302
        %v3078 = vpop.f32.mrb[0].mxu0
        %v3079 = vadd.f32 %v2771, %v3078
        %v3080 = vpop.f32.mrb[0].mxu0
        %3081 = vmatprep.mubr.f32.mxu0 0.0
        %3082 = vmatmul.mubr.f32.gmra.mrb[0].mxu0 %v305
        %v3083 = vpop.f32.mrb[0].mxu0
        %v3084 = vadd.f32 %v2776, %v3083
        %v3085 = vpop.f32.mrb[0].mxu0
        %3086 = vmatprep.mubr.f32.mxu0 0.0
        %3087 = vmatmul.mubr.f32.gmra.mrb[0].mxu0 %v308
        %v3088 = vpop.f32.mrb[0].mxu0
        %v3089 = vadd.f32 %v2781, %v3088
        %v3090 = vpop.f32.mrb[0].mxu0
        %3091 = vmatprep.mubr.f32.mxu0 0.0
        %3092 = vmatmul.mubr.f32.gmra.mrb[0].mxu0 %v311
        %v3093 = vpop.f32.mrb[0].mxu0
        %v3094 = vadd.f32 %v2786, %v3093
        %v3095 = vpop.f32.mrb[0].mxu0
        %3096 = vmatprep.mubr.f32.mxu0 0.0
        %3097 = vmatmul.mubr.f32.gmra.mrb[0].mxu0 %v314
        %v3098 = vpop.f32.mrb[0].mxu0
        %v3099 = vadd.f32 %v2791, %v3098
        %v3100 = vpop.f32.mrb[0].mxu0
        %3101 = vmatprep.mubr.f32.mxu0 0.0
        %3102 = vmatmul.mubr.f32.gmra.mrb[0].mxu0 %v317
        %v3103 = vpop.f32.mrb[0].mxu0
        %v3104 = vadd.f32 %v2796, %v3103
        %v3105 = vpop.f32.mrb[0].mxu0
        %3106 = vmatprep.mubr.f32.mxu0 0.0
        %3107 = vmatmul.mubr.f32.gmra.mrb[0].mxu0 %v320
        %v3108 = vpop.f32.mrb[0].mxu0
        %v3109 = vadd.f32 %v2801, %v3108
        %v3110 = vpop.f32.mrb[0].mxu0
        %3111 = vmatprep.mubr.f32.mxu0 0.0
        %3112 = vmatmul.mubr.f32.gmra.mrb[0].mxu0 %v323
        %v3113 = vpop.f32.mrb[0].mxu0
        %v3114 = vadd.f32 %v2806, %v3113
        %v3115 = vpop.f32.mrb[0].mxu0
        %3116 = vmatprep.mubr.f32.mxu0 0.0
        %3117 = vmatmul.mubr.f32.gmra.mrb[0].mxu0 %v326
        %v3118 = vpop.f32.mrb[0].mxu0
        %v3119 = vadd.f32 %v2811, %v3118
        %v3120 = vpop.f32.mrb[0].mxu0
        %3121 = vmatprep.mubr.f32.mxu0 0.0
        %3122 = vmatmul.mubr.f32.gmra.mrb[0].mxu0 %v329
        %v3123 = vpop.f32.mrb[0].mxu0
        %v3124 = vadd.f32 %v2816, %v3123
        %v3125 = vpop.f32.mrb[0].mxu0
        %3126 = vmatprep.mubr.f32.mxu0 0.0
        %3127 = vmatmul.mubr.f32.gmra.mrb[0].mxu0 %v332
        %v3128 = vpop.f32.mrb[0].mxu0
        %v3129 = vadd.f32 %v2821, %v3128
        %v3130 = vpop.f32.mrb[0].mxu0
        %3131 = vmatprep.mubr.f32.mxu0 0.0
        %3132 = vmatmul.mubr.f32.gmra.mrb[0].mxu0 %v335
        %v3133 = vpop.f32.mrb[0].mxu0
        %v3134 = vadd.f32 %v2826, %v3133
        %v3135 = vpop.f32.mrb[0].mxu0
        %3136 = vmatprep.mubr.f32.mxu0 0.0
        %3137 = vmatmul.mubr.f32.gmra.mrb[0].mxu0 %v338
        %v3138 = vpop.f32.mrb[0].mxu0
        %v3139 = vadd.f32 %v2831, %v3138
        %v3140 = vpop.f32.mrb[0].mxu0
        %3141 = vmatprep.mubr.f32.mxu0 0.0
        %3142 = vmatmul.mubr.f32.gmra.mrb[0].mxu0 %v341
        %v3143 = vpop.f32.mrb[0].mxu0
        %v3144 = vadd.f32 %v2836, %v3143
        %v3145 = vpop.f32.mrb[0].mxu0
        %3146 = vmatprep.mubr.f32.mxu0 0.0
        %3147 = vmatmul.mubr.f32.gmra.mrb[0].mxu0 %v344
        %v3148 = vpop.f32.mrb[0].mxu0
        %v3149 = vadd.f32 %v2841, %v3148
        %v3150 = vpop.f32.mrb[0].mxu0
        %3151 = vmatprep.mubr.f32.mxu0 0.0
        %3152 = vmatmul.mubr.f32.gmra.mrb[0].mxu0 %v347
        %v3153 = vpop.f32.mrb[0].mxu0
        %v3154 = vadd.f32 %v2846, %v3153
        %v3155 = vpop.f32.mrb[0].mxu0
        %3156 = vmatprep.mubr.f32.mxu0 0.0
        %3157 = vmatmul.mubr.f32.gmra.mrb[0].mxu0 %v350
        %v3158 = vpop.f32.mrb[0].mxu0
        %v3159 = vadd.f32 %v2851, %v3158
        %v3160 = vpop.f32.mrb[0].mxu0
        %3161 = vmatprep.mubr.f32.mxu0 0.0
        %3162 = vmatmul.mubr.f32.gmra.mrb[0].mxu0 %v353
        %v3163 = vpop.f32.mrb[0].mxu0
        %v3164 = vadd.f32 %v2856, %v3163
        %v3165 = vpop.f32.mrb[0].mxu0
        %3166 = vmatprep.mubr.f32.mxu0 0.0
        %3167 = vmatmul.mubr.f32.gmra.mrb[0].mxu0 %v356
        %v3168 = vpop.f32.mrb[0].mxu0
        %v3169 = vadd.f32 %v2861, %v3168
        %v3170 = vpop.f32.mrb[0].mxu0
        %3171 = vmatprep.mubr.f32.mxu0 0.0
        %3172 = vmatmul.mubr.f32.gmra.mrb[0].mxu0 %v359
        %v3173 = vpop.f32.mrb[0].mxu0
        %v3174 = vadd.f32 %v2866, %v3173
        %v3175 = vpop.f32.mrb[0].mxu0
        %3176 = vmatprep.mubr.f32.mxu0 0.0
        %3177 = vmatmul.mubr.f32.gmra.mrb[0].mxu0 %v362
        %v3178 = vpop.f32.mrb[0].mxu0
        %v3179 = vadd.f32 %v2871, %v3178
        %v3180 = vpop.f32.mrb[0].mxu0
        %3181 = vmatprep.mubr.f32.mxu0 0.0
        %3182 = vmatmul.mubr.f32.gmra.mrb[0].mxu0 %v365
        %v3183 = vpop.f32.mrb[0].mxu0
        %v3184 = vadd.f32 %v2876, %v3183
        %v3185 = vpop.f32.mrb[0].mxu0
        %3186 = vmatprep.mubr.f32.mxu0 0.0
        %3187 = vmatmul.mubr.f32.gmra.mrb[0].mxu0 %v368
        %v3188 = vpop.f32.mrb[0].mxu0
        %v3189 = vadd.f32 %v2881, %v3188
        %v3190 = vpop.f32.mrb[0].mxu0
        %3191 = vmatprep.mubr.f32.mxu0 0.0
        %3192 = vmatmul.mubr.f32.gmra.mrb[0].mxu0 %v371
        %v3193 = vpop.f32.mrb[0].mxu0
        %v3194 = vadd.f32 %v2886, %v3193
        %v3195 = vpop.f32.mrb[0].mxu0
        %3196 = vmatprep.mubr.f32.mxu0 0.0
        %3197 = vmatmul.mubr.f32.gmra.mrb[0].mxu0 %v374
        %v3198 = vpop.f32.mrb[0].mxu0
        %v3199 = vadd.f32 %v2891, %v3198
        %v3200 = vpop.f32.mrb[0].mxu0
        %3201 = vmatprep.mubr.f32.mxu0 0.0
        %3202 = vmatmul.mubr.f32.gmra.mrb[0].mxu0 %v377
        %v3203 = vpop.f32.mrb[0].mxu0
        %v3204 = vadd.f32 %v2896, %v3203
        %v3205 = vpop.f32.mrb[0].mxu0
        %3206 = vmatprep.mubr.f32.mxu0 0.0
        %3207 = vmatmul.mubr.f32.gmra.mrb[0].mxu0 %v380
        %v3208 = vpop.f32.mrb[0].mxu0
        %v3209 = vadd.f32 %v2901, %v3208
        %v3210 = vpop.f32.mrb[0].mxu0
        %3211 = vmatprep.mubr.f32.mxu0 0.0
        %3212 = vmatmul.mubr.f32.gmra.mrb[0].mxu0 %v383
        %v3213 = vpop.f32.mrb[0].mxu0
        %v3214 = vadd.f32 %v2906, %v3213
        %v3215 = vpop.f32.mrb[0].mxu0
        %3216 = vmatprep.mubr.f32.mxu0 0.0
        %3217 = vmatmul.mubr.f32.gmra.mrb[0].mxu0 %v386
        %v3218 = vpop.f32.mrb[0].mxu0
        %v3219 = vadd.f32 %v2911, %v3218
        %v3220 = vpop.f32.mrb[0].mxu0
        %3221 = vdwg.mxu0
        %s3222 = scalar_lea.vmem [#allocation5], 32
        %v3223 = vld [vmem:[%s3222] sm:$0xf]
        %v3225 = vsel %vm397, %v3223, 0
        %3227 = vmatprep.subr.mxu0 0.0
        %3228 = vmatpush1.msra.mxu0 %v3225
        %3229 = vmatprep.subr.mxu0 0.0
        %3230 = vmatpush1.msra.mxu0 0.0
        %3231 = vmatprep.subr.mxu0 0.0
        %3232 = vmatpush1.msra.mxu0 0.0
        %3233 = vmatprep.subr.mxu0 0.0
        %3234 = vmatpush1.msra.mxu0 0.0
        %3235 = vmatprep.subr.mxu0 0.0
        %3236 = vmatpush1.msra.mxu0 0.0
        %3237 = vmatprep.subr.mxu0 0.0
        %3238 = vmatpush1.msra.mxu0 0.0
        %3239 = vmatprep.subr.mxu0 0.0
        %3240 = vmatpush1.msra.mxu0 0.0
        %3241 = vmatprep.subr.mxu0 0.0
        %3242 = vmatpush1.msra.mxu0 0.0
        %3243 = vmatprep.subr.mxu0 0.0
        %3244 = vmatpush1.msra.mxu0 0.0
        %3245 = vmatprep.subr.mxu0 0.0
        %3246 = vmatpush1.msra.mxu0 0.0
        %3247 = vmatprep.subr.mxu0 0.0
        %3248 = vmatpush1.msra.mxu0 0.0
        %3249 = vmatprep.subr.mxu0 0.0
        %3250 = vmatpush1.msra.mxu0 0.0
        %3251 = vmatprep.subr.mxu0 0.0
        %3252 = vmatpush1.msra.mxu0 0.0
        %3253 = vmatprep.subr.mxu0 0.0
        %3254 = vmatpush1.msra.mxu0 0.0
        %3255 = vmatprep.subr.mxu0 0.0
        %3256 = vmatpush1.msra.mxu0 0.0
        %3257 = vmatprep.subr.mxu0 0.0
        %3258 = vmatpush1.msra.mxu0 0.0
        %3259 = vmatprep.subr.mxu0 0.0
        %3260 = vmatpush1.msra.mxu0 0.0
        %3261 = vmatprep.subr.mxu0 0.0
        %3262 = vmatpush1.msra.mxu0 0.0
        %3263 = vmatprep.subr.mxu0 0.0
        %3264 = vmatpush1.msra.mxu0 0.0
        %3265 = vmatprep.subr.mxu0 0.0
        %3266 = vmatpush1.msra.mxu0 0.0
        %3267 = vmatprep.subr.mxu0 0.0
        %3268 = vmatpush1.msra.mxu0 0.0
        %3269 = vmatprep.subr.mxu0 0.0
        %3270 = vmatpush1.msra.mxu0 0.0
        %3271 = vmatprep.subr.mxu0 0.0
        %3272 = vmatpush1.msra.mxu0 0.0
        %3273 = vmatprep.subr.mxu0 0.0
        %3274 = vmatpush1.msra.mxu0 0.0
        %3275 = vmatprep.subr.mxu0 0.0
        %3276 = vmatpush1.msra.mxu0 0.0
        %3277 = vmatprep.subr.mxu0 0.0
        %3278 = vmatpush1.msra.mxu0 0.0
        %3279 = vmatprep.subr.mxu0 0.0
        %3280 = vmatpush1.msra.mxu0 0.0
        %3281 = vmatprep.subr.mxu0 0.0
        %3282 = vmatpush1.msra.mxu0 0.0
        %3283 = vmatprep.subr.mxu0 0.0
        %3284 = vmatpush1.msra.mxu0 0.0
        %3285 = vmatprep.subr.mxu0 0.0
        %3286 = vmatpush1.msra.mxu0 0.0
        %3287 = vmatprep.subr.mxu0 0.0
        %3288 = vmatpush1.msra.mxu0 0.0
        %3289 = vmatprep.subr.mxu0 0.0
        %3290 = vmatpush1.msra.mxu0 0.0
        %3291 = vmatprep.mubr.f32.mxu0 0.0
        %3292 = vmatmul.mubr.f32.gmra.mrb[0].mxu0 %v1042
        %v3293 = vpop.f32.mrb[0].mxu0
        %v3294 = vadd.f32 0.0, %v3293
        %v3295 = vpop.f32.mrb[0].mxu0
        %3296 = vmatprep.mubr.f32.mxu0 0.0
        %3297 = vmatmul.mubr.f32.gmra.mrb[0].mxu0 %v1045
        %v3298 = vpop.f32.mrb[0].mxu0
        %v3299 = vadd.f32 0.0, %v3298
        %v3300 = vpop.f32.mrb[0].mxu0
        %3301 = vmatprep.mubr.f32.mxu0 0.0
        %3302 = vmatmul.mubr.f32.gmra.mrb[0].mxu0 %v1048
        %v3303 = vpop.f32.mrb[0].mxu0
        %v3304 = vadd.f32 0.0, %v3303
        %v3305 = vpop.f32.mrb[0].mxu0
        %3306 = vmatprep.mubr.f32.mxu0 0.0
        %3307 = vmatmul.mubr.f32.gmra.mrb[0].mxu0 %v1051
        %v3308 = vpop.f32.mrb[0].mxu0
        %v3309 = vadd.f32 0.0, %v3308
        %v3310 = vpop.f32.mrb[0].mxu0
        %3311 = vmatprep.mubr.f32.mxu0 0.0
        %3312 = vmatmul.mubr.f32.gmra.mrb[0].mxu0 %v1054
        %v3313 = vpop.f32.mrb[0].mxu0
        %v3314 = vadd.f32 0.0, %v3313
        %v3315 = vpop.f32.mrb[0].mxu0
        %3316 = vmatprep.mubr.f32.mxu0 0.0
        %3317 = vmatmul.mubr.f32.gmra.mrb[0].mxu0 %v1057
        %v3318 = vpop.f32.mrb[0].mxu0
        %v3319 = vadd.f32 0.0, %v3318
        %v3320 = vpop.f32.mrb[0].mxu0
        %3321 = vmatprep.mubr.f32.mxu0 0.0
        %3322 = vmatmul.mubr.f32.gmra.mrb[0].mxu0 %v1060
        %v3323 = vpop.f32.mrb[0].mxu0
        %v3324 = vadd.f32 0.0, %v3323
        %v3325 = vpop.f32.mrb[0].mxu0
        %3326 = vmatprep.mubr.f32.mxu0 0.0
        %3327 = vmatmul.mubr.f32.gmra.mrb[0].mxu0 %v1063
        %v3328 = vpop.f32.mrb[0].mxu0
        %v3329 = vadd.f32 0.0, %v3328
        %v3330 = vpop.f32.mrb[0].mxu0
        %3331 = vmatprep.mubr.f32.mxu0 0.0
        %3332 = vmatmul.mubr.f32.gmra.mrb[0].mxu0 %v1066
        %v3333 = vpop.f32.mrb[0].mxu0
        %v3334 = vadd.f32 0.0, %v3333
        %v3335 = vpop.f32.mrb[0].mxu0
        %3336 = vmatprep.mubr.f32.mxu0 0.0
        %3337 = vmatmul.mubr.f32.gmra.mrb[0].mxu0 %v1069
        %v3338 = vpop.f32.mrb[0].mxu0
        %v3339 = vadd.f32 0.0, %v3338
        %v3340 = vpop.f32.mrb[0].mxu0
        %3341 = vmatprep.mubr.f32.mxu0 0.0
        %3342 = vmatmul.mubr.f32.gmra.mrb[0].mxu0 %v1072
        %v3343 = vpop.f32.mrb[0].mxu0
        %v3344 = vadd.f32 0.0, %v3343
        %v3345 = vpop.f32.mrb[0].mxu0
        %3346 = vmatprep.mubr.f32.mxu0 0.0
        %3347 = vmatmul.mubr.f32.gmra.mrb[0].mxu0 %v1075
        %v3348 = vpop.f32.mrb[0].mxu0
        %v3349 = vadd.f32 0.0, %v3348
        %v3350 = vpop.f32.mrb[0].mxu0
        %3351 = vmatprep.mubr.f32.mxu0 0.0
        %3352 = vmatmul.mubr.f32.gmra.mrb[0].mxu0 %v1078
        %v3353 = vpop.f32.mrb[0].mxu0
        %v3354 = vadd.f32 0.0, %v3353
        %v3355 = vpop.f32.mrb[0].mxu0
        %3356 = vmatprep.mubr.f32.mxu0 0.0
        %3357 = vmatmul.mubr.f32.gmra.mrb[0].mxu0 %v1081
        %v3358 = vpop.f32.mrb[0].mxu0
        %v3359 = vadd.f32 0.0, %v3358
        %v3360 = vpop.f32.mrb[0].mxu0
        %3361 = vmatprep.mubr.f32.mxu0 0.0
        %3362 = vmatmul.mubr.f32.gmra.mrb[0].mxu0 %v1084
        %v3363 = vpop.f32.mrb[0].mxu0
        %v3364 = vadd.f32 0.0, %v3363
        %v3365 = vpop.f32.mrb[0].mxu0
        %3366 = vmatprep.mubr.f32.mxu0 0.0
        %3367 = vmatmul.mubr.f32.gmra.mrb[0].mxu0 %v1087
        %v3368 = vpop.f32.mrb[0].mxu0
        %v3369 = vadd.f32 0.0, %v3368
        %v3370 = vpop.f32.mrb[0].mxu0
        %3371 = vmatprep.mubr.f32.mxu0 0.0
        %3372 = vmatmul.mubr.f32.gmra.mrb[0].mxu0 %v1090
        %v3373 = vpop.f32.mrb[0].mxu0
        %v3374 = vadd.f32 0.0, %v3373
        %v3375 = vpop.f32.mrb[0].mxu0
        %3376 = vmatprep.mubr.f32.mxu0 0.0
        %3377 = vmatmul.mubr.f32.gmra.mrb[0].mxu0 %v1093
        %v3378 = vpop.f32.mrb[0].mxu0
        %v3379 = vadd.f32 0.0, %v3378
        %v3380 = vpop.f32.mrb[0].mxu0
        %3381 = vmatprep.mubr.f32.mxu0 0.0
        %3382 = vmatmul.mubr.f32.gmra.mrb[0].mxu0 %v1096
        %v3383 = vpop.f32.mrb[0].mxu0
        %v3384 = vadd.f32 0.0, %v3383
        %v3385 = vpop.f32.mrb[0].mxu0
        %3386 = vmatprep.mubr.f32.mxu0 0.0
        %3387 = vmatmul.mubr.f32.gmra.mrb[0].mxu0 %v1099
        %v3388 = vpop.f32.mrb[0].mxu0
        %v3389 = vadd.f32 0.0, %v3388
        %v3390 = vpop.f32.mrb[0].mxu0
        %3391 = vmatprep.mubr.f32.mxu0 0.0
        %3392 = vmatmul.mubr.f32.gmra.mrb[0].mxu0 %v1102
        %v3393 = vpop.f32.mrb[0].mxu0
        %v3394 = vadd.f32 0.0, %v3393
        %v3395 = vpop.f32.mrb[0].mxu0
        %3396 = vmatprep.mubr.f32.mxu0 0.0
        %3397 = vmatmul.mubr.f32.gmra.mrb[0].mxu0 %v1105
        %v3398 = vpop.f32.mrb[0].mxu0
        %v3399 = vadd.f32 0.0, %v3398
        %v3400 = vpop.f32.mrb[0].mxu0
        %3401 = vmatprep.mubr.f32.mxu0 0.0
        %3402 = vmatmul.mubr.f32.gmra.mrb[0].mxu0 %v1108
        %v3403 = vpop.f32.mrb[0].mxu0
        %v3404 = vadd.f32 0.0, %v3403
        %v3405 = vpop.f32.mrb[0].mxu0
        %3406 = vmatprep.mubr.f32.mxu0 0.0
        %3407 = vmatmul.mubr.f32.gmra.mrb[0].mxu0 %v1111
        %v3408 = vpop.f32.mrb[0].mxu0
        %v3409 = vadd.f32 0.0, %v3408
        %v3410 = vpop.f32.mrb[0].mxu0
        %3411 = vmatprep.mubr.f32.mxu0 0.0
        %3412 = vmatmul.mubr.f32.gmra.mrb[0].mxu0 %v1114
        %v3413 = vpop.f32.mrb[0].mxu0
        %v3414 = vadd.f32 0.0, %v3413
        %v3415 = vpop.f32.mrb[0].mxu0
        %3416 = vmatprep.mubr.f32.mxu0 0.0
        %3417 = vmatmul.mubr.f32.gmra.mrb[0].mxu0 %v1117
        %v3418 = vpop.f32.mrb[0].mxu0
        %v3419 = vadd.f32 0.0, %v3418
        %v3420 = vpop.f32.mrb[0].mxu0
        %3421 = vmatprep.mubr.f32.mxu0 0.0
        %3422 = vmatmul.mubr.f32.gmra.mrb[0].mxu0 %v1120
        %v3423 = vpop.f32.mrb[0].mxu0
        %v3424 = vadd.f32 0.0, %v3423
        %v3425 = vpop.f32.mrb[0].mxu0
        %3426 = vmatprep.mubr.f32.mxu0 0.0
        %3427 = vmatmul.mubr.f32.gmra.mrb[0].mxu0 %v1123
        %v3428 = vpop.f32.mrb[0].mxu0
        %v3429 = vadd.f32 0.0, %v3428
        %v3430 = vpop.f32.mrb[0].mxu0
        %3431 = vmatprep.mubr.f32.mxu0 0.0
        %3432 = vmatmul.mubr.f32.gmra.mrb[0].mxu0 %v1126
        %v3433 = vpop.f32.mrb[0].mxu0
        %v3434 = vadd.f32 0.0, %v3433
        %v3435 = vpop.f32.mrb[0].mxu0
        %3436 = vmatprep.mubr.f32.mxu0 0.0
        %3437 = vmatmul.mubr.f32.gmra.mrb[0].mxu0 %v1129
        %v3438 = vpop.f32.mrb[0].mxu0
        %v3439 = vadd.f32 0.0, %v3438
        %v3440 = vpop.f32.mrb[0].mxu0
        %3441 = vmatprep.mubr.f32.mxu0 0.0
        %3442 = vmatmul.mubr.f32.gmra.mrb[0].mxu0 %v1132
        %v3443 = vpop.f32.mrb[0].mxu0
        %v3444 = vadd.f32 0.0, %v3443
        %v3445 = vpop.f32.mrb[0].mxu0
        %3446 = vmatprep.mubr.f32.mxu0 0.0
        %3447 = vmatmul.mubr.f32.gmra.mrb[0].mxu0 %v1135
        %v3448 = vpop.f32.mrb[0].mxu0
        %v3449 = vadd.f32 0.0, %v3448
        %v3450 = vpop.f32.mrb[0].mxu0
        %3451 = vmatprep.mubr.f32.mxu0 0.0
        %3452 = vmatmul.mubr.f32.gmra.mrb[0].mxu0 %v1138
        %v3453 = vpop.f32.mrb[0].mxu0
        %v3454 = vadd.f32 0.0, %v3453
        %v3455 = vpop.f32.mrb[0].mxu0
        %3456 = vmatprep.mubr.f32.mxu0 0.0
        %3457 = vmatmul.mubr.f32.gmra.mrb[0].mxu0 %v1141
        %v3458 = vpop.f32.mrb[0].mxu0
        %v3459 = vadd.f32 0.0, %v3458
        %v3460 = vpop.f32.mrb[0].mxu0
        %3461 = vmatprep.mubr.f32.mxu0 0.0
        %3462 = vmatmul.mubr.f32.gmra.mrb[0].mxu0 %v1144
        %v3463 = vpop.f32.mrb[0].mxu0
        %v3464 = vadd.f32 0.0, %v3463
        %v3465 = vpop.f32.mrb[0].mxu0
        %3466 = vmatprep.mubr.f32.mxu0 0.0
        %3467 = vmatmul.mubr.f32.gmra.mrb[0].mxu0 %v1147
        %v3468 = vpop.f32.mrb[0].mxu0
        %v3469 = vadd.f32 0.0, %v3468
        %v3470 = vpop.f32.mrb[0].mxu0
        %3471 = vmatprep.mubr.f32.mxu0 0.0
        %3472 = vmatmul.mubr.f32.gmra.mrb[0].mxu0 %v1150
        %v3473 = vpop.f32.mrb[0].mxu0
        %v3474 = vadd.f32 0.0, %v3473
        %v3475 = vpop.f32.mrb[0].mxu0
        %3476 = vmatprep.mubr.f32.mxu0 0.0
        %3477 = vmatmul.mubr.f32.gmra.mrb[0].mxu0 %v1153
        %v3478 = vpop.f32.mrb[0].mxu0
        %v3479 = vadd.f32 0.0, %v3478
        %v3480 = vpop.f32.mrb[0].mxu0
        %3481 = vmatprep.mubr.f32.mxu0 0.0
        %3482 = vmatmul.mubr.f32.gmra.mrb[0].mxu0 %v1156
        %v3483 = vpop.f32.mrb[0].mxu0
        %v3484 = vadd.f32 0.0, %v3483
        %v3485 = vpop.f32.mrb[0].mxu0
        %3486 = vmatprep.mubr.f32.mxu0 0.0
        %3487 = vmatmul.mubr.f32.gmra.mrb[0].mxu0 %v1159
        %v3488 = vpop.f32.mrb[0].mxu0
        %v3489 = vadd.f32 0.0, %v3488
        %v3490 = vpop.f32.mrb[0].mxu0
        %3491 = vmatprep.mubr.f32.mxu0 0.0
        %3492 = vmatmul.mubr.f32.gmra.mrb[0].mxu0 %v1162
        %v3493 = vpop.f32.mrb[0].mxu0
        %v3494 = vadd.f32 0.0, %v3493
        %v3495 = vpop.f32.mrb[0].mxu0
        %3496 = vmatprep.mubr.f32.mxu0 0.0
        %3497 = vmatmul.mubr.f32.gmra.mrb[0].mxu0 %v1165
        %v3498 = vpop.f32.mrb[0].mxu0
        %v3499 = vadd.f32 0.0, %v3498
        %v3500 = vpop.f32.mrb[0].mxu0
        %3501 = vmatprep.mubr.f32.mxu0 0.0
        %3502 = vmatmul.mubr.f32.gmra.mrb[0].mxu0 %v1168
        %v3503 = vpop.f32.mrb[0].mxu0
        %v3504 = vadd.f32 0.0, %v3503
        %v3505 = vpop.f32.mrb[0].mxu0
        %3506 = vmatprep.mubr.f32.mxu0 0.0
        %3507 = vmatmul.mubr.f32.gmra.mrb[0].mxu0 %v1171
        %v3508 = vpop.f32.mrb[0].mxu0
        %v3509 = vadd.f32 0.0, %v3508
        %v3510 = vpop.f32.mrb[0].mxu0
        %3511 = vmatprep.mubr.f32.mxu0 0.0
        %3512 = vmatmul.mubr.f32.gmra.mrb[0].mxu0 %v1174
        %v3513 = vpop.f32.mrb[0].mxu0
        %v3514 = vadd.f32 0.0, %v3513
        %v3515 = vpop.f32.mrb[0].mxu0
        %3516 = vmatprep.mubr.f32.mxu0 0.0
        %3517 = vmatmul.mubr.f32.gmra.mrb[0].mxu0 %v1177
        %v3518 = vpop.f32.mrb[0].mxu0
        %v3519 = vadd.f32 0.0, %v3518
        %v3520 = vpop.f32.mrb[0].mxu0
        %3521 = vmatprep.mubr.f32.mxu0 0.0
        %3522 = vmatmul.mubr.f32.gmra.mrb[0].mxu0 %v1180
        %v3523 = vpop.f32.mrb[0].mxu0
        %v3524 = vadd.f32 0.0, %v3523
        %v3525 = vpop.f32.mrb[0].mxu0
        %3526 = vmatprep.mubr.f32.mxu0 0.0
        %3527 = vmatmul.mubr.f32.gmra.mrb[0].mxu0 %v1183
        %v3528 = vpop.f32.mrb[0].mxu0
        %v3529 = vadd.f32 0.0, %v3528
        %v3530 = vpop.f32.mrb[0].mxu0
        %3531 = vdwg.mxu0
        %v3532 = vadd.f32 %v2984, %v3294
        %v3533 = vadd.f32 %v2989, %v3299
        %v3534 = vadd.f32 %v2994, %v3304
        %v3535 = vadd.f32 %v2999, %v3309
        %v3536 = vadd.f32 %v3004, %v3314
        %v3537 = vadd.f32 %v3009, %v3319
        %v3538 = vadd.f32 %v3014, %v3324
        %v3539 = vadd.f32 %v3019, %v3329
        %v3540 = vadd.f32 %v3024, %v3334
        %v3541 = vadd.f32 %v3029, %v3339
        %v3542 = vadd.f32 %v3034, %v3344
        %v3543 = vadd.f32 %v3039, %v3349
        %v3544 = vadd.f32 %v3044, %v3354
        %v3545 = vadd.f32 %v3049, %v3359
        %v3546 = vadd.f32 %v3054, %v3364
        %v3547 = vadd.f32 %v3059, %v3369
        %v3548 = vadd.f32 %v3064, %v3374
        %v3549 = vadd.f32 %v3069, %v3379
        %v3550 = vadd.f32 %v3074, %v3384
        %v3551 = vadd.f32 %v3079, %v3389
        %v3552 = vadd.f32 %v3084, %v3394
        %v3553 = vadd.f32 %v3089, %v3399
        %v3554 = vadd.f32 %v3094, %v3404
        %v3555 = vadd.f32 %v3099, %v3409
        %v3556 = vadd.f32 %v3104, %v3414
        %v3557 = vadd.f32 %v3109, %v3419
        %v3558 = vadd.f32 %v3114, %v3424
        %v3559 = vadd.f32 %v3119, %v3429
        %v3560 = vadd.f32 %v3124, %v3434
        %v3561 = vadd.f32 %v3129, %v3439
        %v3562 = vadd.f32 %v3134, %v3444
        %v3563 = vadd.f32 %v3139, %v3449
        %v3564 = vadd.f32 %v3144, %v3454
        %v3565 = vadd.f32 %v3149, %v3459
        %v3566 = vadd.f32 %v3154, %v3464
        %v3567 = vadd.f32 %v3159, %v3469
        %v3568 = vadd.f32 %v3164, %v3474
        %v3569 = vadd.f32 %v3169, %v3479
        %v3570 = vadd.f32 %v3174, %v3484
        %v3571 = vadd.f32 %v3179, %v3489
        %v3572 = vadd.f32 %v3184, %v3494
        %v3573 = vadd.f32 %v3189, %v3499
        %v3574 = vadd.f32 %v3194, %v3504
        %v3575 = vadd.f32 %v3199, %v3509
        %v3576 = vadd.f32 %v3204, %v3514
        %v3577 = vadd.f32 %v3209, %v3519
        %v3578 = vadd.f32 %v3214, %v3524
        %v3579 = vadd.f32 %v3219, %v3529
        %v3580 = vrot.slane %v3532, 2
        %v3581 = vrot.slane %v3533, 2
        %v3582 = vrot.slane %v3534, 2
        %v3583 = vrot.slane %v3535, 2
        %v3584 = vrot.slane %v3536, 2
        %v3585 = vrot.slane %v3537, 2
        %v3586 = vrot.slane %v3538, 2
        %v3587 = vrot.slane %v3539, 2
        %v3588 = vrot.slane %v3540, 2
        %v3589 = vrot.slane %v3541, 2
        %v3590 = vrot.slane %v3542, 2
        %v3591 = vrot.slane %v3543, 2
        %v3592 = vrot.slane %v3544, 2
        %v3593 = vrot.slane %v3545, 2
        %v3594 = vrot.slane %v3546, 2
        %v3595 = vrot.slane %v3547, 2
        %v3596 = vrot.slane %v3548, 2
        %v3597 = vrot.slane %v3549, 2
        %v3598 = vrot.slane %v3550, 2
        %v3599 = vrot.slane %v3551, 2
        %v3600 = vrot.slane %v3552, 2
        %v3601 = vrot.slane %v3553, 2
        %v3602 = vrot.slane %v3554, 2
        %v3603 = vrot.slane %v3555, 2
        %v3604 = vrot.slane %v3556, 2
        %v3605 = vrot.slane %v3557, 2
        %v3606 = vrot.slane %v3558, 2
        %v3607 = vrot.slane %v3559, 2
        %v3608 = vrot.slane %v3560, 2
        %v3609 = vrot.slane %v3561, 2
        %v3610 = vrot.slane %v3562, 2
        %v3611 = vrot.slane %v3563, 2
        %v3612 = vrot.slane %v3564, 2
        %v3613 = vrot.slane %v3565, 2
        %v3614 = vrot.slane %v3566, 2
        %v3615 = vrot.slane %v3567, 2
        %v3616 = vrot.slane %v3568, 2
        %v3617 = vrot.slane %v3569, 2
        %v3618 = vrot.slane %v3570, 2
        %v3619 = vrot.slane %v3571, 2
        %v3620 = vrot.slane %v3572, 2
        %v3621 = vrot.slane %v3573, 2
        %v3622 = vrot.slane %v3574, 2
        %v3623 = vrot.slane %v3575, 2
        %v3624 = vrot.slane %v3576, 2
        %v3625 = vrot.slane %v3577, 2
        %v3626 = vrot.slane %v3578, 2
        %v3627 = vrot.slane %v3579, 2
        %vm3628 = vcmp.lt.s32.totalorder %v2536, 6
        %v3629 = vsel %vm3628, %v3626, %v3627
        %v3630 = vsel %vm3628, %v3625, %v3626
        %v3631 = vsel %vm3628, %v3623, %v3624
        %v3632 = vsel %vm3628, %v3622, %v3623
        %v3633 = vsel %vm3628, %v3620, %v3621
        %v3634 = vsel %vm3628, %v3619, %v3620
        %v3635 = vsel %vm3628, %v3617, %v3618
        %v3636 = vsel %vm3628, %v3616, %v3617
        %v3637 = vsel %vm3628, %v3614, %v3615
        %v3638 = vsel %vm3628, %v3613, %v3614
        %v3639 = vsel %vm3628, %v3611, %v3612
        %v3640 = vsel %vm3628, %v3610, %v3611
        %v3641 = vsel %vm3628, %v3608, %v3609
        %v3642 = vsel %vm3628, %v3607, %v3608
        %v3643 = vsel %vm3628, %v3605, %v3606
        %v3644 = vsel %vm3628, %v3604, %v3605
        %v3645 = vsel %vm3628, %v3602, %v3603
        %v3646 = vsel %vm3628, %v3601, %v3602
        %v3647 = vsel %vm3628, %v3599, %v3600
        %v3648 = vsel %vm3628, %v3598, %v3599
        %v3649 = vsel %vm3628, %v3596, %v3597
        %v3650 = vsel %vm3628, %v3595, %v3596
        %v3651 = vsel %vm3628, %v3593, %v3594
        %v3652 = vsel %vm3628, %v3592, %v3593
        %v3653 = vsel %vm3628, %v3590, %v3591
        %v3654 = vsel %vm3628, %v3589, %v3590
        %v3655 = vsel %vm3628, %v3587, %v3588
        %v3656 = vsel %vm3628, %v3586, %v3587
        %v3657 = vsel %vm3628, %v3584, %v3585
        %v3658 = vsel %vm3628, %v3583, %v3584
        %v3659 = vsel %vm3628, %v3581, %v3582
        %v3660 = vsel %vm3628, %v3580, %v3581
        %v3661 = vadd.f32 %v2570, %v3660
        %v3662 = vadd.f32 %v2571, %v3659
        %v3663 = vadd.f32 %v2572, %v3658
        %v3664 = vadd.f32 %v2573, %v3657
        %v3665 = vadd.f32 %v2574, %v3656
        %v3666 = vadd.f32 %v2575, %v3655
        %v3667 = vadd.f32 %v2576, %v3654
        %v3668 = vadd.f32 %v2577, %v3653
        %v3669 = vadd.f32 %v2578, %v3652
        %v3670 = vadd.f32 %v2579, %v3651
        %v3671 = vadd.f32 %v2580, %v3650
        %v3672 = vadd.f32 %v2581, %v3649
        %v3673 = vadd.f32 %v2582, %v3648
        %v3674 = vadd.f32 %v2583, %v3647
        %v3675 = vadd.f32 %v2584, %v3646
        %v3676 = vadd.f32 %v2585, %v3645
        %v3677 = vadd.f32 %v2586, %v3644
        %v3678 = vadd.f32 %v2587, %v3643
        %v3679 = vadd.f32 %v2588, %v3642
        %v3680 = vadd.f32 %v2589, %v3641
        %v3681 = vadd.f32 %v2590, %v3640
        %v3682 = vadd.f32 %v2591, %v3639
        %v3683 = vadd.f32 %v2592, %v3638
        %v3684 = vadd.f32 %v2593, %v3637
        %v3685 = vadd.f32 %v2594, %v3636
        %v3686 = vadd.f32 %v2595, %v3635
        %v3687 = vadd.f32 %v2596, %v3634
        %v3688 = vadd.f32 %v2597, %v3633
        %v3689 = vadd.f32 %v2598, %v3632
        %v3690 = vadd.f32 %v2599, %v3631
        %v3691 = vadd.f32 %v2600, %v3630
        %v3692 = vadd.f32 %v2601, %v3629
        %v3693 = vsel %vm252, %v3661, 0.0
        %v3694 = vsel %vm252, %v3662, 0.0
        %v3695 = vadd.f32 %v3693, %v3694
        %v3696 = vsel %vm252, %v3663, 0.0
        %v3697 = vadd.f32 %v3695, %v3696
        %v3698 = vsel %vm252, %v3664, 0.0
        %v3699 = vadd.f32 %v3697, %v3698
        %v3700 = vsel %vm252, %v3665, 0.0
        %v3701 = vadd.f32 %v3699, %v3700
        %v3702 = vsel %vm252, %v3666, 0.0
        %v3703 = vadd.f32 %v3701, %v3702
        %v3704 = vsel %vm252, %v3667, 0.0
        %v3705 = vadd.f32 %v3703, %v3704
        %v3706 = vsel %vm252, %v3668, 0.0
        %v3707 = vadd.f32 %v3705, %v3706
        %v3708 = vsel %vm252, %v3669, 0.0
        %v3709 = vadd.f32 %v3707, %v3708
        %v3710 = vsel %vm252, %v3670, 0.0
        %v3711 = vadd.f32 %v3709, %v3710
        %v3712 = vsel %vm252, %v3671, 0.0
        %v3713 = vadd.f32 %v3711, %v3712
        %v3714 = vsel %vm252, %v3672, 0.0
        %v3715 = vadd.f32 %v3713, %v3714
        %v3716 = vsel %vm252, %v3673, 0.0
        %v3717 = vadd.f32 %v3715, %v3716
        %v3718 = vsel %vm252, %v3674, 0.0
        %v3719 = vadd.f32 %v3717, %v3718
        %v3720 = vsel %vm252, %v3675, 0.0
        %v3721 = vadd.f32 %v3719, %v3720
        %v3722 = vsel %vm252, %v3676, 0.0
        %v3723 = vadd.f32 %v3721, %v3722
        %v3724 = vsel %vm252, %v3677, 0.0
        %v3725 = vadd.f32 %v3723, %v3724
        %v3726 = vsel %vm252, %v3678, 0.0
        %v3727 = vadd.f32 %v3725, %v3726
        %v3728 = vsel %vm252, %v3679, 0.0
        %v3729 = vadd.f32 %v3727, %v3728
        %v3730 = vsel %vm252, %v3680, 0.0
        %v3731 = vadd.f32 %v3729, %v3730
        %v3732 = vsel %vm252, %v3681, 0.0
        %v3733 = vadd.f32 %v3731, %v3732
        %v3734 = vsel %vm252, %v3682, 0.0
        %v3735 = vadd.f32 %v3733, %v3734
        %v3736 = vsel %vm252, %v3683, 0.0
        %v3737 = vadd.f32 %v3735, %v3736
        %v3738 = vsel %vm252, %v3684, 0.0
        %v3739 = vadd.f32 %v3737, %v3738
        %v3740 = vsel %vm252, %v3685, 0.0
        %v3741 = vadd.f32 %v3739, %v3740
        %v3742 = vsel %vm252, %v3686, 0.0
        %v3743 = vadd.f32 %v3741, %v3742
        %v3744 = vsel %vm252, %v3687, 0.0
        %v3745 = vadd.f32 %v3743, %v3744
        %v3746 = vsel %vm252, %v3688, 0.0
        %v3747 = vadd.f32 %v3745, %v3746
        %v3748 = vsel %vm252, %v3689, 0.0
        %v3749 = vadd.f32 %v3747, %v3748
        %v3750 = vsel %vm252, %v3690, 0.0
        %v3751 = vadd.f32 %v3749, %v3750
        %v3752 = vsel %vm252, %v3691, 0.0
        %v3753 = vadd.f32 %v3751, %v3752
        %v3754 = vsel %vm252, %v3692, 0.0
        %v3755 = vadd.f32 %v3753, %v3754
        %v3756 = vrot.slane %v3755, 4
        %v3757 = vadd.f32 %v3755, %v3756
        %v3758 = vrot.slane %v3757, 2
        %v3759 = vadd.f32 %v3757, %v3758
        %v3760 = vrot.slane %v3759, 1
        %v3761 = vadd.f32 %v3759, %v3760
        %v3762 = vmul.f32 %v3661, %v3661
        %v3763 = vmul.f32 %v3662, %v3662
        %v3764 = vmul.f32 %v3663, %v3663
        %v3765 = vmul.f32 %v3664, %v3664
        %v3766 = vmul.f32 %v3665, %v3665
        %v3767 = vmul.f32 %v3666, %v3666
        %v3768 = vmul.f32 %v3667, %v3667
        %v3769 = vmul.f32 %v3668, %v3668
        %v3770 = vmul.f32 %v3669, %v3669
        %v3771 = vmul.f32 %v3670, %v3670
        %v3772 = vmul.f32 %v3671, %v3671
        %v3773 = vmul.f32 %v3672, %v3672
        %v3774 = vmul.f32 %v3673, %v3673
        %v3775 = vmul.f32 %v3674, %v3674
        %v3776 = vmul.f32 %v3675, %v3675
        %v3777 = vmul.f32 %v3676, %v3676
        %v3778 = vmul.f32 %v3677, %v3677
        %v3779 = vmul.f32 %v3678, %v3678
        %v3780 = vmul.f32 %v3679, %v3679
        %v3781 = vmul.f32 %v3680, %v3680
        %v3782 = vmul.f32 %v3681, %v3681
        %v3783 = vmul.f32 %v3682, %v3682
        %v3784 = vmul.f32 %v3683, %v3683
        %v3785 = vmul.f32 %v3684, %v3684
        %v3786 = vmul.f32 %v3685, %v3685
        %v3787 = vmul.f32 %v3686, %v3686
        %v3788 = vmul.f32 %v3687, %v3687
        %v3789 = vmul.f32 %v3688, %v3688
        %v3790 = vmul.f32 %v3689, %v3689
        %v3791 = vmul.f32 %v3690, %v3690
        %v3792 = vmul.f32 %v3691, %v3691
        %v3793 = vmul.f32 %v3692, %v3692
        %v3794 = vsel %vm252, %v3762, 0.0
        %v3795 = vsel %vm252, %v3763, 0.0
        %v3796 = vadd.f32 %v3794, %v3795
        %v3797 = vsel %vm252, %v3764, 0.0
        %v3798 = vadd.f32 %v3796, %v3797
        %v3799 = vsel %vm252, %v3765, 0.0
        %v3800 = vadd.f32 %v3798, %v3799
        %v3801 = vsel %vm252, %v3766, 0.0
        %v3802 = vadd.f32 %v3800, %v3801
        %v3803 = vsel %vm252, %v3767, 0.0
        %v3804 = vadd.f32 %v3802, %v3803
        %v3805 = vsel %vm252, %v3768, 0.0
        %v3806 = vadd.f32 %v3804, %v3805
        %v3807 = vsel %vm252, %v3769, 0.0
        %v3808 = vadd.f32 %v3806, %v3807
        %v3809 = vsel %vm252, %v3770, 0.0
        %v3810 = vadd.f32 %v3808, %v3809
        %v3811 = vsel %vm252, %v3771, 0.0
        %v3812 = vadd.f32 %v3810, %v3811
        %v3813 = vsel %vm252, %v3772, 0.0
        %v3814 = vadd.f32 %v3812, %v3813
        %v3815 = vsel %vm252, %v3773, 0.0
        %v3816 = vadd.f32 %v3814, %v3815
        %v3817 = vsel %vm252, %v3774, 0.0
        %v3818 = vadd.f32 %v3816, %v3817
        %v3819 = vsel %vm252, %v3775, 0.0
        %v3820 = vadd.f32 %v3818, %v3819
        %v3821 = vsel %vm252, %v3776, 0.0
        %v3822 = vadd.f32 %v3820, %v3821
        %v3823 = vsel %vm252, %v3777, 0.0
        %v3824 = vadd.f32 %v3822, %v3823
        %v3825 = vsel %vm252, %v3778, 0.0
        %v3826 = vadd.f32 %v3824, %v3825
        %v3827 = vsel %vm252, %v3779, 0.0
        %v3828 = vadd.f32 %v3826, %v3827
        %v3829 = vsel %vm252, %v3780, 0.0
        %v3830 = vadd.f32 %v3828, %v3829
        %v3831 = vsel %vm252, %v3781, 0.0
        %v3832 = vadd.f32 %v3830, %v3831
        %v3833 = vsel %vm252, %v3782, 0.0
        %v3834 = vadd.f32 %v3832, %v3833
        %v3835 = vsel %vm252, %v3783, 0.0
        %v3836 = vadd.f32 %v3834, %v3835
        %v3837 = vsel %vm252, %v3784, 0.0
        %v3838 = vadd.f32 %v3836, %v3837
        %v3839 = vsel %vm252, %v3785, 0.0
        %v3840 = vadd.f32 %v3838, %v3839
        %v3841 = vsel %vm252, %v3786, 0.0
        %v3842 = vadd.f32 %v3840, %v3841
        %v3843 = vsel %vm252, %v3787, 0.0
        %v3844 = vadd.f32 %v3842, %v3843
        %v3845 = vsel %vm252, %v3788, 0.0
        %v3846 = vadd.f32 %v3844, %v3845
        %v3847 = vsel %vm252, %v3789, 0.0
        %v3848 = vadd.f32 %v3846, %v3847
        %v3849 = vsel %vm252, %v3790, 0.0
        %v3850 = vadd.f32 %v3848, %v3849
        %v3851 = vsel %vm252, %v3791, 0.0
        %v3852 = vadd.f32 %v3850, %v3851
        %v3853 = vsel %vm252, %v3792, 0.0
        %v3854 = vadd.f32 %v3852, %v3853
        %v3855 = vsel %vm252, %v3793, 0.0
        %v3856 = vadd.f32 %v3854, %v3855
        %v3857 = vrot.slane %v3856, 4
        %v3858 = vadd.f32 %v3856, %v3857
        %v3859 = vrot.slane %v3858, 2
        %v3860 = vadd.f32 %v3858, %v3859
        %v3861 = vrot.slane %v3860, 1
        %v3862 = vadd.f32 %v3860, %v3861
        %v3863 = vmul.f32 %v3761, 0.00390625
        %v3864 = vmul.f32 %v3862, 0.00390625
        %v3865 = vmul.f32 %v3863, %v3863
        %v3866 = vsub.f32 %v3864, %v3865
        %v3867 = vadd.f32 %v3866, 1e-05
        %v3868 = vrsqrt.pop %v3867
        %v3869 = vmul.f32 %v3863, %v3868
        %v3870 = vmul.f32 %v3661, %v3868
        %v3871 = vmul.f32 %v3662, %v3868
        %v3872 = vmul.f32 %v3663, %v3868
        %v3873 = vmul.f32 %v3664, %v3868
        %v3874 = vmul.f32 %v3665, %v3868
        %v3875 = vmul.f32 %v3666, %v3868
        %v3876 = vmul.f32 %v3667, %v3868
        %v3877 = vmul.f32 %v3668, %v3868
        %v3878 = vmul.f32 %v3669, %v3868
        %v3879 = vmul.f32 %v3670, %v3868
        %v3880 = vmul.f32 %v3671, %v3868
        %v3881 = vmul.f32 %v3672, %v3868
        %v3882 = vmul.f32 %v3673, %v3868
        %v3883 = vmul.f32 %v3674, %v3868
        %v3884 = vmul.f32 %v3675, %v3868
        %v3885 = vmul.f32 %v3676, %v3868
        %v3886 = vmul.f32 %v3677, %v3868
        %v3887 = vmul.f32 %v3678, %v3868
        %v3888 = vmul.f32 %v3679, %v3868
        %v3889 = vmul.f32 %v3680, %v3868
        %v3890 = vmul.f32 %v3681, %v3868
        %v3891 = vmul.f32 %v3682, %v3868
        %v3892 = vmul.f32 %v3683, %v3868
        %v3893 = vmul.f32 %v3684, %v3868
        %v3894 = vmul.f32 %v3685, %v3868
        %v3895 = vmul.f32 %v3686, %v3868
        %v3896 = vmul.f32 %v3687, %v3868
        %v3897 = vmul.f32 %v3688, %v3868
        %v3898 = vmul.f32 %v3689, %v3868
        %v3899 = vmul.f32 %v3690, %v3868
        %v3900 = vmul.f32 %v3691, %v3868
        %v3901 = vmul.f32 %v3692, %v3868
        %v3902 = vsub.f32 %v3870, %v3869
        %v3903 = vsub.f32 %v3871, %v3869
        %v3904 = vsub.f32 %v3872, %v3869
        %v3905 = vsub.f32 %v3873, %v3869
        %v3906 = vsub.f32 %v3874, %v3869
        %v3907 = vsub.f32 %v3875, %v3869
        %v3908 = vsub.f32 %v3876, %v3869
        %v3909 = vsub.f32 %v3877, %v3869
        %v3910 = vsub.f32 %v3878, %v3869
        %v3911 = vsub.f32 %v3879, %v3869
        %v3912 = vsub.f32 %v3880, %v3869
        %v3913 = vsub.f32 %v3881, %v3869
        %v3914 = vsub.f32 %v3882, %v3869
        %v3915 = vsub.f32 %v3883, %v3869
        %v3916 = vsub.f32 %v3884, %v3869
        %v3917 = vsub.f32 %v3885, %v3869
        %v3918 = vsub.f32 %v3886, %v3869
        %v3919 = vsub.f32 %v3887, %v3869
        %v3920 = vsub.f32 %v3888, %v3869
        %v3921 = vsub.f32 %v3889, %v3869
        %v3922 = vsub.f32 %v3890, %v3869
        %v3923 = vsub.f32 %v3891, %v3869
        %v3924 = vsub.f32 %v3892, %v3869
        %v3925 = vsub.f32 %v3893, %v3869
        %v3926 = vsub.f32 %v3894, %v3869
        %v3927 = vsub.f32 %v3895, %v3869
        %v3928 = vsub.f32 %v3896, %v3869
        %v3929 = vsub.f32 %v3897, %v3869
        %v3930 = vsub.f32 %v3898, %v3869
        %v3931 = vsub.f32 %v3899, %v3869
        %v3932 = vsub.f32 %v3900, %v3869
        %v3933 = vsub.f32 %v3901, %v3869
        %v3934 = vmax.f32 %v3902, 0.0
        %v3935 = vmax.f32 %v3903, 0.0
        %v3936 = vmax.f32 %v3904, 0.0
        %v3937 = vmax.f32 %v3905, 0.0
        %v3938 = vmax.f32 %v3906, 0.0
        %v3939 = vmax.f32 %v3907, 0.0
        %v3940 = vmax.f32 %v3908, 0.0
        %v3941 = vmax.f32 %v3909, 0.0
        %v3942 = vmax.f32 %v3910, 0.0
        %v3943 = vmax.f32 %v3911, 0.0
        %v3944 = vmax.f32 %v3912, 0.0
        %v3945 = vmax.f32 %v3913, 0.0
        %v3946 = vmax.f32 %v3914, 0.0
        %v3947 = vmax.f32 %v3915, 0.0
        %v3948 = vmax.f32 %v3916, 0.0
        %v3949 = vmax.f32 %v3917, 0.0
        %v3950 = vmax.f32 %v3918, 0.0
        %v3951 = vmax.f32 %v3919, 0.0
        %v3952 = vmax.f32 %v3920, 0.0
        %v3953 = vmax.f32 %v3921, 0.0
        %v3954 = vmax.f32 %v3922, 0.0
        %v3955 = vmax.f32 %v3923, 0.0
        %v3956 = vmax.f32 %v3924, 0.0
        %v3957 = vmax.f32 %v3925, 0.0
        %v3958 = vmax.f32 %v3926, 0.0
        %v3959 = vmax.f32 %v3927, 0.0
        %v3960 = vmax.f32 %v3928, 0.0
        %v3961 = vmax.f32 %v3929, 0.0
        %v3962 = vmax.f32 %v3930, 0.0
        %v3963 = vmax.f32 %v3931, 0.0
        %v3964 = vmax.f32 %v3932, 0.0
        %v3965 = vmax.f32 %v3933, 0.0
        %3966 = vst.msk [vmem:[%s197] sm:$0xff] %vm252, %v3934
        %3967 = vst.msk [vmem:[%s197 + $0x8] sm:$0xff] %vm252, %v3935
        %3968 = vst.msk [vmem:[%s197 + $0x10] sm:$0xff] %vm252, %v3936
        %3969 = vst.msk [vmem:[%s197 + $0x18] sm:$0xff] %vm252, %v3937
        %3970 = vst.msk [vmem:[%s197 + $0x20] sm:$0xff] %vm252, %v3938
        %3971 = vst.msk [vmem:[%s197 + $0x28] sm:$0xff] %vm252, %v3939
        %3972 = vst.msk [vmem:[%s197 + $0x30] sm:$0xff] %vm252, %v3940
        %3973 = vst.msk [vmem:[%s197 + $0x38] sm:$0xff] %vm252, %v3941
        %3974 = vst.msk [vmem:[%s197 + $0x40] sm:$0xff] %vm252, %v3942
        %3975 = vst.msk [vmem:[%s197 + $0x48] sm:$0xff] %vm252, %v3943
        %3976 = vst.msk [vmem:[%s197 + $0x50] sm:$0xff] %vm252, %v3944
        %3977 = vst.msk [vmem:[%s197 + $0x58] sm:$0xff] %vm252, %v3945
        %3978 = vst.msk [vmem:[%s197 + $0x60] sm:$0xff] %vm252, %v3946
        %3979 = vst.msk [vmem:[%s197 + $0x68] sm:$0xff] %vm252, %v3947
        %3980 = vst.msk [vmem:[%s197 + $0x70] sm:$0xff] %vm252, %v3948
        %3981 = vst.msk [vmem:[%s197 + $0x78] sm:$0xff] %vm252, %v3949
        %3982 = vst.msk [vmem:[%s197 + $0x80] sm:$0xff] %vm252, %v3950
        %3983 = vst.msk [vmem:[%s197 + $0x88] sm:$0xff] %vm252, %v3951
        %3984 = vst.msk [vmem:[%s197 + $0x90] sm:$0xff] %vm252, %v3952
        %3985 = vst.msk [vmem:[%s197 + $0x98] sm:$0xff] %vm252, %v3953
        %3986 = vst.msk [vmem:[%s197 + $0xa0] sm:$0xff] %vm252, %v3954
        %3987 = vst.msk [vmem:[%s197 + $0xa8] sm:$0xff] %vm252, %v3955
        %3988 = vst.msk [vmem:[%s197 + $0xb0] sm:$0xff] %vm252, %v3956
        %3989 = vst.msk [vmem:[%s197 + $0xb8] sm:$0xff] %vm252, %v3957
        %3990 = vst.msk [vmem:[%s197 + $0xc0] sm:$0xff] %vm252, %v3958
        %3991 = vst.msk [vmem:[%s197 + $0xc8] sm:$0xff] %vm252, %v3959
        %3992 = vst.msk [vmem:[%s197 + $0xd0] sm:$0xff] %vm252, %v3960
        %3993 = vst.msk [vmem:[%s197 + $0xd8] sm:$0xff] %vm252, %v3961
        %3994 = vst.msk [vmem:[%s197 + $0xe0] sm:$0xff] %vm252, %v3962
        %3995 = vst.msk [vmem:[%s197 + $0xe8] sm:$0xff] %vm252, %v3963
        %3996 = vst.msk [vmem:[%s197 + $0xf0] sm:$0xff] %vm252, %v3964
        %3997 = vst.msk [vmem:[%s197 + $0xf8] sm:$0xff] %vm252, %v3965
        %s3998 = sand.u32 %s94, 1
        %s3999 = scalar_lea.sflag [#allocation4], %s3998
        %s4000 = sand.u32 %s94, 1
        %s4001 = smul.addr %s4000, 256
        %s4002 = scalar_lea.vmem [#allocation7], %s4001
        // Predicated region
        $region37: #{tpu_custom_call.1} parent=27 // pred_check
          %p4003 = pneg %p104
        $region38: #{tpu_custom_call.1} parent=27 // pred_check_branch
          %4005 = sbr.rel (%p4003) target = $region40
        $region39: #{tpu_custom_call.1} parent=27 // pred_region
          %s4007 = ssub.s32 4096, 4096
          %4008 = vsyncadd %s3999, %s4007
          %s4009 = smul.addr %s24, 32
          %s4010 = sadd.s32 %s25, %s4009
          %s4011 = smul.addr %s4010, 128
          %s4012 = scalar_lea.hbm %s2, %s4011
          %s4013 = sshll.u32 %s4002, 4
          %s4014 = int_to_ptr.vmem [resolvable:$true] %s4013
          %4019 = dma.vmem_to_hbm [thread:$0]  %s4014, 4096, %s4012, %s3999, 128, 128, 8
        $region40: #{tpu_custom_call.1} parent=27 // pred_fallthru
          _
      $region28: #{tpu_custom_call.1} parent=5 // pred_fallthru
        _
      %p4020 = scmp.le.s32.totalorder 2, %s15
      // Predicated region
      $region41: #{tpu_custom_call.1} parent=5 // pred_check
        %p4021 = pneg %p4020
      $region42: #{tpu_custom_call.1} parent=5 // pred_check_branch
        %4023 = sbr.rel (%p4021) target = $region44
      $region43: #{tpu_custom_call.1} parent=5 // pred_region
        %s4024 = ssub.s32 %s15, 2
        // Predicated region
        $region45: #{tpu_custom_call.1} parent=43 // pred_check
          %p4025 = pneg %p110
        $region46: #{tpu_custom_call.1} parent=43 // pred_check_branch
          %4027 = sbr.rel (%p4025) target = $region48
        $region47: #{tpu_custom_call.1} parent=43 // pred_region
          %s4028 = sand.u32 %s95, 1
          %s4029 = scalar_lea.sflag [#allocation4], %s4028
          %s4030 = sand.u32 %s95, 1
          %s4031 = smul.addr %s4030, 256
          %s4032 = scalar_lea.vmem [#allocation7], %s4031
          %4033 = dma.done %s4029, 4096
        $region48: #{tpu_custom_call.1} parent=43 // pred_fallthru
          _
      $region44: #{tpu_custom_call.1} parent=5 // pred_fallthru
        _
    $region6: #{tpu_custom_call.1} parent=1 // loop_footer
      %s19 = sadd.s32 1, %s15
    $region7: #{tpu_custom_call.1} parent=1 // loop_footer_branch
      %14 = sbr.rel target = $region3
    $region8: #{tpu_custom_call.1} parent=1 // loop_exit
      _
    %4034 = vsyncpa [#allocation3], 1
    %s4035 = scalar_lea.sflag [#allocation3], 1
    %4036 = vsyncpa %s4035, 1
    %4037 = vsyncpa [#allocation6], 1
    %4038 = vsyncpa [#allocation4], 1
    %s4039 = scalar_lea.sflag [#allocation4], 1
    %4040 = vsyncpa %s4039, 1

</llo_original>
